<compile_context>
chip_gen: v7x
topology: tpu7x:2x2x1
jax: 0.10.0
libtpu: 0.0.40
codegen_flags: <defaults>
</compile_context>

<pallas_src>
import functools

import jax
import jax.numpy as jnp
from jax.experimental import pallas as pl
from jax.experimental.pallas import tpu as pltpu


# ----------------------------------------------------------------------------
# Pallas kernels
# ----------------------------------------------------------------------------
def _fused_conv_kernel(*refs, offsets, act1, has_proj):
    """Fused (implicit-im2col conv [+SiLU] [+1x1 project]) for one image.

    Refs (batch dim squeezed away by BlockSpec):
      x_ref : (Lin, Cin)        row-flattened, spatially padded input, bf16
      w1_ref: (taps*Cin, Cmid)  packed conv weights, bf16 (tap-major, Cin-minor)
      b1_ref: (1, Cmid)         f32
      [w2_ref: (Cmid, Cout), b2_ref: (1, Cout)]   optional 1x1 projection
      o_ref : (n_out, Cout)     bf16
    """
    if has_proj:
        x_ref, w1_ref, b1_ref, w2_ref, b2_ref, o_ref = refs
    else:
        x_ref, w1_ref, b1_ref, o_ref = refs

    n_out = o_ref.shape[0]

    # One aligned load of the bf16 tile, staged once as f32 -> tap slices below
    # are simple 32-bit sublane slices (no packed-bf16 relayout risk).
    x32 = x_ref[...].astype(jnp.float32)

    # Implicit im2col: concatenate the tap windows along the lane-aligned
    # (128-padded) channel axis -> ONE big-K contraction on the MXU.
    staged = jnp.concatenate(
        [x32[off:off + n_out, :].astype(jnp.bfloat16) for off in offsets],
        axis=-1)                                              # (n_out, taps*Cin)

    acc = jnp.dot(staged, w1_ref[...], preferred_element_type=jnp.float32)
    acc = acc + b1_ref[...]
    if act1 == "silu":
        acc = acc * jax.nn.sigmoid(acc)

    if has_proj:
        acc = jnp.dot(acc.astype(jnp.bfloat16), w2_ref[...],
                      preferred_element_type=jnp.float32) + b2_ref[...]

    o_ref[...] = acc.astype(o_ref.dtype)


def _gem_kernel(x_ref, o_ref, *, p, eps, valid_w):
    """GeM pooling for one image (junk columns j >= valid_w masked in-kernel).

    x_ref: (H, W, C) bf16 last feature map (W may include junk columns),
    o_ref: (1, C) f32 pooled features.
    """
    H, W, C = x_ref.shape
    x = x_ref[...].astype(jnp.float32)
    x = jnp.maximum(x, eps)

    ip = int(round(p))
    if abs(p - ip) < 1e-6 and 1 <= ip <= 8:     # integer power -> VPU multiply chain
        xp = x
        for _ in range(ip - 1):
            xp = xp * x
    else:                                       # generic float power
        xp = jnp.exp(jnp.log(x) * p)

    col = jax.lax.broadcasted_iota(jnp.int32, (1, W, 1), 1)
    xp = jnp.where(col < valid_w, xp, 0.0)      # mask wrap-around junk columns

    s = jnp.sum(xp, axis=0)                     # (W, C)
    s = jnp.sum(s, axis=0, keepdims=True)       # (1, C)
    pooled = s * (1.0 / (H * valid_w))
    feat = jnp.exp(jnp.log(pooled) * (1.0 / p))  # 1/p root only on the tiny vector
    o_ref[...] = feat.astype(o_ref.dtype)


def _fc_kernel(x_ref, w_ref, o_ref):
    """Batched bias-free FC head: (B, C) x (C, out_dim)."""
    o_ref[...] = jnp.dot(x_ref[...].astype(jnp.bfloat16), w_ref[...],
                         preferred_element_type=jnp.float32).astype(o_ref.dtype)


# ----------------------------------------------------------------------------
# Pallas wrappers
# ----------------------------------------------------------------------------
def _pallas_fused_conv(x_flat, w1, b1, w2, b2, *, ke, win, n_out, act1):
    B, Lin, Cin = x_flat.shape
    K1, Cmid = w1.shape
    assert K1 == ke * ke * Cin, (K1, ke, Cin)
    has_proj = w2 is not None
    Cout = int(w2.shape[-1]) if has_proj else Cmid

    offsets = tuple(di * win + dj for di in range(ke) for dj in range(ke))
    kernel = functools.partial(_fused_conv_kernel, offsets=offsets,
                               act1=act1, has_proj=has_proj)

    in_specs = [
        pl.BlockSpec((None, Lin, Cin), lambda b: (b, 0, 0)),    # per-image input
        pl.BlockSpec((K1, Cmid), lambda b: (0, 0)),             # resident weights
        pl.BlockSpec((1, Cmid), lambda b: (0, 0)),              # resident bias
    ]
    args = [x_flat, w1, b1]
    if has_proj:
        in_specs.append(pl.BlockSpec((Cmid, Cout), lambda b: (0, 0)))
        in_specs.append(pl.BlockSpec((1, Cout), lambda b: (0, 0)))
        args.extend([w2, b2])

    return pl.pallas_call(
        kernel,
        out_shape=jax.ShapeDtypeStruct((B, n_out, Cout), jnp.bfloat16),
        grid=(B,),
        in_specs=in_specs,
        out_specs=pl.BlockSpec((None, n_out, Cout), lambda b: (b, 0, 0)),
        compiler_params=pltpu.CompilerParams(
            dimension_semantics=("parallel",),
            vmem_limit_bytes=32 * 1024 * 1024),
    )(*args)


def gem_pool(x_nhwc, *, valid_w, p, eps=1e-6):
    """GeM pooling, one image per grid step.  Returns (B, C) f32."""
    B, H, W, C = x_nhwc.shape
    kernel = functools.partial(_gem_kernel, p=float(p), eps=float(eps),
                               valid_w=int(valid_w))
    out = pl.pallas_call(
        kernel,
        out_shape=jax.ShapeDtypeStruct((B, 1, C), jnp.float32),
        grid=(B,),
        in_specs=[pl.BlockSpec((None, H, W, C), lambda b: (b, 0, 0, 0))],
        out_specs=pl.BlockSpec((None, 1, C), lambda b: (b, 0, 0)),
        compiler_params=pltpu.CompilerParams(dimension_semantics=("parallel",)),
    )(x_nhwc)
    return out.reshape(B, C)


def fc_head(pooled, fc_w_t):
    """Bias-free FC: (B, C) x (C, out_dim) in a single gridless pallas_call."""
    B, C = pooled.shape
    out_dim = int(fc_w_t.shape[1])
    return pl.pallas_call(
        _fc_kernel,
        out_shape=jax.ShapeDtypeStruct((B, out_dim), jnp.float32),
    )(pooled, fc_w_t)


# ----------------------------------------------------------------------------
# Glue: padding, space-to-depth (stride-2 -> stride-1 rewrite), weight packing
# ----------------------------------------------------------------------------
def _space_to_depth(x, r=2):
    B, H, W, C = x.shape
    assert H % r == 0 and W % r == 0
    x = x.reshape(B, H // r, r, W // r, r, C)
    x = jnp.transpose(x, (0, 1, 3, 2, 4, 5))
    return x.reshape(B, H // r, W // r, r * r * C)


def _pad_axis(a, axis, new_size):
    pads = [(0, 0)] * a.ndim
    pads[axis] = (0, new_size - a.shape[axis])
    return jnp.pad(a, pads)


def _pack_w_s1(w_oihw, cin_pad, cout_pad):
    """(Cout,Cin,kh,kw) stride-1 conv -> (kh*kw*cin_pad, cout_pad) bf16."""
    w = jnp.transpose(w_oihw, (2, 3, 1, 0))           # (kh, kw, Cin, Cout)
    kh, kw = w.shape[0], w.shape[1]
    w = _pad_axis(w, 2, cin_pad)
    w = _pad_axis(w, 3, cout_pad)
    return w.reshape(kh * kw * cin_pad, cout_pad).astype(jnp.bfloat16)


def _pack_w_s2(w_oihw, cin_pad, cout_pad):
    """Stride-2 kxk conv -> equivalent stride-1 2x2 conv on space-to-depth input.

    cin_pad is the (padded) PRE-space-to-depth input channel count.
    """
    w = jnp.transpose(w_oihw, (2, 3, 1, 0))           # (kh, kw, Cin, Cout)
    kh, kw = w.shape[0], w.shape[1]
    w = _pad_axis(w, 2, cin_pad)
    w = _pad_axis(w, 3, cout_pad)
    kh_e, kw_e = (kh + 1) // 2, (kw + 1) // 2
    w_eff = jnp.zeros((kh_e, kw_e, 2, 2, cin_pad, cout_pad), jnp.float32)
    for qi in range(kh_e):
        for pi in range(2):
            di = 2 * qi + pi
            if di >= kh:
                continue
            for qj in range(kw_e):
                for pj in range(2):
                    dj = 2 * qj + pj
                    if dj >= kw:
                        continue
                    w_eff = w_eff.at[qi, qj, pi, pj].set(w[di, dj])
    return w_eff.reshape(kh_e * kw_e * 4 * cin_pad, cout_pad).astype(jnp.bfloat16)


def _pack_w_1x1(w_oihw, cin_pad, cout_pad):
    w = jnp.transpose(w_oihw[:, :, 0, 0], (1, 0))     # (Cin, Cout)
    w = _pad_axis(w, 0, cin_pad)
    w = _pad_axis(w, 1, cout_pad)
    return w.astype(jnp.bfloat16)


def conv_block(x_nhwc, prm):
    """Padded conv (kxk, stride 1 or 2) [+SiLU] [+fused 1x1 project], via Pallas.

    Returns (y4d, valid_w): y4d is (B, Ho, Win, Cout) bf16 where only the first
    valid_w columns are valid (the trailing ke-1 are row-flatten junk).
    """
    k, s = prm["k"], prm["stride"]
    pad = k // 2
    x = x_nhwc.astype(jnp.bfloat16)
    cpp = prm.get("cin_pre_pad")
    if cpp is not None and x.shape[-1] < cpp:          # stem: pad raw channels
        x = _pad_axis(x, 3, cpp)
    x = jnp.pad(x, ((0, 0), (pad, pad), (pad, pad), (0, 0)))
    if s == 2:
        x = _space_to_depth(x, 2)
        ke = (k + 1) // 2
    else:
        assert s == 1
        ke = k
    B, Hin, Win, Cin = x.shape
    Ho, Wo = Hin - ke + 1, Win - ke + 1
    n_out = Ho * Win

    # Row-flatten; tail-pad so every tap slice [off, off + n_out) stays in-bounds.
    x_flat = x.reshape(B, Hin * Win, Cin)
    tail = ke - 1
    if tail:
        x_flat = jnp.pad(x_flat, ((0, 0), (0, tail), (0, 0)))

    y = _pallas_fused_conv(x_flat, prm["w1"], prm["b1"], prm["w2"], prm["b2"],
                           ke=ke, win=Win, n_out=n_out, act1=prm["act1"])
    return y.reshape(B, Ho, Win, y.shape[-1]), Wo


# ----------------------------------------------------------------------------
# Model (deterministic synthetic parameters)
# ----------------------------------------------------------------------------
class EfficientNetPallas:
    CH = 128          # lane-dense channel padding (multiple of 128)

    def __init__(self, output_dim=512, p=3.0, eval_p=3.0, seed=0):
        self.p = p
        self.eval_p = eval_p
        key = jax.random.PRNGKey(seed)
        ks = jax.random.split(key, 8)

        def conv_w(k, cout, cin, kh, kw):
            fan_in = cin * kh * kw
            return (jax.random.normal(k, (cout, cin, kh, kw), jnp.float32)
                    * (1.0 / jnp.sqrt(fan_in)))

        stem_w = conv_w(ks[0], 24, 3, 3, 3)            # stem: 3 -> 24, 3x3 s2, SiLU
        b1_w = conv_w(ks[1], 48, 24, 3, 3)             # block1 expand: 3x3 s2, SiLU
        b1p_w = conv_w(ks[2], 64, 48, 1, 1)            # block1 project: 1x1
        b2_w = conv_w(ks[3], 128, 64, 3, 3)            # block2 expand: 3x3 s1, SiLU
        b2p_w = conv_w(ks[4], 128, 128, 1, 1)          # block2 project: 1x1
        self.num_chs = 128                             # real channels of last map

        CH = self.CH
        # Raw image channels 3 -> 32 so space-to-depth gives exactly 128 = CH.
        self.stem = dict(w1=_pack_w_s2(stem_w, cin_pad=32, cout_pad=CH),
                         b1=jnp.zeros((1, CH), jnp.float32),
                         w2=None, b2=None, k=3, stride=2, act1="silu",
                         cin_pre_pad=32)
        self.block1 = dict(w1=_pack_w_s2(b1_w, cin_pad=CH, cout_pad=CH),
                           b1=jnp.zeros((1, CH), jnp.float32),
                           w2=_pack_w_1x1(b1p_w, cin_pad=CH, cout_pad=CH),
                           b2=jnp.zeros((1, CH), jnp.float32),
                           k=3, stride=2, act1="silu", cin_pre_pad=None)
        self.block2 = dict(w1=_pack_w_s1(b2_w, cin_pad=CH, cout_pad=CH),
                           b1=jnp.zeros((1, CH), jnp.float32),
                           w2=_pack_w_1x1(b2p_w, cin_pad=CH, cout_pad=CH),
                           b2=jnp.zeros((1, CH), jnp.float32),
                           k=3, stride=1, act1="silu", cin_pre_pad=None)

        # fc: Linear(num_chs, output_dim, bias=False), init normal(std=0.02).
        # num_chs == 128 == padded channel count, so no padded-channel leak.
        fc_w = jax.random.normal(ks[5], (output_dim, self.num_chs), jnp.float32) * 0.02
        self.fc_w_t = jnp.transpose(fc_w, (1, 0)).astype(jnp.bfloat16)   # (C, out)

    def backbone(self, x_nhwc):
        x, wv = conv_block(x_nhwc, self.stem)
        x = x[:, :, :wv, :]
        x, wv = conv_block(x, self.block1)             # fused expand + project
        x = x[:, :, :wv, :]
        x, wv = conv_block(x, self.block2)             # fused expand + project
        return x, wv                                   # last map (junk cols kept)

    def forward(self, x_nchw, training=False):
        batch_size = x_nchw.shape[0]
        x = jnp.transpose(x_nchw, (0, 2, 3, 1)).astype(jnp.bfloat16)  # NCHW -> NHWC
        x, valid_w = self.backbone(x)                  # backbone(x)[-1]
        p = self.p if training else self.eval_p
        pooled = gem_pool(x, valid_w=valid_w, p=p)     # GeM (masks junk cols)
        y = fc_head(pooled, self.fc_w_t)               # batched bias-free fc
        return y.reshape(batch_size, -1)


# ----------------------------------------------------------------------------
if __name__ == "__main__":
    key = jax.random.PRNGKey(0)
    x = jax.random.normal(key, (2, 3, 32, 32), jnp.float32)   # NCHW like PyTorch

    model = EfficientNetPallas(output_dim=256, p=3.0, eval_p=3.0, seed=0)
    fwd = jax.jit(functools.partial(model.forward, training=False))
    out = fwd(x)
    out = jax.block_until_ready(out)

    assert out.shape == (2, 256), out.shape
    assert bool(jnp.all(jnp.isfinite(out)))
    print("KERNEL_OK")
</pallas_src>

<mosaic_0001>
module attributes {stable_mosaic.version = 11 : i64} {
  func.func @_fused_conv_kernel(%arg0: i32, %arg1: memref<1x290x128xbf16, #tpu.memory_space<vmem>>, %arg2: memref<512x128xbf16, #tpu.memory_space<vmem>>, %arg3: memref<1x128xf32, #tpu.memory_space<vmem>>, %arg4: memref<1x272x128xbf16, #tpu.memory_space<vmem>>) attributes {dimension_semantics = [#tpu.dimension_semantics<parallel>], iteration_bounds = array<i64: 2>, scalar_prefetch = 0 : i64, scratch_operands = 0 : i64, tpu.core_type = #tpu.core_type<tc>, window_params = [{transform_indices = @transform_0, window_bounds = array<i64: 1, 290, 128>}, {pipeline_mode = #tpu.pipeline_mode<synchronous>, transform_indices = @transform_1, window_bounds = array<i64: 512, 128>}, {pipeline_mode = #tpu.pipeline_mode<synchronous>, transform_indices = @transform_2, window_bounds = array<i64: 1, 128>}, {transform_indices = @transform_3, window_bounds = array<i64: 1, 272, 128>}]} {
    %c0 = arith.constant 0 : index
    %c0_0 = arith.constant 0 : index
    %c0_1 = arith.constant 0 : index
    %0 = vector.load %arg1[%c0, %c0_0, %c0_1] : memref<1x290x128xbf16, #tpu.memory_space<vmem>>, vector<1x290x128xbf16>
    %1 = vector.shape_cast %0 : vector<1x290x128xbf16> to vector<290x128xbf16>
    %2 = arith.extf %1 : vector<290x128xbf16> to vector<290x128xf32>
    %3 = vector.extract_strided_slice %2 {offsets = [0, 0], sizes = [272, 128], strides = [1, 1]} : vector<290x128xf32> to vector<272x128xf32>
    %4 = arith.truncf %3 : vector<272x128xf32> to vector<272x128xbf16>
    %5 = vector.extract_strided_slice %2 {offsets = [1, 0], sizes = [272, 128], strides = [1, 1]} : vector<290x128xf32> to vector<272x128xf32>
    %6 = arith.truncf %5 : vector<272x128xf32> to vector<272x128xbf16>
    %7 = vector.extract_strided_slice %2 {offsets = [17, 0], sizes = [272, 128], strides = [1, 1]} : vector<290x128xf32> to vector<272x128xf32>
    %8 = arith.truncf %7 : vector<272x128xf32> to vector<272x128xbf16>
    %9 = vector.extract_strided_slice %2 {offsets = [18, 0], sizes = [272, 128], strides = [1, 1]} : vector<290x128xf32> to vector<272x128xf32>
    %10 = arith.truncf %9 : vector<272x128xf32> to vector<272x128xbf16>
    %11 = tpu.concatenate %4, %6, %8, %10 in 1 : vector<272x128xbf16>, vector<272x128xbf16>, vector<272x128xbf16>, vector<272x128xbf16> -> vector<272x512xbf16>
    %c0_2 = arith.constant 0 : index
    %c0_3 = arith.constant 0 : index
    %12 = vector.load %arg2[%c0_2, %c0_3] : memref<512x128xbf16, #tpu.memory_space<vmem>>, vector<512x128xbf16>
    %cst = arith.constant dense<0.000000e+00> : vector<272x128xf32>
    %13 = tpu.matmul %11, %12, %cst {dimension_numbers = #tpu.dot_dimension_numbers<[1], [0], [0], [1], [0, 0, 1, 1], [], []>} : vector<272x512xbf16>, vector<512x128xbf16>, vector<272x128xf32> -> vector<272x128xf32>
    %c0_4 = arith.constant 0 : index
    %c0_5 = arith.constant 0 : index
    %14 = vector.load %arg3[%c0_4, %c0_5] : memref<1x128xf32, #tpu.memory_space<vmem>>, vector<1x128xf32>
    %15 = vector.broadcast %14 : vector<1x128xf32> to vector<272x128xf32>
    %16 = arith.addf %13, %15 : vector<272x128xf32>
    %17 = arith.negf %16 : vector<272x128xf32>
    %18 = math.exp %17 : vector<272x128xf32>
    %cst_6 = arith.constant 1.000000e+00 : f32
    %19 = vector.broadcast %cst_6 : f32 to vector<272x128xf32>
    %20 = arith.addf %19, %18 : vector<272x128xf32>
    %21 = arith.divf %19, %20 : vector<272x128xf32>
    %22 = arith.mulf %16, %21 : vector<272x128xf32>
    %23 = arith.truncf %22 : vector<272x128xf32> to vector<272x128xbf16>
    %c0_7 = arith.constant 0 : index
    %c0_8 = arith.constant 0 : index
    %c0_9 = arith.constant 0 : index
    %24 = vector.load %arg4[%c0_7, %c0_8, %c0_9] : memref<1x272x128xbf16, #tpu.memory_space<vmem>>, vector<1x272x128xbf16>
    %25 = vector.shape_cast %24 : vector<1x272x128xbf16> to vector<272x128xbf16>
    %26 = vector.shape_cast %23 : vector<272x128xbf16> to vector<1x272x128xbf16>
    tpu.vector_store %arg4[%c0_7, %c0_8, %c0_9], %26 {strides = array<i32>} : memref<1x272x128xbf16, #tpu.memory_space<vmem>>, vector<1x272x128xbf16>,
    return
  }
  func.func @transform_0(%arg0: i32) -> (i32, i32, i32) {
    %c0_i32 = arith.constant 0 : i32
    %c0_i32_0 = arith.constant 0 : i32
    %c0_i32_1 = arith.constant 0 : i32
    return %arg0, %c0_i32, %c0_i32_0 : i32, i32, i32
  }
  func.func @transform_1(%arg0: i32) -> (i32, i32) {
    %c0_i32 = arith.constant 0 : i32
    %c0_i32_0 = arith.constant 0 : i32
    %c0_i32_1 = arith.constant 0 : i32
    return %c0_i32, %c0_i32_0 : i32, i32
  }
  func.func @transform_2(%arg0: i32) -> (i32, i32) {
    %c0_i32 = arith.constant 0 : i32
    %c0_i32_0 = arith.constant 0 : i32
    %c0_i32_1 = arith.constant 0 : i32
    return %c0_i32, %c0_i32_0 : i32, i32
  }
  func.func @transform_3(%arg0: i32) -> (i32, i32, i32) {
    %c0_i32 = arith.constant 0 : i32
    %c0_i32_0 = arith.constant 0 : i32
    %c0_i32_1 = arith.constant 0 : i32
    return %arg0, %c0_i32, %c0_i32_0 : i32, i32, i32
  }
}

module attributes {stable_mosaic.version = 11 : i64} {
  func.func @_fused_conv_kernel(%arg0: i32, %arg1: memref<1x82x512xbf16, #tpu.memory_space<vmem>>, %arg2: memref<2048x128xbf16, #tpu.memory_space<vmem>>, %arg3: memref<1x128xf32, #tpu.memory_space<vmem>>, %arg4: memref<128x128xbf16, #tpu.memory_space<vmem>>, %arg5: memref<1x128xf32, #tpu.memory_space<vmem>>, %arg6: memref<1x72x128xbf16, #tpu.memory_space<vmem>>) attributes {dimension_semantics = [#tpu.dimension_semantics<parallel>], iteration_bounds = array<i64: 2>, scalar_prefetch = 0 : i64, scratch_operands = 0 : i64, tpu.core_type = #tpu.core_type<tc>, window_params = [{transform_indices = @transform_0, window_bounds = array<i64: 1, 82, 512>}, {pipeline_mode = #tpu.pipeline_mode<synchronous>, transform_indices = @transform_1, window_bounds = array<i64: 2048, 128>}, {pipeline_mode = #tpu.pipeline_mode<synchronous>, transform_indices = @transform_2, window_bounds = array<i64: 1, 128>}, {pipeline_mode = #tpu.pipeline_mode<synchronous>, transform_indices = @transform_3, window_bounds = array<i64: 128, 128>}, {pipeline_mode = #tpu.pipeline_mode<synchronous>, transform_indices = @transform_4, window_bounds = array<i64: 1, 128>}, {transform_indices = @transform_5, window_bounds = array<i64: 1, 72, 128>}]} {
    %c0 = arith.constant 0 : index
    %c0_0 = arith.constant 0 : index
    %c0_1 = arith.constant 0 : index
    %0 = vector.load %arg1[%c0, %c0_0, %c0_1] : memref<1x82x512xbf16, #tpu.memory_space<vmem>>, vector<1x82x512xbf16>
    %1 = vector.shape_cast %0 : vector<1x82x512xbf16> to vector<82x512xbf16>
    %2 = arith.extf %1 : vector<82x512xbf16> to vector<82x512xf32>
    %3 = vector.extract_strided_slice %2 {offsets = [0, 0], sizes = [72, 512], strides = [1, 1]} : vector<82x512xf32> to vector<72x512xf32>
    %4 = arith.truncf %3 : vector<72x512xf32> to vector<72x512xbf16>
    %5 = vector.extract_strided_slice %2 {offsets = [1, 0], sizes = [72, 512], strides = [1, 1]} : vector<82x512xf32> to vector<72x512xf32>
    %6 = arith.truncf %5 : vector<72x512xf32> to vector<72x512xbf16>
    %7 = vector.extract_strided_slice %2 {offsets = [9, 0], sizes = [72, 512], strides = [1, 1]} : vector<82x512xf32> to vector<72x512xf32>
    %8 = arith.truncf %7 : vector<72x512xf32> to vector<72x512xbf16>
    %9 = vector.extract_strided_slice %2 {offsets = [10, 0], sizes = [72, 512], strides = [1, 1]} : vector<82x512xf32> to vector<72x512xf32>
    %10 = arith.truncf %9 : vector<72x512xf32> to vector<72x512xbf16>
    %11 = tpu.concatenate %4, %6, %8, %10 in 1 : vector<72x512xbf16>, vector<72x512xbf16>, vector<72x512xbf16>, vector<72x512xbf16> -> vector<72x2048xbf16>
    %c0_2 = arith.constant 0 : index
    %c0_3 = arith.constant 0 : index
    %12 = vector.load %arg2[%c0_2, %c0_3] : memref<2048x128xbf16, #tpu.memory_space<vmem>>, vector<2048x128xbf16>
    %cst = arith.constant dense<0.000000e+00> : vector<72x128xf32>
    %13 = tpu.matmul %11, %12, %cst {dimension_numbers = #tpu.dot_dimension_numbers<[1], [0], [0], [1], [0, 0, 1, 1], [], []>} : vector<72x2048xbf16>, vector<2048x128xbf16>, vector<72x128xf32> -> vector<72x128xf32>
    %c0_4 = arith.constant 0 : index
    %c0_5 = arith.constant 0 : index
    %14 = vector.load %arg3[%c0_4, %c0_5] : memref<1x128xf32, #tpu.memory_space<vmem>>, vector<1x128xf32>
    %15 = vector.broadcast %14 : vector<1x128xf32> to vector<72x128xf32>
    %16 = arith.addf %13, %15 : vector<72x128xf32>
    %17 = arith.negf %16 : vector<72x128xf32>
    %18 = math.exp %17 : vector<72x128xf32>
    %cst_6 = arith.constant 1.000000e+00 : f32
    %19 = vector.broadcast %cst_6 : f32 to vector<72x128xf32>
    %20 = arith.addf %19, %18 : vector<72x128xf32>
    %21 = arith.divf %19, %20 : vector<72x128xf32>
    %22 = arith.mulf %16, %21 : vector<72x128xf32>
    %23 = arith.truncf %22 : vector<72x128xf32> to vector<72x128xbf16>
    %c0_7 = arith.constant 0 : index
    %c0_8 = arith.constant 0 : index
    %24 = vector.load %arg4[%c0_7, %c0_8] : memref<128x128xbf16, #tpu.memory_space<vmem>>, vector<128x128xbf16>
    %cst_9 = arith.constant dense<0.000000e+00> : vector<72x128xf32>
    %25 = tpu.matmul %23, %24, %cst_9 {dimension_numbers = #tpu.dot_dimension_numbers<[1], [0], [0], [1], [0, 0, 1, 1], [], []>} : vector<72x128xbf16>, vector<128x128xbf16>, vector<72x128xf32> -> vector<72x128xf32>
    %c0_10 = arith.constant 0 : index
    %c0_11 = arith.constant 0 : index
    %26 = vector.load %arg5[%c0_10, %c0_11] : memref<1x128xf32, #tpu.memory_space<vmem>>, vector<1x128xf32>
    %27 = vector.broadcast %26 : vector<1x128xf32> to vector<72x128xf32>
    %28 = arith.addf %25, %27 : vector<72x128xf32>
    %29 = arith.truncf %28 : vector<72x128xf32> to vector<72x128xbf16>
    %c0_12 = arith.constant 0 : index
    %c0_13 = arith.constant 0 : index
    %c0_14 = arith.constant 0 : index
    %30 = vector.load %arg6[%c0_12, %c0_13, %c0_14] : memref<1x72x128xbf16, #tpu.memory_space<vmem>>, vector<1x72x128xbf16>
    %31 = vector.shape_cast %30 : vector<1x72x128xbf16> to vector<72x128xbf16>
    %32 = vector.shape_cast %29 : vector<72x128xbf16> to vector<1x72x128xbf16>
    tpu.vector_store %arg6[%c0_12, %c0_13, %c0_14], %32 {strides = array<i32>} : memref<1x72x128xbf16, #tpu.memory_space<vmem>>, vector<1x72x128xbf16>,
    return
  }
  func.func @transform_0(%arg0: i32) -> (i32, i32, i32) {
    %c0_i32 = arith.constant 0 : i32
    %c0_i32_0 = arith.constant 0 : i32
    %c0_i32_1 = arith.constant 0 : i32
    return %arg0, %c0_i32, %c0_i32_0 : i32, i32, i32
  }
  func.func @transform_1(%arg0: i32) -> (i32, i32) {
    %c0_i32 = arith.constant 0 : i32
    %c0_i32_0 = arith.constant 0 : i32
    %c0_i32_1 = arith.constant 0 : i32
    return %c0_i32, %c0_i32_0 : i32, i32
  }
  func.func @transform_2(%arg0: i32) -> (i32, i32) {
    %c0_i32 = arith.constant 0 : i32
    %c0_i32_0 = arith.constant 0 : i32
    %c0_i32_1 = arith.constant 0 : i32
    return %c0_i32, %c0_i32_0 : i32, i32
  }
  func.func @transform_3(%arg0: i32) -> (i32, i32) {
    %c0_i32 = arith.constant 0 : i32
    %c0_i32_0 = arith.constant 0 : i32
    %c0_i32_1 = arith.constant 0 : i32
    return %c0_i32, %c0_i32_0 : i32, i32
  }
  func.func @transform_4(%arg0: i32) -> (i32, i32) {
    %c0_i32 = arith.constant 0 : i32
    %c0_i32_0 = arith.constant 0 : i32
    %c0_i32_1 = arith.constant 0 : i32
    return %c0_i32, %c0_i32_0 : i32, i32
  }
  func.func @transform_5(%arg0: i32) -> (i32, i32, i32) {
    %c0_i32 = arith.constant 0 : i32
    %c0_i32_0 = arith.constant 0 : i32
    %c0_i32_1 = arith.constant 0 : i32
    return %arg0, %c0_i32, %c0_i32_0 : i32, i32, i32
  }
}

module attributes {stable_mosaic.version = 11 : i64} {
  func.func @_fused_conv_kernel(%arg0: i32, %arg1: memref<1x102x128xbf16, #tpu.memory_space<vmem>>, %arg2: memref<1152x128xbf16, #tpu.memory_space<vmem>>, %arg3: memref<1x128xf32, #tpu.memory_space<vmem>>, %arg4: memref<128x128xbf16, #tpu.memory_space<vmem>>, %arg5: memref<1x128xf32, #tpu.memory_space<vmem>>, %arg6: memref<1x80x128xbf16, #tpu.memory_space<vmem>>) attributes {dimension_semantics = [#tpu.dimension_semantics<parallel>], iteration_bounds = array<i64: 2>, scalar_prefetch = 0 : i64, scratch_operands = 0 : i64, tpu.core_type = #tpu.core_type<tc>, window_params = [{transform_indices = @transform_0, window_bounds = array<i64: 1, 102, 128>}, {pipeline_mode = #tpu.pipeline_mode<synchronous>, transform_indices = @transform_1, window_bounds = array<i64: 1152, 128>}, {pipeline_mode = #tpu.pipeline_mode<synchronous>, transform_indices = @transform_2, window_bounds = array<i64: 1, 128>}, {pipeline_mode = #tpu.pipeline_mode<synchronous>, transform_indices = @transform_3, window_bounds = array<i64: 128, 128>}, {pipeline_mode = #tpu.pipeline_mode<synchronous>, transform_indices = @transform_4, window_bounds = array<i64: 1, 128>}, {transform_indices = @transform_5, window_bounds = array<i64: 1, 80, 128>}]} {
    %c0 = arith.constant 0 : index
    %c0_0 = arith.constant 0 : index
    %c0_1 = arith.constant 0 : index
    %0 = vector.load %arg1[%c0, %c0_0, %c0_1] : memref<1x102x128xbf16, #tpu.memory_space<vmem>>, vector<1x102x128xbf16>
    %1 = vector.shape_cast %0 : vector<1x102x128xbf16> to vector<102x128xbf16>
    %2 = arith.extf %1 : vector<102x128xbf16> to vector<102x128xf32>
    %3 = vector.extract_strided_slice %2 {offsets = [0, 0], sizes = [80, 128], strides = [1, 1]} : vector<102x128xf32> to vector<80x128xf32>
    %4 = arith.truncf %3 : vector<80x128xf32> to vector<80x128xbf16>
    %5 = vector.extract_strided_slice %2 {offsets = [1, 0], sizes = [80, 128], strides = [1, 1]} : vector<102x128xf32> to vector<80x128xf32>
    %6 = arith.truncf %5 : vector<80x128xf32> to vector<80x128xbf16>
    %7 = vector.extract_strided_slice %2 {offsets = [2, 0], sizes = [80, 128], strides = [1, 1]} : vector<102x128xf32> to vector<80x128xf32>
    %8 = arith.truncf %7 : vector<80x128xf32> to vector<80x128xbf16>
    %9 = vector.extract_strided_slice %2 {offsets = [10, 0], sizes = [80, 128], strides = [1, 1]} : vector<102x128xf32> to vector<80x128xf32>
    %10 = arith.truncf %9 : vector<80x128xf32> to vector<80x128xbf16>
    %11 = vector.extract_strided_slice %2 {offsets = [11, 0], sizes = [80, 128], strides = [1, 1]} : vector<102x128xf32> to vector<80x128xf32>
    %12 = arith.truncf %11 : vector<80x128xf32> to vector<80x128xbf16>
    %13 = vector.extract_strided_slice %2 {offsets = [12, 0], sizes = [80, 128], strides = [1, 1]} : vector<102x128xf32> to vector<80x128xf32>
    %14 = arith.truncf %13 : vector<80x128xf32> to vector<80x128xbf16>
    %15 = vector.extract_strided_slice %2 {offsets = [20, 0], sizes = [80, 128], strides = [1, 1]} : vector<102x128xf32> to vector<80x128xf32>
    %16 = arith.truncf %15 : vector<80x128xf32> to vector<80x128xbf16>
    %17 = vector.extract_strided_slice %2 {offsets = [21, 0], sizes = [80, 128], strides = [1, 1]} : vector<102x128xf32> to vector<80x128xf32>
    %18 = arith.truncf %17 : vector<80x128xf32> to vector<80x128xbf16>
    %19 = vector.extract_strided_slice %2 {offsets = [22, 0], sizes = [80, 128], strides = [1, 1]} : vector<102x128xf32> to vector<80x128xf32>
    %20 = arith.truncf %19 : vector<80x128xf32> to vector<80x128xbf16>
    %21 = tpu.concatenate %4, %6, %8, %10, %12, %14, %16, %18, %20 in 1 : vector<80x128xbf16>, vector<80x128xbf16>, vector<80x128xbf16>, vector<80x128xbf16>, vector<80x128xbf16>, vector<80x128xbf16>, vector<80x128xbf16>, vector<80x128xbf16>, vector<80x128xbf16> -> vector<80x1152xbf16>
    %c0_2 = arith.constant 0 : index
    %c0_3 = arith.constant 0 : index
    %22 = vector.load %arg2[%c0_2, %c0_3] : memref<1152x128xbf16, #tpu.memory_space<vmem>>, vector<1152x128xbf16>
    %cst = arith.constant dense<0.000000e+00> : vector<80x128xf32>
    %23 = tpu.matmul %21, %22, %cst {dimension_numbers = #tpu.dot_dimension_numbers<[1], [0], [0], [1], [0, 0, 1, 1], [], []>} : vector<80x1152xbf16>, vector<1152x128xbf16>, vector<80x128xf32> -> vector<80x128xf32>
    %c0_4 = arith.constant 0 : index
    %c0_5 = arith.constant 0 : index
    %24 = vector.load %arg3[%c0_4, %c0_5] : memref<1x128xf32, #tpu.memory_space<vmem>>, vector<1x128xf32>
    %25 = vector.broadcast %24 : vector<1x128xf32> to vector<80x128xf32>
    %26 = arith.addf %23, %25 : vector<80x128xf32>
    %27 = arith.negf %26 : vector<80x128xf32>
    %28 = math.exp %27 : vector<80x128xf32>
    %cst_6 = arith.constant 1.000000e+00 : f32
    %29 = vector.broadcast %cst_6 : f32 to vector<80x128xf32>
    %30 = arith.addf %29, %28 : vector<80x128xf32>
    %31 = arith.divf %29, %30 : vector<80x128xf32>
    %32 = arith.mulf %26, %31 : vector<80x128xf32>
    %33 = arith.truncf %32 : vector<80x128xf32> to vector<80x128xbf16>
    %c0_7 = arith.constant 0 : index
    %c0_8 = arith.constant 0 : index
    %34 = vector.load %arg4[%c0_7, %c0_8] : memref<128x128xbf16, #tpu.memory_space<vmem>>, vector<128x128xbf16>
    %cst_9 = arith.constant dense<0.000000e+00> : vector<80x128xf32>
    %35 = tpu.matmul %33, %34, %cst_9 {dimension_numbers = #tpu.dot_dimension_numbers<[1], [0], [0], [1], [0, 0, 1, 1], [], []>} : vector<80x128xbf16>, vector<128x128xbf16>, vector<80x128xf32> -> vector<80x128xf32>
    %c0_10 = arith.constant 0 : index
    %c0_11 = arith.constant 0 : index
    %36 = vector.load %arg5[%c0_10, %c0_11] : memref<1x128xf32, #tpu.memory_space<vmem>>, vector<1x128xf32>
    %37 = vector.broadcast %36 : vector<1x128xf32> to vector<80x128xf32>
    %38 = arith.addf %35, %37 : vector<80x128xf32>
    %39 = arith.truncf %38 : vector<80x128xf32> to vector<80x128xbf16>
    %c0_12 = arith.constant 0 : index
    %c0_13 = arith.constant 0 : index
    %c0_14 = arith.constant 0 : index
    %40 = vector.load %arg6[%c0_12, %c0_13, %c0_14] : memref<1x80x128xbf16, #tpu.memory_space<vmem>>, vector<1x80x128xbf16>
    %41 = vector.shape_cast %40 : vector<1x80x128xbf16> to vector<80x128xbf16>
    %42 = vector.shape_cast %39 : vector<80x128xbf16> to vector<1x80x128xbf16>
    tpu.vector_store %arg6[%c0_12, %c0_13, %c0_14], %42 {strides = array<i32>} : memref<1x80x128xbf16, #tpu.memory_space<vmem>>, vector<1x80x128xbf16>,
    return
  }
  func.func @transform_0(%arg0: i32) -> (i32, i32, i32) {
    %c0_i32 = arith.constant 0 : i32
    %c0_i32_0 = arith.constant 0 : i32
    %c0_i32_1 = arith.constant 0 : i32
    return %arg0, %c0_i32, %c0_i32_0 : i32, i32, i32
  }
  func.func @transform_1(%arg0: i32) -> (i32, i32) {
    %c0_i32 = arith.constant 0 : i32
    %c0_i32_0 = arith.constant 0 : i32
    %c0_i32_1 = arith.constant 0 : i32
    return %c0_i32, %c0_i32_0 : i32, i32
  }
  func.func @transform_2(%arg0: i32) -> (i32, i32) {
    %c0_i32 = arith.constant 0 : i32
    %c0_i32_0 = arith.constant 0 : i32
    %c0_i32_1 = arith.constant 0 : i32
    return %c0_i32, %c0_i32_0 : i32, i32
  }
  func.func @transform_3(%arg0: i32) -> (i32, i32) {
    %c0_i32 = arith.constant 0 : i32
    %c0_i32_0 = arith.constant 0 : i32
    %c0_i32_1 = arith.constant 0 : i32
    return %c0_i32, %c0_i32_0 : i32, i32
  }
  func.func @transform_4(%arg0: i32) -> (i32, i32) {
    %c0_i32 = arith.constant 0 : i32
    %c0_i32_0 = arith.constant 0 : i32
    %c0_i32_1 = arith.constant 0 : i32
    return %c0_i32, %c0_i32_0 : i32, i32
  }
  func.func @transform_5(%arg0: i32) -> (i32, i32, i32) {
    %c0_i32 = arith.constant 0 : i32
    %c0_i32_0 = arith.constant 0 : i32
    %c0_i32_1 = arith.constant 0 : i32
    return %arg0, %c0_i32, %c0_i32_0 : i32, i32, i32
  }
}

module attributes {stable_mosaic.version = 11 : i64} {
  func.func @_gem_kernel(%arg0: i32, %arg1: memref<1x8x10x128xbf16, #tpu.memory_space<vmem>>, %arg2: memref<1x1x128xf32, #tpu.memory_space<vmem>>) attributes {dimension_semantics = [#tpu.dimension_semantics<parallel>], iteration_bounds = array<i64: 2>, scalar_prefetch = 0 : i64, scratch_operands = 0 : i64, tpu.core_type = #tpu.core_type<tc>, window_params = [{transform_indices = @transform_0, window_bounds = array<i64: 1, 8, 10, 128>}, {transform_indices = @transform_1, window_bounds = array<i64: 1, 1, 128>}]} {
    %c0 = arith.constant 0 : index
    %c0_0 = arith.constant 0 : index
    %c0_1 = arith.constant 0 : index
    %c0_2 = arith.constant 0 : index
    %0 = vector.load %arg1[%c0, %c0_0, %c0_1, %c0_2] : memref<1x8x10x128xbf16, #tpu.memory_space<vmem>>, vector<1x8x10x128xbf16>
    %1 = vector.shape_cast %0 : vector<1x8x10x128xbf16> to vector<8x10x128xbf16>
    %2 = arith.extf %1 : vector<8x10x128xbf16> to vector<8x10x128xf32>
    %cst = arith.constant 9.99999997E-7 : f32
    %3 = vector.broadcast %cst : f32 to vector<8x10x128xf32>
    %4 = arith.maximumf %2, %3 : vector<8x10x128xf32>
    %5 = arith.mulf %4, %4 : vector<8x10x128xf32>
    %6 = arith.mulf %5, %4 : vector<8x10x128xf32>
    %7 = tpu.iota {dimensions = array<i32: 1>} : vector<1x10x1xi32>
    %c8_i32 = arith.constant 8 : i32
    %8 = vector.broadcast %c8_i32 : i32 to vector<1x10x1xi32>
    %9 = arith.cmpi slt, %7, %8 : vector<1x10x1xi32>
    %cst_3 = arith.constant 0.000000e+00 : f32
    %10 = vector.shape_cast %9 : vector<1x10x1xi1> to vector<1x10x1xi1>
    %11 = vector.broadcast %10 : vector<1x10x1xi1> to vector<8x10x128xi1>
    %12 = vector.broadcast %cst_3 : f32 to vector<8x10x128xf32>
    %13 = arith.select %11, %6, %12 : vector<8x10x128xi1>, vector<8x10x128xf32>
    %cst_4 = arith.constant dense<0.000000e+00> : vector<10x128xf32>
    %14 = vector.multi_reduction <add>, %13, %cst_4 [0] : vector<8x10x128xf32> to vector<10x128xf32>
    %cst_5 = arith.constant dense<0.000000e+00> : vector<128xf32>
    %15 = vector.multi_reduction <add>, %14, %cst_5 [0] : vector<10x128xf32> to vector<128xf32>
    %16 = vector.shape_cast %15 : vector<128xf32> to vector<1x128xf32>
    %cst_6 = arith.constant 1.562500e-02 : f32
    %17 = vector.broadcast %cst_6 : f32 to vector<1x128xf32>
    %18 = arith.mulf %16, %17 : vector<1x128xf32>
    %19 = math.log %18 : vector<1x128xf32>
    %cst_7 = arith.constant 0.333333343 : f32
    %20 = vector.broadcast %cst_7 : f32 to vector<1x128xf32>
    %21 = arith.mulf %19, %20 : vector<1x128xf32>
    %22 = math.exp %21 : vector<1x128xf32>
    %c0_8 = arith.constant 0 : index
    %c0_9 = arith.constant 0 : index
    %c0_10 = arith.constant 0 : index
    %23 = vector.load %arg2[%c0_8, %c0_9, %c0_10] : memref<1x1x128xf32, #tpu.memory_space<vmem>>, vector<1x1x128xf32>
    %24 = vector.shape_cast %23 : vector<1x1x128xf32> to vector<1x128xf32>
    %25 = vector.shape_cast %22 : vector<1x128xf32> to vector<1x1x128xf32>
    tpu.vector_store %arg2[%c0_8, %c0_9, %c0_10], %25 {strides = array<i32>} : memref<1x1x128xf32, #tpu.memory_space<vmem>>, vector<1x1x128xf32>,
    return
  }
  func.func @transform_0(%arg0: i32) -> (i32, i32, i32, i32) {
    %c0_i32 = arith.constant 0 : i32
    %c0_i32_0 = arith.constant 0 : i32
    %c0_i32_1 = arith.constant 0 : i32
    %c0_i32_2 = arith.constant 0 : i32
    return %arg0, %c0_i32, %c0_i32_0, %c0_i32_1 : i32, i32, i32, i32
  }
  func.func @transform_1(%arg0: i32) -> (i32, i32, i32) {
    %c0_i32 = arith.constant 0 : i32
    %c0_i32_0 = arith.constant 0 : i32
    %c0_i32_1 = arith.constant 0 : i32
    return %arg0, %c0_i32, %c0_i32_0 : i32, i32, i32
  }
}

module attributes {stable_mosaic.version = 11 : i64} {
  func.func @_fc_kernel(%arg0: memref<2x128xf32, #tpu.memory_space<vmem>>, %arg1: memref<128x256xbf16, #tpu.memory_space<vmem>>, %arg2: memref<2x256xf32, #tpu.memory_space<vmem>>) attributes {dimension_semantics = [], scalar_prefetch = 0 : i64, scratch_operands = 0 : i64, tpu.core_type = #tpu.core_type<tc>} {
    %c0 = arith.constant 0 : index
    %c0_0 = arith.constant 0 : index
    %0 = vector.load %arg0[%c0, %c0_0] : memref<2x128xf32, #tpu.memory_space<vmem>>, vector<2x128xf32>
    %1 = arith.truncf %0 : vector<2x128xf32> to vector<2x128xbf16>
    %c0_1 = arith.constant 0 : index
    %c0_2 = arith.constant 0 : index
    %2 = vector.load %arg1[%c0_1, %c0_2] : memref<128x256xbf16, #tpu.memory_space<vmem>>, vector<128x256xbf16>
    %cst = arith.constant dense<0.000000e+00> : vector<2x256xf32>
    %3 = tpu.matmul %1, %2, %cst {dimension_numbers = #tpu.dot_dimension_numbers<[1], [0], [0], [1], [0, 0, 1, 1], [], []>} : vector<2x128xbf16>, vector<128x256xbf16>, vector<2x256xf32> -> vector<2x256xf32>
    %c0_3 = arith.constant 0 : index
    %c0_4 = arith.constant 0 : index
    %4 = vector.load %arg2[%c0_3, %c0_4] : memref<2x256xf32, #tpu.memory_space<vmem>>, vector<2x256xf32>
    tpu.vector_store %arg2[%c0_3, %c0_4], %3 {strides = array<i32>} : memref<2x256xf32, #tpu.memory_space<vmem>>, vector<2x256xf32>,
    return
  }
}

</mosaic_0001>

<llo_original>
// kernel: forward.5
$region0: #{forward.5}
  #allocation0 [shape = 'u32[]', space=smem, size = 0x4, offset = 0x4, fixed_abs, tag = 'smem constant byte address 0x4 - core index']
  #allocation1 [shape = 'u32[144,128]{1,0:T(1,128)}', space=vmem, size = 0x12000, scoped, tag = 'internal scratch']
  %s0 = inlined_call_operand.vmem [shape: bf16[2,290,128], index: 0, kind: input, shape index: {}]
  %s1 = inlined_call_operand.vmem [shape: bf16[512,128], index: 1, kind: input, shape index: {}]
  %s2 = inlined_call_operand.vmem [shape: f32[1,128], index: 2, kind: input, shape index: {}]
  %s3 = inlined_call_operand.vmem [shape: bf16[2,272,128], index: 3, kind: output, shape index: {}]
  %s4 = sld [smem:[#allocation0]]
  $region45: #{forward.5} parent=0
    _
  %s6 = ssub.s32 1, %s4
  %s7 = scalar_select 0, %s6, %s4
  loop: start=0, step=1, limit=4
  $region2: #{forward.5} parent=0 // loop_pre_header
    _
  $region3: #{forward.5} parent=0 // loop_header
    %s9 = sphi 0, %s13
    %p10 = scmp.ge.s32.totalorder %s9, 4
    %s19 = sphi 0, %s21
    %s22 = sphi 0, %s19
    %s23 = sphi 0, %s22
    %s39 = sphi 0, %s23
    %s43 = sphi 0, %s43
    %s45 = sphi 0, %s43
    %s46 = sphi 0, %s45
    %s60 = sphi 0, %s46
    %s64 = sphi 0, %s64
    %s66 = sphi 0, %s64
    %s67 = sphi 0, %s66
    %s81 = sphi 0, %s67
    %s87 = sphi 0, %s89
    %s90 = sphi 0, %s87
    %s91 = sphi 0, %s90
    %s107 = sphi 0, %s91
  $region4: #{forward.5} parent=0 // loop_header_branch
    %12 = sbr.rel (%p10) target = $region8
  $region5: #{forward.5} parent=0 // loop_body
    %s14 = ssub.s32 %s9, 1
    %s15 = ssub.s32 %s9, 2
    %s16 = sadd.s32 %s9, 1
    %s17 = ssub.s32 %s9, %s16
    %p18 = scmp.eq.s32.totalorder %s17, 0
    %s20 = sadd.s32 %s19, 1
    %s21 = scalar_select %p18, %s19, %s20
    %p24 = pneg %p18
    %p25 = scmp.eq.s32.totalorder %s9, 1
    %p26 = por %p24, %p25
    %p27 = scmp.ne.s32.totalorder %s19, %s22
    %p28 = scmp.eq.s32.totalorder %s9, 0
    %p29 = por %p27, %p28
    %p30 = scmp.ne.s32.totalorder %s19, %s22
    %p31 = scmp.eq.s32.totalorder %s14, 1
    %p32 = por %p30, %p31
    %p33 = scmp.ne.s32.totalorder %s22, %s23
    %p34 = scmp.eq.s32.totalorder %s14, 0
    %p35 = por %p33, %p34
    %p36 = scmp.ne.s32.totalorder %s22, %s23
    %p37 = scmp.eq.s32.totalorder %s15, 1
    %p38 = por %p36, %p37
    %p40 = scmp.ne.s32.totalorder %s23, %s39
    %p41 = scmp.eq.s32.totalorder %s15, 0
    %p42 = por %p40, %p41
    %s44 = sadd.s32 %s43, 1
    %p47 = scmp.eq.s32.totalorder %s9, 1
    %p48 = scmp.ne.s32.totalorder %s43, %s45
    %p49 = scmp.eq.s32.totalorder %s9, 0
    %p50 = por %p48, %p49
    %p51 = scmp.ne.s32.totalorder %s43, %s45
    %p52 = scmp.eq.s32.totalorder %s14, 1
    %p53 = por %p51, %p52
    %p54 = scmp.ne.s32.totalorder %s45, %s46
    %p55 = scmp.eq.s32.totalorder %s14, 0
    %p56 = por %p54, %p55
    %p57 = scmp.ne.s32.totalorder %s45, %s46
    %p58 = scmp.eq.s32.totalorder %s15, 1
    %p59 = por %p57, %p58
    %p61 = scmp.ne.s32.totalorder %s46, %s60
    %p62 = scmp.eq.s32.totalorder %s15, 0
    %p63 = por %p61, %p62
    %s65 = sadd.s32 %s64, 1
    %p68 = scmp.eq.s32.totalorder %s9, 1
    %p69 = scmp.ne.s32.totalorder %s64, %s66
    %p70 = scmp.eq.s32.totalorder %s9, 0
    %p71 = por %p69, %p70
    %p72 = scmp.ne.s32.totalorder %s64, %s66
    %p73 = scmp.eq.s32.totalorder %s14, 1
    %p74 = por %p72, %p73
    %p75 = scmp.ne.s32.totalorder %s66, %s67
    %p76 = scmp.eq.s32.totalorder %s14, 0
    %p77 = por %p75, %p76
    %p78 = scmp.ne.s32.totalorder %s66, %s67
    %p79 = scmp.eq.s32.totalorder %s15, 1
    %p80 = por %p78, %p79
    %p82 = scmp.ne.s32.totalorder %s67, %s81
    %p83 = scmp.eq.s32.totalorder %s15, 0
    %p84 = por %p82, %p83
    %s85 = ssub.s32 %s9, %s16
    %p86 = scmp.eq.s32.totalorder %s85, 0
    %s88 = sadd.s32 %s87, 1
    %s89 = scalar_select %p86, %s87, %s88
    %p92 = pneg %p86
    %p93 = scmp.eq.s32.totalorder %s9, 1
    %p94 = por %p92, %p93
    %p95 = scmp.ne.s32.totalorder %s87, %s90
    %p96 = scmp.eq.s32.totalorder %s9, 0
    %p97 = por %p95, %p96
    %p98 = scmp.ne.s32.totalorder %s87, %s90
    %p99 = scmp.eq.s32.totalorder %s14, 1
    %p100 = por %p98, %p99
    %p101 = scmp.ne.s32.totalorder %s90, %s91
    %p102 = scmp.eq.s32.totalorder %s14, 0
    %p103 = por %p101, %p102
    %p104 = scmp.ne.s32.totalorder %s90, %s91
    %p105 = scmp.eq.s32.totalorder %s15, 1
    %p106 = por %p104, %p105
    %p108 = scmp.ne.s32.totalorder %s91, %s107
    %p109 = scmp.eq.s32.totalorder %s15, 0
    %p110 = por %p108, %p109
    %p111 = scmp.le.s32.totalorder 1, %s9
    %p112 = scmp.lt.s32.totalorder %s9, 3
    %p113 = pnand %p111, %p112
    %p114 = pneg %p113
    // Predicated region
    $region9: #{forward.5} parent=5 // pred_check
      _
    $region10: #{forward.5} parent=5 // pred_check_branch
      %116 = sbr.rel (%p113) target = $region12
    $region11: #{forward.5} parent=5 // pred_region
      %s117 = ssub.s32 %s9, 1
      // Predicated region
      $region13: #{forward.5} parent=11 // pred_check
        %p118 = pneg %p56
      $region14: #{forward.5} parent=11 // pred_check_branch
        %120 = sbr.rel (%p118) target = $region16
      $region15: #{forward.5} parent=11 // pred_region
        _
      $region16: #{forward.5} parent=11 // pred_fallthru
        _
      // Predicated region
      $region17: #{forward.5} parent=11 // pred_check
        %p121 = pneg %p77
      $region18: #{forward.5} parent=11 // pred_check_branch
        %123 = sbr.rel (%p121) target = $region20
      $region19: #{forward.5} parent=11 // pred_region
        _
      $region20: #{forward.5} parent=11 // pred_fallthru
        _
    $region12: #{forward.5} parent=5 // pred_fallthru
      _
    %p124 = scmp.lt.s32.totalorder %s9, 2
    // Predicated region
    $region21: #{forward.5} parent=5 // pred_check
      %p125 = pneg %p124
    $region22: #{forward.5} parent=5 // pred_check_branch
      %127 = sbr.rel (%p125) target = $region24
    $region23: #{forward.5} parent=5 // pred_region
      // Predicated region
      $region25: #{forward.5} parent=23 // pred_check
        %p128 = pneg %p29
      $region26: #{forward.5} parent=23 // pred_check_branch
        %130 = sbr.rel (%p128) target = $region28
      $region27: #{forward.5} parent=23 // pred_region
        %p131 = scmp.lt.s32.totalorder %s9, 1
        %s132 = scalar_select %p131, %s9, 1
        %s133 = smul.addr %s132, 37
        %s134 = smul.addr %s133, 4
        %s135 = scalar_lea.vmem %s0, %s134
      $region28: #{forward.5} parent=23 // pred_fallthru
        _
    $region24: #{forward.5} parent=5 // pred_fallthru
      _
    %p136 = scmp.le.s32.totalorder 1, %s9
    %p137 = scmp.lt.s32.totalorder %s9, 3
    %p138 = pnand %p136, %p137
    %p139 = pneg %p138
    // Predicated region
    $region29: #{forward.5} parent=5 // pred_check
      _
    $region30: #{forward.5} parent=5 // pred_check_branch
      %141 = sbr.rel (%p138) target = $region32
    $region31: #{forward.5} parent=5 // pred_region
      %s142 = ssub.s32 %s9, 1
      %p143 = scmp.lt.s32.totalorder %s14, 1
      %s144 = scalar_select %p143, %s14, 1
      %s145 = smul.addr %s144, 37
      %s146 = smul.addr %s145, 4
      %s147 = scalar_lea.vmem %s0, %s146
      %p148 = pneg %p35
      %p149 = pneg %p32
      %p150 = pneg %p56
      %p151 = pneg %p53
      %p152 = pneg %p77
      %p153 = pneg %p74
      %p154 = pneg %p103
      %p155 = pneg %p100
      %p156 = scmp.lt.s32.totalorder %s14, 1
      %s157 = scalar_select %p156, %s14, 1
      %s158 = smul.addr %s157, 34
      %s159 = smul.addr %s158, 4
      %s160 = scalar_lea.vmem %s3, %s159
      %p161 = scmp.lt.s32.totalorder %s14, 1
      %s162 = scalar_select %p161, %s14, 1
      %s163 = smul.addr %s162, 37
      %s164 = smul.addr %s163, 4
      %s165 = scalar_lea.vmem %s0, %s164
      %p166 = scmp.lt.s32.totalorder %s14, 1
      %s167 = scalar_select %p166, %s14, 1
      %s168 = smul.addr %s167, 34
      %s169 = smul.addr %s168, 4
      %s170 = scalar_lea.vmem %s3, %s169
      %v172 = vld [vmem:[%s165] sm:$0xf]
      %v173 = vld [vmem:[%s165 + $0x4] sm:$0xf]
      %v174 = vld [vmem:[%s165 + $0x8] sm:$0xf]
      %v175 = vld [vmem:[%s165 + $0xc] sm:$0xf]
      %v176 = vld [vmem:[%s165 + $0x10] sm:$0xf]
      %v177 = vld [vmem:[%s165 + $0x14] sm:$0xf]
      %v178 = vld [vmem:[%s165 + $0x18] sm:$0xf]
      %v179 = vld [vmem:[%s165 + $0x1c] sm:$0xf]
      %v180 = vld [vmem:[%s165 + $0x20] sm:$0xf]
      %v181 = vld [vmem:[%s165 + $0x24] sm:$0xf]
      %v182 = vld [vmem:[%s165 + $0x28] sm:$0xf]
      %v183 = vld [vmem:[%s165 + $0x2c] sm:$0xf]
      %v184 = vld [vmem:[%s165 + $0x30] sm:$0xf]
      %v185 = vld [vmem:[%s165 + $0x34] sm:$0xf]
      %v186 = vld [vmem:[%s165 + $0x38] sm:$0xf]
      %v187 = vld [vmem:[%s165 + $0x3c] sm:$0xf]
      %v188 = vld [vmem:[%s165 + $0x40] sm:$0xf]
      %v189 = vld [vmem:[%s165 + $0x44] sm:$0xf]
      %v190 = vld [vmem:[%s165 + $0x48] sm:$0xf]
      %v191 = vld [vmem:[%s165 + $0x4c] sm:$0xf]
      %v192 = vld [vmem:[%s165 + $0x50] sm:$0xf]
      %v193 = vld [vmem:[%s165 + $0x54] sm:$0xf]
      %v194 = vld [vmem:[%s165 + $0x58] sm:$0xf]
      %v195 = vld [vmem:[%s165 + $0x5c] sm:$0xf]
      %v196 = vld [vmem:[%s165 + $0x60] sm:$0xf]
      %v197 = vld [vmem:[%s165 + $0x64] sm:$0xf]
      %v198 = vld [vmem:[%s165 + $0x68] sm:$0xf]
      %v199 = vld [vmem:[%s165 + $0x6c] sm:$0xf]
      %v200 = vld [vmem:[%s165 + $0x70] sm:$0xf]
      %v201 = vld [vmem:[%s165 + $0x74] sm:$0xf]
      %v202 = vld [vmem:[%s165 + $0x78] sm:$0xf]
      %v203 = vld [vmem:[%s165 + $0x7c] sm:$0xf]
      %v204 = vld [vmem:[%s165 + $0x80] sm:$0xf]
      %v205 = vld [vmem:[%s165 + $0x84] sm:$0xf]
      %v206 = vld [vmem:[%s165 + $0x88] sm:$0xf]
      %v207 = vld [vmem:[%s165 + $0x8c] sm:$0xf]
      %v208 = vld [vmem:[%s165 + $0x90] sm:$0x1]
      %v209 = vunpack.c.l.bf16 %v172
      %v210 = vunpack.c.l.bf16 %v173
      %v211 = vunpack.c.l.bf16 %v174
      %v212 = vunpack.c.l.bf16 %v175
      %v213 = vunpack.c.l.bf16 %v176
      %v214 = vunpack.c.l.bf16 %v177
      %v215 = vunpack.c.l.bf16 %v178
      %v216 = vunpack.c.l.bf16 %v179
      %v217 = vunpack.c.l.bf16 %v180
      %v218 = vunpack.c.l.bf16 %v181
      %v219 = vunpack.c.l.bf16 %v182
      %v220 = vunpack.c.l.bf16 %v183
      %v221 = vunpack.c.l.bf16 %v184
      %v222 = vunpack.c.l.bf16 %v185
      %v223 = vunpack.c.l.bf16 %v186
      %v224 = vunpack.c.l.bf16 %v187
      %v225 = vunpack.c.l.bf16 %v188
      %v226 = vunpack.c.l.bf16 %v189
      %v227 = vunpack.c.l.bf16 %v190
      %v228 = vunpack.c.l.bf16 %v191
      %v229 = vunpack.c.l.bf16 %v192
      %v230 = vunpack.c.l.bf16 %v193
      %v231 = vunpack.c.l.bf16 %v194
      %v232 = vunpack.c.l.bf16 %v195
      %v233 = vunpack.c.l.bf16 %v196
      %v234 = vunpack.c.l.bf16 %v197
      %v235 = vunpack.c.l.bf16 %v198
      %v236 = vunpack.c.l.bf16 %v199
      %v237 = vunpack.c.l.bf16 %v200
      %v238 = vunpack.c.l.bf16 %v201
      %v239 = vunpack.c.l.bf16 %v202
      %v240 = vunpack.c.l.bf16 %v203
      %v241 = vunpack.c.l.bf16 %v204
      %v242 = vunpack.c.l.bf16 %v205
      %v243 = vunpack.c.l.bf16 %v206
      %v244 = vunpack.c.l.bf16 %v207
      %v245 = vunpack.c.l.bf16 %v208
      %v246 = vpack.c.bf16 %v210, %v209
      %v247 = vpack.c.bf16 %v212, %v211
      %v248 = vpack.c.bf16 %v214, %v213
      %v249 = vpack.c.bf16 %v216, %v215
      %v250 = vpack.c.bf16 %v218, %v217
      %v251 = vpack.c.bf16 %v220, %v219
      %v252 = vpack.c.bf16 %v222, %v221
      %v253 = vpack.c.bf16 %v224, %v223
      %v254 = vpack.c.bf16 %v226, %v225
      %v255 = vpack.c.bf16 %v228, %v227
      %v256 = vpack.c.bf16 %v230, %v229
      %v257 = vpack.c.bf16 %v232, %v231
      %v258 = vpack.c.bf16 %v234, %v233
      %v259 = vpack.c.bf16 %v236, %v235
      %v260 = vpack.c.bf16 %v238, %v237
      %v261 = vpack.c.bf16 %v240, %v239
      %v262 = vpack.c.bf16 %v242, %v241
      %v263 = vpack.c.bf16 %v243, %v243
      %v264 = vpack.c.bf16 %v244, %v243
      %v265 = vpack.c.bf16 %v245, %v245
      %vm266 = vsmask.f32 7424
      %v268 = vshrl.u32 %v246, 16
      %v270 = vshll.u32 %v246, 16
      %v272 = vrot.slane %v270, 1
      %v273 = vor.u32 %v268, %v272
      %v275 = vshll.u32 %v247, 16
      %v277 = vrot.slane %v275, 1
      %v278 = vsel %vm266, %v273, %v277
      %v279 = vshrl.u32 %v247, 16
      %v281 = vor.u32 %v279, %v277
      %v283 = vshll.u32 %v248, 16
      %v285 = vrot.slane %v283, 1
      %v286 = vsel %vm266, %v281, %v285
      %v287 = vshrl.u32 %v248, 16
      %v289 = vor.u32 %v287, %v285
      %v291 = vshll.u32 %v249, 16
      %v293 = vrot.slane %v291, 1
      %v294 = vsel %vm266, %v289, %v293
      %v295 = vshrl.u32 %v249, 16
      %v297 = vor.u32 %v295, %v293
      %v299 = vshll.u32 %v250, 16
      %v301 = vrot.slane %v299, 1
      %v302 = vsel %vm266, %v297, %v301
      %v303 = vshrl.u32 %v250, 16
      %v305 = vor.u32 %v303, %v301
      %v307 = vshll.u32 %v251, 16
      %v309 = vrot.slane %v307, 1
      %v310 = vsel %vm266, %v305, %v309
      %v311 = vshrl.u32 %v251, 16
      %v313 = vor.u32 %v311, %v309
      %v315 = vshll.u32 %v252, 16
      %v317 = vrot.slane %v315, 1
      %v318 = vsel %vm266, %v313, %v317
      %v319 = vshrl.u32 %v252, 16
      %v321 = vor.u32 %v319, %v317
      %v323 = vshll.u32 %v253, 16
      %v325 = vrot.slane %v323, 1
      %v326 = vsel %vm266, %v321, %v325
      %v327 = vshrl.u32 %v253, 16
      %v329 = vor.u32 %v327, %v325
      %v331 = vshll.u32 %v254, 16
      %v333 = vrot.slane %v331, 1
      %v334 = vsel %vm266, %v329, %v333
      %v335 = vshrl.u32 %v254, 16
      %v337 = vor.u32 %v335, %v333
      %v339 = vshll.u32 %v255, 16
      %v341 = vrot.slane %v339, 1
      %v342 = vsel %vm266, %v337, %v341
      %v343 = vshrl.u32 %v255, 16
      %v345 = vor.u32 %v343, %v341
      %v347 = vshll.u32 %v256, 16
      %v349 = vrot.slane %v347, 1
      %v350 = vsel %vm266, %v345, %v349
      %v351 = vshrl.u32 %v256, 16
      %v353 = vor.u32 %v351, %v349
      %v355 = vshll.u32 %v257, 16
      %v357 = vrot.slane %v355, 1
      %v358 = vsel %vm266, %v353, %v357
      %v359 = vshrl.u32 %v257, 16
      %v361 = vor.u32 %v359, %v357
      %v363 = vshll.u32 %v258, 16
      %v365 = vrot.slane %v363, 1
      %v366 = vsel %vm266, %v361, %v365
      %v367 = vshrl.u32 %v258, 16
      %v369 = vor.u32 %v367, %v365
      %v371 = vshll.u32 %v259, 16
      %v373 = vrot.slane %v371, 1
      %v374 = vsel %vm266, %v369, %v373
      %v375 = vshrl.u32 %v259, 16
      %v377 = vor.u32 %v375, %v373
      %v379 = vshll.u32 %v260, 16
      %v381 = vrot.slane %v379, 1
      %v382 = vsel %vm266, %v377, %v381
      %v383 = vshrl.u32 %v260, 16
      %v385 = vor.u32 %v383, %v381
      %v387 = vshll.u32 %v261, 16
      %v389 = vrot.slane %v387, 1
      %v390 = vsel %vm266, %v385, %v389
      %v391 = vshrl.u32 %v261, 16
      %v393 = vor.u32 %v391, %v389
      %v395 = vshll.u32 %v262, 16
      %v397 = vrot.slane %v395, 1
      %v398 = vsel %vm266, %v393, %v397
      %v399 = vshrl.u32 %v262, 16
      %v401 = vor.u32 %v399, %v397
      %v403 = vshll.u32 %v263, 16
      %v405 = vrot.slane %v403, 1
      %v406 = vsel %vm266, %v401, %v405
      %v425 = vshll.u32 %v264, 16
      %v427 = vrot.slane %v425, 1
      %v428 = vsel %vm266, %v401, %v427
      %v429 = vshrl.u32 %v264, 16
      %v431 = vor.u32 %v429, %v427
      %v433 = vshll.u32 %v265, 16
      %v435 = vrot.slane %v433, 1
      %v436 = vsel %vm266, %v431, %v435
      %vm457 = vcmask 1046528
      %v458 = vrot.slane %v247, 1
      %v459 = vrot.slane %v248, 1
      %v460 = vsel %vm457, %v458, %v459
      %v461 = vrot.slane %v249, 1
      %v462 = vsel %vm457, %v459, %v461
      %v463 = vrot.slane %v250, 1
      %v464 = vsel %vm457, %v461, %v463
      %v465 = vrot.slane %v251, 1
      %v466 = vsel %vm457, %v463, %v465
      %v467 = vrot.slane %v252, 1
      %v468 = vsel %vm457, %v465, %v467
      %v469 = vrot.slane %v253, 1
      %v470 = vsel %vm457, %v467, %v469
      %v471 = vrot.slane %v254, 1
      %v472 = vsel %vm457, %v469, %v471
      %v473 = vrot.slane %v255, 1
      %v474 = vsel %vm457, %v471, %v473
      %v475 = vrot.slane %v256, 1
      %v476 = vsel %vm457, %v473, %v475
      %v477 = vrot.slane %v257, 1
      %v478 = vsel %vm457, %v475, %v477
      %v479 = vrot.slane %v258, 1
      %v480 = vsel %vm457, %v477, %v479
      %v481 = vrot.slane %v259, 1
      %v482 = vsel %vm457, %v479, %v481
      %v483 = vrot.slane %v260, 1
      %v484 = vsel %vm457, %v481, %v483
      %v485 = vrot.slane %v261, 1
      %v486 = vsel %vm457, %v483, %v485
      %v487 = vrot.slane %v262, 1
      %v488 = vsel %vm457, %v485, %v487
      %v489 = vrot.slane %v264, 1
      %v490 = vsel %vm457, %v487, %v489
      %v491 = vrot.slane %v265, 1
      %v492 = vsel %vm457, %v489, %v491
      %v510 = vld [vmem:[%s1] sm:$0xf]
      %v511 = vld [vmem:[%s1 + $0x4] sm:$0xf]
      %v512 = vld [vmem:[%s1 + $0x8] sm:$0xf]
      %v513 = vld [vmem:[%s1 + $0xc] sm:$0xf]
      %v514 = vld [vmem:[%s1 + $0x10] sm:$0xf]
      %v515 = vld [vmem:[%s1 + $0x14] sm:$0xf]
      %v516 = vld [vmem:[%s1 + $0x18] sm:$0xf]
      %v517 = vld [vmem:[%s1 + $0x1c] sm:$0xf]
      %v518 = vld [vmem:[%s1 + $0x20] sm:$0xf]
      %v519 = vld [vmem:[%s1 + $0x24] sm:$0xf]
      %v520 = vld [vmem:[%s1 + $0x28] sm:$0xf]
      %v521 = vld [vmem:[%s1 + $0x2c] sm:$0xf]
      %v522 = vld [vmem:[%s1 + $0x30] sm:$0xf]
      %v523 = vld [vmem:[%s1 + $0x34] sm:$0xf]
      %v524 = vld [vmem:[%s1 + $0x38] sm:$0xf]
      %v525 = vld [vmem:[%s1 + $0x3c] sm:$0xf]
      %v526 = vld [vmem:[%s1 + $0x40] sm:$0xf]
      %v527 = vld [vmem:[%s1 + $0x44] sm:$0xf]
      %v528 = vld [vmem:[%s1 + $0x48] sm:$0xf]
      %v529 = vld [vmem:[%s1 + $0x4c] sm:$0xf]
      %v530 = vld [vmem:[%s1 + $0x50] sm:$0xf]
      %v531 = vld [vmem:[%s1 + $0x54] sm:$0xf]
      %v532 = vld [vmem:[%s1 + $0x58] sm:$0xf]
      %v533 = vld [vmem:[%s1 + $0x5c] sm:$0xf]
      %v534 = vld [vmem:[%s1 + $0x60] sm:$0xf]
      %v535 = vld [vmem:[%s1 + $0x64] sm:$0xf]
      %v536 = vld [vmem:[%s1 + $0x68] sm:$0xf]
      %v537 = vld [vmem:[%s1 + $0x6c] sm:$0xf]
      %v538 = vld [vmem:[%s1 + $0x70] sm:$0xf]
      %v539 = vld [vmem:[%s1 + $0x74] sm:$0xf]
      %v540 = vld [vmem:[%s1 + $0x78] sm:$0xf]
      %v541 = vld [vmem:[%s1 + $0x7c] sm:$0xf]
      %v542 = vld [vmem:[%s1 + $0x80] sm:$0xf]
      %v543 = vld [vmem:[%s1 + $0x84] sm:$0xf]
      %v544 = vld [vmem:[%s1 + $0x88] sm:$0xf]
      %v545 = vld [vmem:[%s1 + $0x8c] sm:$0xf]
      %v546 = vld [vmem:[%s1 + $0x90] sm:$0xf]
      %v547 = vld [vmem:[%s1 + $0x94] sm:$0xf]
      %v548 = vld [vmem:[%s1 + $0x98] sm:$0xf]
      %v549 = vld [vmem:[%s1 + $0x9c] sm:$0xf]
      %v550 = vld [vmem:[%s1 + $0xa0] sm:$0xf]
      %v551 = vld [vmem:[%s1 + $0xa4] sm:$0xf]
      %v552 = vld [vmem:[%s1 + $0xa8] sm:$0xf]
      %v553 = vld [vmem:[%s1 + $0xac] sm:$0xf]
      %v554 = vld [vmem:[%s1 + $0xb0] sm:$0xf]
      %v555 = vld [vmem:[%s1 + $0xb4] sm:$0xf]
      %v556 = vld [vmem:[%s1 + $0xb8] sm:$0xf]
      %v557 = vld [vmem:[%s1 + $0xbc] sm:$0xf]
      %v558 = vld [vmem:[%s1 + $0xc0] sm:$0xf]
      %v559 = vld [vmem:[%s1 + $0xc4] sm:$0xf]
      %v560 = vld [vmem:[%s1 + $0xc8] sm:$0xf]
      %v561 = vld [vmem:[%s1 + $0xcc] sm:$0xf]
      %v562 = vld [vmem:[%s1 + $0xd0] sm:$0xf]
      %v563 = vld [vmem:[%s1 + $0xd4] sm:$0xf]
      %v564 = vld [vmem:[%s1 + $0xd8] sm:$0xf]
      %v565 = vld [vmem:[%s1 + $0xdc] sm:$0xf]
      %v566 = vld [vmem:[%s1 + $0xe0] sm:$0xf]
      %v567 = vld [vmem:[%s1 + $0xe4] sm:$0xf]
      %v568 = vld [vmem:[%s1 + $0xe8] sm:$0xf]
      %v569 = vld [vmem:[%s1 + $0xec] sm:$0xf]
      %v570 = vld [vmem:[%s1 + $0xf0] sm:$0xf]
      %v571 = vld [vmem:[%s1 + $0xf4] sm:$0xf]
      %v572 = vld [vmem:[%s1 + $0xf8] sm:$0xf]
      %v573 = vld [vmem:[%s1 + $0xfc] sm:$0xf]
      %v574 = vld [vmem:[%s2] sm:$0x1]
      %v576 = vlaneseq
      %v577 = vshrl.u32 %v576, 7
      %v578 = vsub.s32 0, %v577
      %v579 = vrot.slane %v574, %v578
      %v645 = vunpack.c.l.b16 %v510
      %v646 = vunpack.c.l.b16 %v511
      %v647 = vunpack.c.l.b16 %v512
      %v648 = vunpack.c.l.b16 %v513
      %v649 = vunpack.c.l.b16 %v514
      %v650 = vunpack.c.l.b16 %v515
      %v651 = vunpack.c.l.b16 %v516
      %v652 = vunpack.c.l.b16 %v517
      %v653 = vunpack.c.l.b16 %v518
      %v654 = vunpack.c.l.b16 %v519
      %v655 = vunpack.c.l.b16 %v520
      %v656 = vunpack.c.l.b16 %v521
      %v657 = vunpack.c.l.b16 %v522
      %v658 = vunpack.c.l.b16 %v523
      %v659 = vunpack.c.l.b16 %v524
      %v660 = vunpack.c.l.b16 %v525
      %v661 = vunpack.c.l.b16 %v526
      %v662 = vunpack.c.l.b16 %v527
      %v663 = vunpack.c.l.b16 %v528
      %v664 = vunpack.c.l.b16 %v529
      %v665 = vunpack.c.l.b16 %v530
      %v666 = vunpack.c.l.b16 %v531
      %v667 = vunpack.c.l.b16 %v532
      %v668 = vunpack.c.l.b16 %v533
      %v669 = vunpack.c.l.b16 %v534
      %v670 = vunpack.c.l.b16 %v535
      %v671 = vunpack.c.l.b16 %v536
      %v672 = vunpack.c.l.b16 %v537
      %v673 = vunpack.c.l.b16 %v538
      %v674 = vunpack.c.l.b16 %v539
      %v675 = vunpack.c.l.b16 %v540
      %v676 = vunpack.c.l.b16 %v541
      %v677 = vunpack.c.l.b16 %v542
      %v678 = vunpack.c.l.b16 %v543
      %v679 = vunpack.c.l.b16 %v544
      %v680 = vunpack.c.l.b16 %v545
      %v681 = vunpack.c.l.b16 %v546
      %v682 = vunpack.c.l.b16 %v547
      %v683 = vunpack.c.l.b16 %v548
      %v684 = vunpack.c.l.b16 %v549
      %v685 = vunpack.c.l.b16 %v550
      %v686 = vunpack.c.l.b16 %v551
      %v687 = vunpack.c.l.b16 %v552
      %v688 = vunpack.c.l.b16 %v553
      %v689 = vunpack.c.l.b16 %v554
      %v690 = vunpack.c.l.b16 %v555
      %v691 = vunpack.c.l.b16 %v556
      %v692 = vunpack.c.l.b16 %v557
      %v693 = vunpack.c.l.b16 %v558
      %v694 = vunpack.c.l.b16 %v559
      %v695 = vunpack.c.l.b16 %v560
      %v696 = vunpack.c.l.b16 %v561
      %v697 = vunpack.c.l.b16 %v562
      %v698 = vunpack.c.l.b16 %v563
      %v699 = vunpack.c.l.b16 %v564
      %v700 = vunpack.c.l.b16 %v565
      %v701 = vunpack.c.l.b16 %v566
      %v702 = vunpack.c.l.b16 %v567
      %v703 = vunpack.c.l.b16 %v568
      %v704 = vunpack.c.l.b16 %v569
      %v705 = vunpack.c.l.b16 %v570
      %v706 = vunpack.c.l.b16 %v571
      %v707 = vunpack.c.l.b16 %v572
      %v708 = vunpack.c.l.b16 %v573
      %v709 = vpack.c.b16 %v646, %v645
      %v710 = vpack.c.b16 %v648, %v647
      %v711 = vpack.c.b16 %v650, %v649
      %v712 = vpack.c.b16 %v652, %v651
      %v713 = vpack.c.b16 %v654, %v653
      %v714 = vpack.c.b16 %v656, %v655
      %v715 = vpack.c.b16 %v658, %v657
      %v716 = vpack.c.b16 %v660, %v659
      %v717 = vpack.c.b16 %v662, %v661
      %v718 = vpack.c.b16 %v664, %v663
      %v719 = vpack.c.b16 %v666, %v665
      %v720 = vpack.c.b16 %v668, %v667
      %v721 = vpack.c.b16 %v670, %v669
      %v722 = vpack.c.b16 %v672, %v671
      %v723 = vpack.c.b16 %v674, %v673
      %v724 = vpack.c.b16 %v676, %v675
      %v725 = vpack.c.b16 %v678, %v677
      %v726 = vpack.c.b16 %v680, %v679
      %v727 = vpack.c.b16 %v682, %v681
      %v728 = vpack.c.b16 %v684, %v683
      %v729 = vpack.c.b16 %v686, %v685
      %v730 = vpack.c.b16 %v688, %v687
      %v731 = vpack.c.b16 %v690, %v689
      %v732 = vpack.c.b16 %v692, %v691
      %v733 = vpack.c.b16 %v694, %v693
      %v734 = vpack.c.b16 %v696, %v695
      %v735 = vpack.c.b16 %v698, %v697
      %v736 = vpack.c.b16 %v700, %v699
      %v737 = vpack.c.b16 %v702, %v701
      %v738 = vpack.c.b16 %v704, %v703
      %v739 = vpack.c.b16 %v706, %v705
      %v740 = vpack.c.b16 %v708, %v707
      %773 = vmatprep.subr.bf16.mxu0 0
      %774 = vmatpush1.bf16.msra.mxu0 %v709
      %775 = vmatprep.subr.bf16.mxu0 0
      %776 = vmatpush1.bf16.msra.mxu0 %v710
      %777 = vmatprep.subr.bf16.mxu0 0
      %778 = vmatpush1.bf16.msra.mxu0 %v711
      %779 = vmatprep.subr.bf16.mxu0 0
      %780 = vmatpush1.bf16.msra.mxu0 %v712
      %781 = vmatprep.subr.bf16.mxu0 0
      %782 = vmatpush1.bf16.msra.mxu0 %v713
      %783 = vmatprep.subr.bf16.mxu0 0
      %784 = vmatpush1.bf16.msra.mxu0 %v714
      %785 = vmatprep.subr.bf16.mxu0 0
      %786 = vmatpush1.bf16.msra.mxu0 %v715
      %787 = vmatprep.subr.bf16.mxu0 0
      %788 = vmatpush1.bf16.msra.mxu0 %v716
      %789 = vmatprep.subr.bf16.mxu0 0
      %790 = vmatpush1.bf16.msra.mxu0 %v717
      %791 = vmatprep.subr.bf16.mxu0 0
      %792 = vmatpush1.bf16.msra.mxu0 %v718
      %793 = vmatprep.subr.bf16.mxu0 0
      %794 = vmatpush1.bf16.msra.mxu0 %v719
      %795 = vmatprep.subr.bf16.mxu0 0
      %796 = vmatpush1.bf16.msra.mxu0 %v720
      %797 = vmatprep.subr.bf16.mxu0 0
      %798 = vmatpush1.bf16.msra.mxu0 %v721
      %799 = vmatprep.subr.bf16.mxu0 0
      %800 = vmatpush1.bf16.msra.mxu0 %v722
      %801 = vmatprep.subr.bf16.mxu0 0
      %802 = vmatpush1.bf16.msra.mxu0 %v723
      %803 = vmatprep.subr.bf16.mxu0 0
      %804 = vmatpush1.bf16.msra.mxu0 %v724
      %805 = vmatprep.mubr.bf16.mxu0 %v278
      %806 = vmatmul.mubr.bf16.gmra.mrb[0].mxu0 %v246
      %v807 = vpop.f32.mrb[0].mxu0
      %v808 = vadd.f32 %v579, %v807
      %v809 = vpop.f32.mrb[0].mxu0
      %v810 = vpop.f32.mrb[0].mxu0
      %v811 = vadd.f32 %v579, %v810
      %v812 = vpop.f32.mrb[0].mxu0
      %813 = vmatprep.mubr.bf16.mxu0 %v286
      %814 = vmatmul.mubr.bf16.gmra.mrb[0].mxu0 %v247
      %v815 = vpop.f32.mrb[0].mxu0
      %v816 = vadd.f32 %v579, %v815
      %v817 = vpop.f32.mrb[0].mxu0
      %v818 = vpop.f32.mrb[0].mxu0
      %v819 = vadd.f32 %v579, %v818
      %v820 = vpop.f32.mrb[0].mxu0
      %821 = vmatprep.mubr.bf16.mxu0 %v294
      %822 = vmatmul.mubr.bf16.gmra.mrb[0].mxu0 %v248
      %v823 = vpop.f32.mrb[0].mxu0
      %v824 = vadd.f32 %v579, %v823
      %v825 = vpop.f32.mrb[0].mxu0
      %v826 = vpop.f32.mrb[0].mxu0
      %v827 = vadd.f32 %v579, %v826
      %v828 = vpop.f32.mrb[0].mxu0
      %829 = vmatprep.mubr.bf16.mxu0 %v302
      %830 = vmatmul.mubr.bf16.gmra.mrb[0].mxu0 %v249
      %v831 = vpop.f32.mrb[0].mxu0
      %v832 = vadd.f32 %v579, %v831
      %v833 = vpop.f32.mrb[0].mxu0
      %v834 = vpop.f32.mrb[0].mxu0
      %v835 = vadd.f32 %v579, %v834
      %v836 = vpop.f32.mrb[0].mxu0
      %837 = vmatprep.mubr.bf16.mxu0 %v310
      %838 = vmatmul.mubr.bf16.gmra.mrb[0].mxu0 %v250
      %v839 = vpop.f32.mrb[0].mxu0
      %v840 = vadd.f32 %v579, %v839
      %v841 = vpop.f32.mrb[0].mxu0
      %v842 = vpop.f32.mrb[0].mxu0
      %v843 = vadd.f32 %v579, %v842
      %v844 = vpop.f32.mrb[0].mxu0
      %845 = vmatprep.mubr.bf16.mxu0 %v318
      %846 = vmatmul.mubr.bf16.gmra.mrb[0].mxu0 %v251
      %v847 = vpop.f32.mrb[0].mxu0
      %v848 = vadd.f32 %v579, %v847
      %v849 = vpop.f32.mrb[0].mxu0
      %v850 = vpop.f32.mrb[0].mxu0
      %v851 = vadd.f32 %v579, %v850
      %v852 = vpop.f32.mrb[0].mxu0
      %853 = vmatprep.mubr.bf16.mxu0 %v326
      %854 = vmatmul.mubr.bf16.gmra.mrb[0].mxu0 %v252
      %v855 = vpop.f32.mrb[0].mxu0
      %v856 = vadd.f32 %v579, %v855
      %v857 = vpop.f32.mrb[0].mxu0
      %v858 = vpop.f32.mrb[0].mxu0
      %v859 = vadd.f32 %v579, %v858
      %v860 = vpop.f32.mrb[0].mxu0
      %861 = vmatprep.mubr.bf16.mxu0 %v334
      %862 = vmatmul.mubr.bf16.gmra.mrb[0].mxu0 %v253
      %v863 = vpop.f32.mrb[0].mxu0
      %v864 = vadd.f32 %v579, %v863
      %v865 = vpop.f32.mrb[0].mxu0
      %v866 = vpop.f32.mrb[0].mxu0
      %v867 = vadd.f32 %v579, %v866
      %v868 = vpop.f32.mrb[0].mxu0
      %869 = vmatprep.mubr.bf16.mxu0 %v342
      %870 = vmatmul.mubr.bf16.gmra.mrb[0].mxu0 %v254
      %v871 = vpop.f32.mrb[0].mxu0
      %v872 = vadd.f32 %v579, %v871
      %v873 = vpop.f32.mrb[0].mxu0
      %v874 = vpop.f32.mrb[0].mxu0
      %v875 = vadd.f32 %v579, %v874
      %v876 = vpop.f32.mrb[0].mxu0
      %877 = vmatprep.mubr.bf16.mxu0 %v350
      %878 = vmatmul.mubr.bf16.gmra.mrb[0].mxu0 %v255
      %v879 = vpop.f32.mrb[0].mxu0
      %v880 = vadd.f32 %v579, %v879
      %v881 = vpop.f32.mrb[0].mxu0
      %v882 = vpop.f32.mrb[0].mxu0
      %v883 = vadd.f32 %v579, %v882
      %v884 = vpop.f32.mrb[0].mxu0
      %885 = vmatprep.mubr.bf16.mxu0 %v358
      %886 = vmatmul.mubr.bf16.gmra.mrb[0].mxu0 %v256
      %v887 = vpop.f32.mrb[0].mxu0
      %v888 = vadd.f32 %v579, %v887
      %v889 = vpop.f32.mrb[0].mxu0
      %v890 = vpop.f32.mrb[0].mxu0
      %v891 = vadd.f32 %v579, %v890
      %v892 = vpop.f32.mrb[0].mxu0
      %893 = vmatprep.mubr.bf16.mxu0 %v366
      %894 = vmatmul.mubr.bf16.gmra.mrb[0].mxu0 %v257
      %v895 = vpop.f32.mrb[0].mxu0
      %v896 = vadd.f32 %v579, %v895
      %v897 = vpop.f32.mrb[0].mxu0
      %v898 = vpop.f32.mrb[0].mxu0
      %v899 = vadd.f32 %v579, %v898
      %v900 = vpop.f32.mrb[0].mxu0
      %901 = vmatprep.mubr.bf16.mxu0 %v374
      %902 = vmatmul.mubr.bf16.gmra.mrb[0].mxu0 %v258
      %v903 = vpop.f32.mrb[0].mxu0
      %v904 = vadd.f32 %v579, %v903
      %v905 = vpop.f32.mrb[0].mxu0
      %v906 = vpop.f32.mrb[0].mxu0
      %v907 = vadd.f32 %v579, %v906
      %v908 = vpop.f32.mrb[0].mxu0
      %909 = vmatprep.mubr.bf16.mxu0 %v382
      %910 = vmatmul.mubr.bf16.gmra.mrb[0].mxu0 %v259
      %v911 = vpop.f32.mrb[0].mxu0
      %v912 = vadd.f32 %v579, %v911
      %v913 = vpop.f32.mrb[0].mxu0
      %v914 = vpop.f32.mrb[0].mxu0
      %v915 = vadd.f32 %v579, %v914
      %v916 = vpop.f32.mrb[0].mxu0
      %917 = vmatprep.mubr.bf16.mxu0 %v390
      %918 = vmatmul.mubr.bf16.gmra.mrb[0].mxu0 %v260
      %v919 = vpop.f32.mrb[0].mxu0
      %v920 = vadd.f32 %v579, %v919
      %v921 = vpop.f32.mrb[0].mxu0
      %v922 = vpop.f32.mrb[0].mxu0
      %v923 = vadd.f32 %v579, %v922
      %v924 = vpop.f32.mrb[0].mxu0
      %925 = vmatprep.mubr.bf16.mxu0 %v398
      %926 = vmatmul.mubr.bf16.gmra.mrb[0].mxu0 %v261
      %v927 = vpop.f32.mrb[0].mxu0
      %v928 = vadd.f32 %v579, %v927
      %v929 = vpop.f32.mrb[0].mxu0
      %v930 = vpop.f32.mrb[0].mxu0
      %v931 = vadd.f32 %v579, %v930
      %v932 = vpop.f32.mrb[0].mxu0
      %933 = vmatprep.mubr.bf16.mxu0 %v406
      %934 = vmatmul.mubr.bf16.gmra.mrb[0].mxu0 %v262
      %v935 = vpop.f32.mrb[0].mxu0
      %v936 = vadd.f32 %v579, %v935
      %v937 = vpop.f32.mrb[0].mxu0
      %v938 = vpop.f32.mrb[0].mxu0
      %v939 = vadd.f32 %v579, %v938
      %v940 = vpop.f32.mrb[0].mxu0
      %941 = vdwg.mxu0
      %942 = vmatprep.subr.bf16.mxu0 0
      %943 = vmatpush1.bf16.msra.mxu0 %v725
      %944 = vmatprep.subr.bf16.mxu0 0
      %945 = vmatpush1.bf16.msra.mxu0 %v726
      %946 = vmatprep.subr.bf16.mxu0 0
      %947 = vmatpush1.bf16.msra.mxu0 %v727
      %948 = vmatprep.subr.bf16.mxu0 0
      %949 = vmatpush1.bf16.msra.mxu0 %v728
      %950 = vmatprep.subr.bf16.mxu0 0
      %951 = vmatpush1.bf16.msra.mxu0 %v729
      %952 = vmatprep.subr.bf16.mxu0 0
      %953 = vmatpush1.bf16.msra.mxu0 %v730
      %954 = vmatprep.subr.bf16.mxu0 0
      %955 = vmatpush1.bf16.msra.mxu0 %v731
      %956 = vmatprep.subr.bf16.mxu0 0
      %957 = vmatpush1.bf16.msra.mxu0 %v732
      %958 = vmatprep.subr.bf16.mxu0 0
      %959 = vmatpush1.bf16.msra.mxu0 %v733
      %960 = vmatprep.subr.bf16.mxu0 0
      %961 = vmatpush1.bf16.msra.mxu0 %v734
      %962 = vmatprep.subr.bf16.mxu0 0
      %963 = vmatpush1.bf16.msra.mxu0 %v735
      %964 = vmatprep.subr.bf16.mxu0 0
      %965 = vmatpush1.bf16.msra.mxu0 %v736
      %966 = vmatprep.subr.bf16.mxu0 0
      %967 = vmatpush1.bf16.msra.mxu0 %v737
      %968 = vmatprep.subr.bf16.mxu0 0
      %969 = vmatpush1.bf16.msra.mxu0 %v738
      %970 = vmatprep.subr.bf16.mxu0 0
      %971 = vmatpush1.bf16.msra.mxu0 %v739
      %972 = vmatprep.subr.bf16.mxu0 0
      %973 = vmatpush1.bf16.msra.mxu0 %v740
      %974 = vmatprep.mubr.bf16.mxu0 %v460
      %975 = vmatmul.mubr.bf16.gmra.mrb[0].mxu0 %v286
      %v976 = vpop.f32.mrb[0].mxu0
      %v977 = vadd.f32 %v808, %v976
      %v978 = vpop.f32.mrb[0].mxu0
      %v979 = vpop.f32.mrb[0].mxu0
      %v980 = vadd.f32 %v811, %v979
      %v981 = vpop.f32.mrb[0].mxu0
      %982 = vmatprep.mubr.bf16.mxu0 %v462
      %983 = vmatmul.mubr.bf16.gmra.mrb[0].mxu0 %v294
      %v984 = vpop.f32.mrb[0].mxu0
      %v985 = vadd.f32 %v816, %v984
      %v986 = vpop.f32.mrb[0].mxu0
      %v987 = vpop.f32.mrb[0].mxu0
      %v988 = vadd.f32 %v819, %v987
      %v989 = vpop.f32.mrb[0].mxu0
      %990 = vmatprep.mubr.bf16.mxu0 %v464
      %991 = vmatmul.mubr.bf16.gmra.mrb[0].mxu0 %v302
      %v992 = vpop.f32.mrb[0].mxu0
      %v993 = vadd.f32 %v824, %v992
      %v994 = vpop.f32.mrb[0].mxu0
      %v995 = vpop.f32.mrb[0].mxu0
      %v996 = vadd.f32 %v827, %v995
      %v997 = vpop.f32.mrb[0].mxu0
      %998 = vmatprep.mubr.bf16.mxu0 %v466
      %999 = vmatmul.mubr.bf16.gmra.mrb[0].mxu0 %v310
      %v1000 = vpop.f32.mrb[0].mxu0
      %v1001 = vadd.f32 %v832, %v1000
      %v1002 = vpop.f32.mrb[0].mxu0
      %v1003 = vpop.f32.mrb[0].mxu0
      %v1004 = vadd.f32 %v835, %v1003
      %v1005 = vpop.f32.mrb[0].mxu0
      %1006 = vmatprep.mubr.bf16.mxu0 %v468
      %1007 = vmatmul.mubr.bf16.gmra.mrb[0].mxu0 %v318
      %v1008 = vpop.f32.mrb[0].mxu0
      %v1009 = vadd.f32 %v840, %v1008
      %v1010 = vpop.f32.mrb[0].mxu0
      %v1011 = vpop.f32.mrb[0].mxu0
      %v1012 = vadd.f32 %v843, %v1011
      %v1013 = vpop.f32.mrb[0].mxu0
      %1014 = vmatprep.mubr.bf16.mxu0 %v470
      %1015 = vmatmul.mubr.bf16.gmra.mrb[0].mxu0 %v326
      %v1016 = vpop.f32.mrb[0].mxu0
      %v1017 = vadd.f32 %v848, %v1016
      %v1018 = vpop.f32.mrb[0].mxu0
      %v1019 = vpop.f32.mrb[0].mxu0
      %v1020 = vadd.f32 %v851, %v1019
      %v1021 = vpop.f32.mrb[0].mxu0
      %1022 = vmatprep.mubr.bf16.mxu0 %v472
      %1023 = vmatmul.mubr.bf16.gmra.mrb[0].mxu0 %v334
      %v1024 = vpop.f32.mrb[0].mxu0
      %v1025 = vadd.f32 %v856, %v1024
      %v1026 = vpop.f32.mrb[0].mxu0
      %v1027 = vpop.f32.mrb[0].mxu0
      %v1028 = vadd.f32 %v859, %v1027
      %v1029 = vpop.f32.mrb[0].mxu0
      %1030 = vmatprep.mubr.bf16.mxu0 %v474
      %1031 = vmatmul.mubr.bf16.gmra.mrb[0].mxu0 %v342
      %v1032 = vpop.f32.mrb[0].mxu0
      %v1033 = vadd.f32 %v864, %v1032
      %v1034 = vpop.f32.mrb[0].mxu0
      %v1035 = vpop.f32.mrb[0].mxu0
      %v1036 = vadd.f32 %v867, %v1035
      %v1037 = vpop.f32.mrb[0].mxu0
      %1038 = vmatprep.mubr.bf16.mxu0 %v476
      %1039 = vmatmul.mubr.bf16.gmra.mrb[0].mxu0 %v350
      %v1040 = vpop.f32.mrb[0].mxu0
      %v1041 = vadd.f32 %v872, %v1040
      %v1042 = vpop.f32.mrb[0].mxu0
      %v1043 = vpop.f32.mrb[0].mxu0
      %v1044 = vadd.f32 %v875, %v1043
      %v1045 = vpop.f32.mrb[0].mxu0
      %1046 = vmatprep.mubr.bf16.mxu0 %v478
      %1047 = vmatmul.mubr.bf16.gmra.mrb[0].mxu0 %v358
      %v1048 = vpop.f32.mrb[0].mxu0
      %v1049 = vadd.f32 %v880, %v1048
      %v1050 = vpop.f32.mrb[0].mxu0
      %v1051 = vpop.f32.mrb[0].mxu0
      %v1052 = vadd.f32 %v883, %v1051
      %v1053 = vpop.f32.mrb[0].mxu0
      %1054 = vmatprep.mubr.bf16.mxu0 %v480
      %1055 = vmatmul.mubr.bf16.gmra.mrb[0].mxu0 %v366
      %v1056 = vpop.f32.mrb[0].mxu0
      %v1057 = vadd.f32 %v888, %v1056
      %v1058 = vpop.f32.mrb[0].mxu0
      %v1059 = vpop.f32.mrb[0].mxu0
      %v1060 = vadd.f32 %v891, %v1059
      %v1061 = vpop.f32.mrb[0].mxu0
      %1062 = vmatprep.mubr.bf16.mxu0 %v482
      %1063 = vmatmul.mubr.bf16.gmra.mrb[0].mxu0 %v374
      %v1064 = vpop.f32.mrb[0].mxu0
      %v1065 = vadd.f32 %v896, %v1064
      %v1066 = vpop.f32.mrb[0].mxu0
      %v1067 = vpop.f32.mrb[0].mxu0
      %v1068 = vadd.f32 %v899, %v1067
      %v1069 = vpop.f32.mrb[0].mxu0
      %1070 = vmatprep.mubr.bf16.mxu0 %v484
      %1071 = vmatmul.mubr.bf16.gmra.mrb[0].mxu0 %v382
      %v1072 = vpop.f32.mrb[0].mxu0
      %v1073 = vadd.f32 %v904, %v1072
      %v1074 = vpop.f32.mrb[0].mxu0
      %v1075 = vpop.f32.mrb[0].mxu0
      %v1076 = vadd.f32 %v907, %v1075
      %v1077 = vpop.f32.mrb[0].mxu0
      %1078 = vmatprep.mubr.bf16.mxu0 %v486
      %1079 = vmatmul.mubr.bf16.gmra.mrb[0].mxu0 %v390
      %v1080 = vpop.f32.mrb[0].mxu0
      %v1081 = vadd.f32 %v912, %v1080
      %v1082 = vpop.f32.mrb[0].mxu0
      %v1083 = vpop.f32.mrb[0].mxu0
      %v1084 = vadd.f32 %v915, %v1083
      %v1085 = vpop.f32.mrb[0].mxu0
      %1086 = vmatprep.mubr.bf16.mxu0 %v488
      %1087 = vmatmul.mubr.bf16.gmra.mrb[0].mxu0 %v398
      %v1088 = vpop.f32.mrb[0].mxu0
      %v1089 = vadd.f32 %v920, %v1088
      %v1090 = vpop.f32.mrb[0].mxu0
      %v1091 = vpop.f32.mrb[0].mxu0
      %v1092 = vadd.f32 %v923, %v1091
      %v1093 = vpop.f32.mrb[0].mxu0
      %1094 = vmatprep.mubr.bf16.mxu0 %v490
      %1095 = vmatmul.mubr.bf16.gmra.mrb[0].mxu0 %v428
      %v1096 = vpop.f32.mrb[0].mxu0
      %v1097 = vadd.f32 %v928, %v1096
      %v1098 = vpop.f32.mrb[0].mxu0
      %v1099 = vpop.f32.mrb[0].mxu0
      %v1100 = vadd.f32 %v931, %v1099
      %v1101 = vpop.f32.mrb[0].mxu0
      %1102 = vmatprep.mubr.bf16.mxu0 %v492
      %1103 = vmatmul.mubr.bf16.gmra.mrb[0].mxu0 %v436
      %v1104 = vpop.f32.mrb[0].mxu0
      %v1105 = vadd.f32 %v936, %v1104
      %v1106 = vpop.f32.mrb[0].mxu0
      %v1107 = vpop.f32.mrb[0].mxu0
      %v1108 = vadd.f32 %v939, %v1107
      %v1109 = vpop.f32.mrb[0].mxu0
      %1110 = vdwg.mxu0
      %v1111 = vxor.u32 %v977, 2147483648
      %v1112 = vxor.u32 %v980, 2147483648
      %v1113 = vxor.u32 %v985, 2147483648
      %v1114 = vxor.u32 %v988, 2147483648
      %v1115 = vxor.u32 %v993, 2147483648
      %v1116 = vxor.u32 %v996, 2147483648
      %v1117 = vxor.u32 %v1001, 2147483648
      %v1118 = vxor.u32 %v1004, 2147483648
      %v1119 = vxor.u32 %v1009, 2147483648
      %v1120 = vxor.u32 %v1012, 2147483648
      %v1121 = vxor.u32 %v1017, 2147483648
      %v1122 = vxor.u32 %v1020, 2147483648
      %v1123 = vxor.u32 %v1025, 2147483648
      %v1124 = vxor.u32 %v1028, 2147483648
      %v1125 = vxor.u32 %v1033, 2147483648
      %v1126 = vxor.u32 %v1036, 2147483648
      %v1127 = vxor.u32 %v1041, 2147483648
      %v1128 = vxor.u32 %v1044, 2147483648
      %v1129 = vxor.u32 %v1049, 2147483648
      %v1130 = vxor.u32 %v1052, 2147483648
      %v1131 = vxor.u32 %v1057, 2147483648
      %v1132 = vxor.u32 %v1060, 2147483648
      %v1133 = vxor.u32 %v1065, 2147483648
      %v1134 = vxor.u32 %v1068, 2147483648
      %v1135 = vxor.u32 %v1073, 2147483648
      %v1136 = vxor.u32 %v1076, 2147483648
      %v1137 = vxor.u32 %v1081, 2147483648
      %v1138 = vxor.u32 %v1084, 2147483648
      %v1139 = vxor.u32 %v1089, 2147483648
      %v1140 = vxor.u32 %v1092, 2147483648
      %v1141 = vxor.u32 %v1097, 2147483648
      %v1142 = vxor.u32 %v1100, 2147483648
      %v1143 = vxor.u32 %v1105, 2147483648
      %v1144 = vxor.u32 %v1108, 2147483648
      %v1145 = vmul.f32 %v1111, 1.442695
      %v1146 = vpow.pop %v1145
      %v1147 = vmul.f32 %v1112, 1.442695
      %v1148 = vpow.pop %v1147
      %v1149 = vmul.f32 %v1113, 1.442695
      %v1150 = vpow.pop %v1149
      %v1151 = vmul.f32 %v1114, 1.442695
      %v1152 = vpow.pop %v1151
      %v1153 = vmul.f32 %v1115, 1.442695
      %v1154 = vpow.pop %v1153
      %v1155 = vmul.f32 %v1116, 1.442695
      %v1156 = vpow.pop %v1155
      %v1157 = vmul.f32 %v1117, 1.442695
      %v1158 = vpow.pop %v1157
      %v1159 = vmul.f32 %v1118, 1.442695
      %v1160 = vpow.pop %v1159
      %v1161 = vmul.f32 %v1119, 1.442695
      %v1162 = vpow.pop %v1161
      %v1163 = vmul.f32 %v1120, 1.442695
      %v1164 = vpow.pop %v1163
      %v1165 = vmul.f32 %v1121, 1.442695
      %v1166 = vpow.pop %v1165
      %v1167 = vmul.f32 %v1122, 1.442695
      %v1168 = vpow.pop %v1167
      %v1169 = vmul.f32 %v1123, 1.442695
      %v1170 = vpow.pop %v1169
      %v1171 = vmul.f32 %v1124, 1.442695
      %v1172 = vpow.pop %v1171
      %v1173 = vmul.f32 %v1125, 1.442695
      %v1174 = vpow.pop %v1173
      %v1175 = vmul.f32 %v1126, 1.442695
      %v1176 = vpow.pop %v1175
      %v1177 = vmul.f32 %v1127, 1.442695
      %v1178 = vpow.pop %v1177
      %v1179 = vmul.f32 %v1128, 1.442695
      %v1180 = vpow.pop %v1179
      %v1181 = vmul.f32 %v1129, 1.442695
      %v1182 = vpow.pop %v1181
      %v1183 = vmul.f32 %v1130, 1.442695
      %v1184 = vpow.pop %v1183
      %v1185 = vmul.f32 %v1131, 1.442695
      %v1186 = vpow.pop %v1185
      %v1187 = vmul.f32 %v1132, 1.442695
      %v1188 = vpow.pop %v1187
      %v1189 = vmul.f32 %v1133, 1.442695
      %v1190 = vpow.pop %v1189
      %v1191 = vmul.f32 %v1134, 1.442695
      %v1192 = vpow.pop %v1191
      %v1193 = vmul.f32 %v1135, 1.442695
      %v1194 = vpow.pop %v1193
      %v1195 = vmul.f32 %v1136, 1.442695
      %v1196 = vpow.pop %v1195
      %v1197 = vmul.f32 %v1137, 1.442695
      %v1198 = vpow.pop %v1197
      %v1199 = vmul.f32 %v1138, 1.442695
      %v1200 = vpow.pop %v1199
      %v1201 = vmul.f32 %v1139, 1.442695
      %v1202 = vpow.pop %v1201
      %v1203 = vmul.f32 %v1140, 1.442695
      %v1204 = vpow.pop %v1203
      %v1205 = vmul.f32 %v1141, 1.442695
      %v1206 = vpow.pop %v1205
      %v1207 = vmul.f32 %v1142, 1.442695
      %v1208 = vpow.pop %v1207
      %v1209 = vmul.f32 %v1143, 1.442695
      %v1210 = vpow.pop %v1209
      %v1211 = vmul.f32 %v1144, 1.442695
      %v1212 = vpow.pop %v1211
      %v1213 = vadd.f32 %v1146, 1.0
      %v1214 = vadd.f32 %v1148, 1.0
      %v1215 = vadd.f32 %v1150, 1.0
      %v1216 = vadd.f32 %v1152, 1.0
      %v1217 = vadd.f32 %v1154, 1.0
      %v1218 = vadd.f32 %v1156, 1.0
      %v1219 = vadd.f32 %v1158, 1.0
      %v1220 = vadd.f32 %v1160, 1.0
      %v1221 = vadd.f32 %v1162, 1.0
      %v1222 = vadd.f32 %v1164, 1.0
      %v1223 = vadd.f32 %v1166, 1.0
      %v1224 = vadd.f32 %v1168, 1.0
      %v1225 = vadd.f32 %v1170, 1.0
      %v1226 = vadd.f32 %v1172, 1.0
      %v1227 = vadd.f32 %v1174, 1.0
      %v1228 = vadd.f32 %v1176, 1.0
      %v1229 = vadd.f32 %v1178, 1.0
      %v1230 = vadd.f32 %v1180, 1.0
      %v1231 = vadd.f32 %v1182, 1.0
      %v1232 = vadd.f32 %v1184, 1.0
      %v1233 = vadd.f32 %v1186, 1.0
      %v1234 = vadd.f32 %v1188, 1.0
      %v1235 = vadd.f32 %v1190, 1.0
      %v1236 = vadd.f32 %v1192, 1.0
      %v1237 = vadd.f32 %v1194, 1.0
      %v1238 = vadd.f32 %v1196, 1.0
      %v1239 = vadd.f32 %v1198, 1.0
      %v1240 = vadd.f32 %v1200, 1.0
      %v1241 = vadd.f32 %v1202, 1.0
      %v1242 = vadd.f32 %v1204, 1.0
      %v1243 = vadd.f32 %v1206, 1.0
      %v1244 = vadd.f32 %v1208, 1.0
      %v1245 = vadd.f32 %v1210, 1.0
      %v1246 = vadd.f32 %v1212, 1.0
      %v1247 = vrcp.pop %v1213
      %v1248 = vmul.f32 1.0, %v1247
      %v1249 = vrcp.pop %v1214
      %v1250 = vmul.f32 1.0, %v1249
      %v1251 = vrcp.pop %v1215
      %v1252 = vmul.f32 1.0, %v1251
      %v1253 = vrcp.pop %v1216
      %v1254 = vmul.f32 1.0, %v1253
      %v1255 = vrcp.pop %v1217
      %v1256 = vmul.f32 1.0, %v1255
      %v1257 = vrcp.pop %v1218
      %v1258 = vmul.f32 1.0, %v1257
      %v1259 = vrcp.pop %v1219
      %v1260 = vmul.f32 1.0, %v1259
      %v1261 = vrcp.pop %v1220
      %v1262 = vmul.f32 1.0, %v1261
      %v1263 = vrcp.pop %v1221
      %v1264 = vmul.f32 1.0, %v1263
      %v1265 = vrcp.pop %v1222
      %v1266 = vmul.f32 1.0, %v1265
      %v1267 = vrcp.pop %v1223
      %v1268 = vmul.f32 1.0, %v1267
      %v1269 = vrcp.pop %v1224
      %v1270 = vmul.f32 1.0, %v1269
      %v1271 = vrcp.pop %v1225
      %v1272 = vmul.f32 1.0, %v1271
      %v1273 = vrcp.pop %v1226
      %v1274 = vmul.f32 1.0, %v1273
      %v1275 = vrcp.pop %v1227
      %v1276 = vmul.f32 1.0, %v1275
      %v1277 = vrcp.pop %v1228
      %v1278 = vmul.f32 1.0, %v1277
      %v1279 = vrcp.pop %v1229
      %v1280 = vmul.f32 1.0, %v1279
      %v1281 = vrcp.pop %v1230
      %v1282 = vmul.f32 1.0, %v1281
      %v1283 = vrcp.pop %v1231
      %v1284 = vmul.f32 1.0, %v1283
      %v1285 = vrcp.pop %v1232
      %v1286 = vmul.f32 1.0, %v1285
      %v1287 = vrcp.pop %v1233
      %v1288 = vmul.f32 1.0, %v1287
      %v1289 = vrcp.pop %v1234
      %v1290 = vmul.f32 1.0, %v1289
      %v1291 = vrcp.pop %v1235
      %v1292 = vmul.f32 1.0, %v1291
      %v1293 = vrcp.pop %v1236
      %v1294 = vmul.f32 1.0, %v1293
      %v1295 = vrcp.pop %v1237
      %v1296 = vmul.f32 1.0, %v1295
      %v1297 = vrcp.pop %v1238
      %v1298 = vmul.f32 1.0, %v1297
      %v1299 = vrcp.pop %v1239
      %v1300 = vmul.f32 1.0, %v1299
      %v1301 = vrcp.pop %v1240
      %v1302 = vmul.f32 1.0, %v1301
      %v1303 = vrcp.pop %v1241
      %v1304 = vmul.f32 1.0, %v1303
      %v1305 = vrcp.pop %v1242
      %v1306 = vmul.f32 1.0, %v1305
      %v1307 = vrcp.pop %v1243
      %v1308 = vmul.f32 1.0, %v1307
      %v1309 = vrcp.pop %v1244
      %v1310 = vmul.f32 1.0, %v1309
      %v1311 = vrcp.pop %v1245
      %v1312 = vmul.f32 1.0, %v1311
      %v1313 = vrcp.pop %v1246
      %v1314 = vmul.f32 1.0, %v1313
      %v1315 = vmul.f32 %v977, %v1248
      %v1316 = vmul.f32 %v980, %v1250
      %v1317 = vmul.f32 %v985, %v1252
      %v1318 = vmul.f32 %v988, %v1254
      %v1319 = vmul.f32 %v993, %v1256
      %v1320 = vmul.f32 %v996, %v1258
      %v1321 = vmul.f32 %v1001, %v1260
      %v1322 = vmul.f32 %v1004, %v1262
      %v1323 = vmul.f32 %v1009, %v1264
      %v1324 = vmul.f32 %v1012, %v1266
      %v1325 = vmul.f32 %v1017, %v1268
      %v1326 = vmul.f32 %v1020, %v1270
      %v1327 = vmul.f32 %v1025, %v1272
      %v1328 = vmul.f32 %v1028, %v1274
      %v1329 = vmul.f32 %v1033, %v1276
      %v1330 = vmul.f32 %v1036, %v1278
      %v1331 = vmul.f32 %v1041, %v1280
      %v1332 = vmul.f32 %v1044, %v1282
      %v1333 = vmul.f32 %v1049, %v1284
      %v1334 = vmul.f32 %v1052, %v1286
      %v1335 = vmul.f32 %v1057, %v1288
      %v1336 = vmul.f32 %v1060, %v1290
      %v1337 = vmul.f32 %v1065, %v1292
      %v1338 = vmul.f32 %v1068, %v1294
      %v1339 = vmul.f32 %v1073, %v1296
      %v1340 = vmul.f32 %v1076, %v1298
      %v1341 = vmul.f32 %v1081, %v1300
      %v1342 = vmul.f32 %v1084, %v1302
      %v1343 = vmul.f32 %v1089, %v1304
      %v1344 = vmul.f32 %v1092, %v1306
      %v1345 = vmul.f32 %v1097, %v1308
      %v1346 = vmul.f32 %v1100, %v1310
      %v1347 = vmul.f32 %v1105, %v1312
      %v1348 = vmul.f32 %v1108, %v1314
      %v1349 = vpack.c.bf16 %v1316, %v1315
      %v1350 = vpack.c.bf16 %v1318, %v1317
      %v1351 = vpack.c.bf16 %v1320, %v1319
      %v1352 = vpack.c.bf16 %v1322, %v1321
      %v1353 = vpack.c.bf16 %v1324, %v1323
      %v1354 = vpack.c.bf16 %v1326, %v1325
      %v1355 = vpack.c.bf16 %v1328, %v1327
      %v1356 = vpack.c.bf16 %v1330, %v1329
      %v1357 = vpack.c.bf16 %v1332, %v1331
      %v1358 = vpack.c.bf16 %v1334, %v1333
      %v1359 = vpack.c.bf16 %v1336, %v1335
      %v1360 = vpack.c.bf16 %v1338, %v1337
      %v1361 = vpack.c.bf16 %v1340, %v1339
      %v1362 = vpack.c.bf16 %v1342, %v1341
      %v1363 = vpack.c.bf16 %v1344, %v1343
      %v1364 = vpack.c.bf16 %v1346, %v1345
      %v1365 = vpack.c.bf16 %v1348, %v1347
      %v1383 = vunpack.c.l.b16 %v1349
      %v1384 = vunpack.c.h.b16 %v1349
      %v1385 = vunpack.c.l.b16 %v1350
      %v1386 = vunpack.c.h.b16 %v1350
      %v1387 = vunpack.c.l.b16 %v1351
      %v1388 = vunpack.c.h.b16 %v1351
      %v1389 = vunpack.c.l.b16 %v1352
      %v1390 = vunpack.c.h.b16 %v1352
      %v1391 = vunpack.c.l.b16 %v1353
      %v1392 = vunpack.c.h.b16 %v1353
      %v1393 = vunpack.c.l.b16 %v1354
      %v1394 = vunpack.c.h.b16 %v1354
      %v1395 = vunpack.c.l.b16 %v1355
      %v1396 = vunpack.c.h.b16 %v1355
      %v1397 = vunpack.c.l.b16 %v1356
      %v1398 = vunpack.c.h.b16 %v1356
      %v1399 = vunpack.c.l.b16 %v1357
      %v1400 = vunpack.c.h.b16 %v1357
      %v1401 = vunpack.c.l.b16 %v1358
      %v1402 = vunpack.c.h.b16 %v1358
      %v1403 = vunpack.c.l.b16 %v1359
      %v1404 = vunpack.c.h.b16 %v1359
      %v1405 = vunpack.c.l.b16 %v1360
      %v1406 = vunpack.c.h.b16 %v1360
      %v1407 = vunpack.c.l.b16 %v1361
      %v1408 = vunpack.c.h.b16 %v1361
      %v1409 = vunpack.c.l.b16 %v1362
      %v1410 = vunpack.c.h.b16 %v1362
      %v1411 = vunpack.c.l.b16 %v1363
      %v1412 = vunpack.c.h.b16 %v1363
      %v1413 = vunpack.c.l.b16 %v1364
      %v1414 = vunpack.c.h.b16 %v1364
      %v1415 = vunpack.c.l.b16 %v1365
      %v1416 = vunpack.c.h.b16 %v1365
      %v1417 = vpack.c.b16 %v1383, %v1383
      %v1418 = vpack.c.b16 %v1384, %v1384
      %v1419 = vpack.c.b16 %v1385, %v1385
      %v1420 = vpack.c.b16 %v1386, %v1386
      %v1421 = vpack.c.b16 %v1387, %v1387
      %v1422 = vpack.c.b16 %v1388, %v1388
      %v1423 = vpack.c.b16 %v1389, %v1389
      %v1424 = vpack.c.b16 %v1390, %v1390
      %v1425 = vpack.c.b16 %v1391, %v1391
      %v1426 = vpack.c.b16 %v1392, %v1392
      %v1427 = vpack.c.b16 %v1393, %v1393
      %v1428 = vpack.c.b16 %v1394, %v1394
      %v1429 = vpack.c.b16 %v1395, %v1395
      %v1430 = vpack.c.b16 %v1396, %v1396
      %v1431 = vpack.c.b16 %v1397, %v1397
      %v1432 = vpack.c.b16 %v1398, %v1398
      %v1433 = vpack.c.b16 %v1399, %v1399
      %v1434 = vpack.c.b16 %v1400, %v1400
      %v1435 = vpack.c.b16 %v1401, %v1401
      %v1436 = vpack.c.b16 %v1402, %v1402
      %v1437 = vpack.c.b16 %v1403, %v1403
      %v1438 = vpack.c.b16 %v1404, %v1404
      %v1439 = vpack.c.b16 %v1405, %v1405
      %v1440 = vpack.c.b16 %v1406, %v1406
      %v1441 = vpack.c.b16 %v1407, %v1407
      %v1442 = vpack.c.b16 %v1408, %v1408
      %v1443 = vpack.c.b16 %v1409, %v1409
      %v1444 = vpack.c.b16 %v1410, %v1410
      %v1445 = vpack.c.b16 %v1411, %v1411
      %v1446 = vpack.c.b16 %v1412, %v1412
      %v1447 = vpack.c.b16 %v1413, %v1413
      %v1448 = vpack.c.b16 %v1414, %v1414
      %v1449 = vpack.c.b16 %v1415, %v1415
      %v1450 = vpack.c.b16 %v1416, %v1416
      %1485 = vst [vmem:[%s170] sm:$0xf] %v1417
      %1486 = vst [vmem:[%s170 + $0x4] sm:$0xf] %v1418
      %1487 = vst [vmem:[%s170 + $0x8] sm:$0xf] %v1419
      %1488 = vst [vmem:[%s170 + $0xc] sm:$0xf] %v1420
      %1489 = vst [vmem:[%s170 + $0x10] sm:$0xf] %v1421
      %1490 = vst [vmem:[%s170 + $0x14] sm:$0xf] %v1422
      %1491 = vst [vmem:[%s170 + $0x18] sm:$0xf] %v1423
      %1492 = vst [vmem:[%s170 + $0x1c] sm:$0xf] %v1424
      %1493 = vst [vmem:[%s170 + $0x20] sm:$0xf] %v1425
      %1494 = vst [vmem:[%s170 + $0x24] sm:$0xf] %v1426
      %1495 = vst [vmem:[%s170 + $0x28] sm:$0xf] %v1427
      %1496 = vst [vmem:[%s170 + $0x2c] sm:$0xf] %v1428
      %1497 = vst [vmem:[%s170 + $0x30] sm:$0xf] %v1429
      %1498 = vst [vmem:[%s170 + $0x34] sm:$0xf] %v1430
      %1499 = vst [vmem:[%s170 + $0x38] sm:$0xf] %v1431
      %1500 = vst [vmem:[%s170 + $0x3c] sm:$0xf] %v1432
      %1501 = vst [vmem:[%s170 + $0x40] sm:$0xf] %v1433
      %1502 = vst [vmem:[%s170 + $0x44] sm:$0xf] %v1434
      %1503 = vst [vmem:[%s170 + $0x48] sm:$0xf] %v1435
      %1504 = vst [vmem:[%s170 + $0x4c] sm:$0xf] %v1436
      %1505 = vst [vmem:[%s170 + $0x50] sm:$0xf] %v1437
      %1506 = vst [vmem:[%s170 + $0x54] sm:$0xf] %v1438
      %1507 = vst [vmem:[%s170 + $0x58] sm:$0xf] %v1439
      %1508 = vst [vmem:[%s170 + $0x5c] sm:$0xf] %v1440
      %1509 = vst [vmem:[%s170 + $0x60] sm:$0xf] %v1441
      %1510 = vst [vmem:[%s170 + $0x64] sm:$0xf] %v1442
      %1511 = vst [vmem:[%s170 + $0x68] sm:$0xf] %v1443
      %1512 = vst [vmem:[%s170 + $0x6c] sm:$0xf] %v1444
      %1513 = vst [vmem:[%s170 + $0x70] sm:$0xf] %v1445
      %1514 = vst [vmem:[%s170 + $0x74] sm:$0xf] %v1446
      %1515 = vst [vmem:[%s170 + $0x78] sm:$0xf] %v1447
      %1516 = vst [vmem:[%s170 + $0x7c] sm:$0xf] %v1448
      %1517 = vst [vmem:[%s170 + $0x80] sm:$0xf] %v1449
      %1518 = vst [vmem:[%s170 + $0x84] sm:$0xf] %v1450
      %p1519 = scmp.lt.s32.totalorder %s14, 1
      %s1520 = scalar_select %p1519, %s14, 1
      %s1521 = smul.addr %s1520, 34
      %s1522 = smul.addr %s1521, 4
      %s1523 = scalar_lea.vmem %s3, %s1522
      // Predicated region
      $region33: #{forward.5} parent=31 // pred_check
        %p1524 = pneg %p100
      $region34: #{forward.5} parent=31 // pred_check_branch
        %1526 = sbr.rel (%p1524) target = $region36
      $region35: #{forward.5} parent=31 // pred_region
        _
      $region36: #{forward.5} parent=31 // pred_fallthru
        _
    $region32: #{forward.5} parent=5 // pred_fallthru
      _
    %p1527 = scmp.le.s32.totalorder 2, %s9
    // Predicated region
    $region37: #{forward.5} parent=5 // pred_check
      %p1528 = pneg %p1527
    $region38: #{forward.5} parent=5 // pred_check_branch
      %1530 = sbr.rel (%p1528) target = $region40
    $region39: #{forward.5} parent=5 // pred_region
      %s1531 = ssub.s32 %s9, 2
      // Predicated region
      $region41: #{forward.5} parent=39 // pred_check
        %p1532 = pneg %p106
      $region42: #{forward.5} parent=39 // pred_check_branch
        %1534 = sbr.rel (%p1532) target = $region44
      $region43: #{forward.5} parent=39 // pred_region
        %p1535 = scmp.lt.s32.totalorder %s15, 1
        %s1536 = scalar_select %p1535, %s15, 1
        %s1537 = smul.addr %s1536, 34
        %s1538 = smul.addr %s1537, 4
        %s1539 = scalar_lea.vmem %s3, %s1538
      $region44: #{forward.5} parent=39 // pred_fallthru
        _
    $region40: #{forward.5} parent=5 // pred_fallthru
      _
  $region6: #{forward.5} parent=0 // loop_footer
    %s13 = sadd.s32 1, %s9
  $region7: #{forward.5} parent=0 // loop_footer_branch
    %8 = sbr.rel target = $region3
  $region8: #{forward.5} parent=0 // loop_exit
    _

// kernel: forward.6
$region0: #{forward.6}
  #allocation0 [shape = 'u32[]', space=smem, size = 0x4, offset = 0x4, fixed_abs, tag = 'smem constant byte address 0x4 - core index']
  #allocation1 [shape = 'u32[144,128]{1,0:T(1,128)}', space=vmem, size = 0x12000, scoped, tag = 'internal scratch']
  %s0 = inlined_call_operand.vmem [shape: bf16[2,82,512], index: 0, kind: input, shape index: {}]
  %s1 = inlined_call_operand.vmem [shape: bf16[2048,128], index: 1, kind: input, shape index: {}]
  %s2 = inlined_call_operand.vmem [shape: f32[1,128], index: 2, kind: input, shape index: {}, may-alias: {2,4}]
  %s3 = inlined_call_operand.vmem [shape: bf16[128,128], index: 3, kind: input, shape index: {}]
  %s4 = inlined_call_operand.vmem [shape: f32[1,128], index: 4, kind: input, shape index: {}, may-alias: {2,4}]
  %s5 = inlined_call_operand.vmem [shape: bf16[2,72,128], index: 5, kind: output, shape index: {}]
  %s6 = sld [smem:[#allocation0]]
  $region53: #{forward.6} parent=0
    _
  %s8 = ssub.s32 1, %s6
  %s9 = scalar_select 0, %s8, %s6
  loop: start=0, step=1, limit=4
  $region2: #{forward.6} parent=0 // loop_pre_header
    _
  $region3: #{forward.6} parent=0 // loop_header
    %s11 = sphi 0, %s15
    %p12 = scmp.ge.s32.totalorder %s11, 4
    %s21 = sphi 0, %s23
    %s24 = sphi 0, %s21
    %s25 = sphi 0, %s24
    %s41 = sphi 0, %s25
    %s45 = sphi 0, %s45
    %s47 = sphi 0, %s45
    %s48 = sphi 0, %s47
    %s62 = sphi 0, %s48
    %s66 = sphi 0, %s66
    %s68 = sphi 0, %s66
    %s69 = sphi 0, %s68
    %s83 = sphi 0, %s69
    %s87 = sphi 0, %s87
    %s89 = sphi 0, %s87
    %s90 = sphi 0, %s89
    %s104 = sphi 0, %s90
    %s108 = sphi 0, %s108
    %s110 = sphi 0, %s108
    %s111 = sphi 0, %s110
    %s125 = sphi 0, %s111
    %s131 = sphi 0, %s133
    %s134 = sphi 0, %s131
    %s135 = sphi 0, %s134
    %s151 = sphi 0, %s135
  $region4: #{forward.6} parent=0 // loop_header_branch
    %14 = sbr.rel (%p12) target = $region8
  $region5: #{forward.6} parent=0 // loop_body
    %s16 = ssub.s32 %s11, 1
    %s17 = ssub.s32 %s11, 2
    %s18 = sadd.s32 %s11, 1
    %s19 = ssub.s32 %s11, %s18
    %p20 = scmp.eq.s32.totalorder %s19, 0
    %s22 = sadd.s32 %s21, 1
    %s23 = scalar_select %p20, %s21, %s22
    %p26 = pneg %p20
    %p27 = scmp.eq.s32.totalorder %s11, 1
    %p28 = por %p26, %p27
    %p29 = scmp.ne.s32.totalorder %s21, %s24
    %p30 = scmp.eq.s32.totalorder %s11, 0
    %p31 = por %p29, %p30
    %p32 = scmp.ne.s32.totalorder %s21, %s24
    %p33 = scmp.eq.s32.totalorder %s16, 1
    %p34 = por %p32, %p33
    %p35 = scmp.ne.s32.totalorder %s24, %s25
    %p36 = scmp.eq.s32.totalorder %s16, 0
    %p37 = por %p35, %p36
    %p38 = scmp.ne.s32.totalorder %s24, %s25
    %p39 = scmp.eq.s32.totalorder %s17, 1
    %p40 = por %p38, %p39
    %p42 = scmp.ne.s32.totalorder %s25, %s41
    %p43 = scmp.eq.s32.totalorder %s17, 0
    %p44 = por %p42, %p43
    %s46 = sadd.s32 %s45, 1
    %p49 = scmp.eq.s32.totalorder %s11, 1
    %p50 = scmp.ne.s32.totalorder %s45, %s47
    %p51 = scmp.eq.s32.totalorder %s11, 0
    %p52 = por %p50, %p51
    %p53 = scmp.ne.s32.totalorder %s45, %s47
    %p54 = scmp.eq.s32.totalorder %s16, 1
    %p55 = por %p53, %p54
    %p56 = scmp.ne.s32.totalorder %s47, %s48
    %p57 = scmp.eq.s32.totalorder %s16, 0
    %p58 = por %p56, %p57
    %p59 = scmp.ne.s32.totalorder %s47, %s48
    %p60 = scmp.eq.s32.totalorder %s17, 1
    %p61 = por %p59, %p60
    %p63 = scmp.ne.s32.totalorder %s48, %s62
    %p64 = scmp.eq.s32.totalorder %s17, 0
    %p65 = por %p63, %p64
    %s67 = sadd.s32 %s66, 1
    %p70 = scmp.eq.s32.totalorder %s11, 1
    %p71 = scmp.ne.s32.totalorder %s66, %s68
    %p72 = scmp.eq.s32.totalorder %s11, 0
    %p73 = por %p71, %p72
    %p74 = scmp.ne.s32.totalorder %s66, %s68
    %p75 = scmp.eq.s32.totalorder %s16, 1
    %p76 = por %p74, %p75
    %p77 = scmp.ne.s32.totalorder %s68, %s69
    %p78 = scmp.eq.s32.totalorder %s16, 0
    %p79 = por %p77, %p78
    %p80 = scmp.ne.s32.totalorder %s68, %s69
    %p81 = scmp.eq.s32.totalorder %s17, 1
    %p82 = por %p80, %p81
    %p84 = scmp.ne.s32.totalorder %s69, %s83
    %p85 = scmp.eq.s32.totalorder %s17, 0
    %p86 = por %p84, %p85
    %s88 = sadd.s32 %s87, 1
    %p91 = scmp.eq.s32.totalorder %s11, 1
    %p92 = scmp.ne.s32.totalorder %s87, %s89
    %p93 = scmp.eq.s32.totalorder %s11, 0
    %p94 = por %p92, %p93
    %p95 = scmp.ne.s32.totalorder %s87, %s89
    %p96 = scmp.eq.s32.totalorder %s16, 1
    %p97 = por %p95, %p96
    %p98 = scmp.ne.s32.totalorder %s89, %s90
    %p99 = scmp.eq.s32.totalorder %s16, 0
    %p100 = por %p98, %p99
    %p101 = scmp.ne.s32.totalorder %s89, %s90
    %p102 = scmp.eq.s32.totalorder %s17, 1
    %p103 = por %p101, %p102
    %p105 = scmp.ne.s32.totalorder %s90, %s104
    %p106 = scmp.eq.s32.totalorder %s17, 0
    %p107 = por %p105, %p106
    %s109 = sadd.s32 %s108, 1
    %p112 = scmp.eq.s32.totalorder %s11, 1
    %p113 = scmp.ne.s32.totalorder %s108, %s110
    %p114 = scmp.eq.s32.totalorder %s11, 0
    %p115 = por %p113, %p114
    %p116 = scmp.ne.s32.totalorder %s108, %s110
    %p117 = scmp.eq.s32.totalorder %s16, 1
    %p118 = por %p116, %p117
    %p119 = scmp.ne.s32.totalorder %s110, %s111
    %p120 = scmp.eq.s32.totalorder %s16, 0
    %p121 = por %p119, %p120
    %p122 = scmp.ne.s32.totalorder %s110, %s111
    %p123 = scmp.eq.s32.totalorder %s17, 1
    %p124 = por %p122, %p123
    %p126 = scmp.ne.s32.totalorder %s111, %s125
    %p127 = scmp.eq.s32.totalorder %s17, 0
    %p128 = por %p126, %p127
    %s129 = ssub.s32 %s11, %s18
    %p130 = scmp.eq.s32.totalorder %s129, 0
    %s132 = sadd.s32 %s131, 1
    %s133 = scalar_select %p130, %s131, %s132
    %p136 = pneg %p130
    %p137 = scmp.eq.s32.totalorder %s11, 1
    %p138 = por %p136, %p137
    %p139 = scmp.ne.s32.totalorder %s131, %s134
    %p140 = scmp.eq.s32.totalorder %s11, 0
    %p141 = por %p139, %p140
    %p142 = scmp.ne.s32.totalorder %s131, %s134
    %p143 = scmp.eq.s32.totalorder %s16, 1
    %p144 = por %p142, %p143
    %p145 = scmp.ne.s32.totalorder %s134, %s135
    %p146 = scmp.eq.s32.totalorder %s16, 0
    %p147 = por %p145, %p146
    %p148 = scmp.ne.s32.totalorder %s134, %s135
    %p149 = scmp.eq.s32.totalorder %s17, 1
    %p150 = por %p148, %p149
    %p152 = scmp.ne.s32.totalorder %s135, %s151
    %p153 = scmp.eq.s32.totalorder %s17, 0
    %p154 = por %p152, %p153
    %p155 = scmp.le.s32.totalorder 1, %s11
    %p156 = scmp.lt.s32.totalorder %s11, 3
    %p157 = pnand %p155, %p156
    %p158 = pneg %p157
    // Predicated region
    $region9: #{forward.6} parent=5 // pred_check
      _
    $region10: #{forward.6} parent=5 // pred_check_branch
      %160 = sbr.rel (%p157) target = $region12
    $region11: #{forward.6} parent=5 // pred_region
      %s161 = ssub.s32 %s11, 1
      // Predicated region
      $region13: #{forward.6} parent=11 // pred_check
        %p162 = pneg %p58
      $region14: #{forward.6} parent=11 // pred_check_branch
        %164 = sbr.rel (%p162) target = $region16
      $region15: #{forward.6} parent=11 // pred_region
        _
      $region16: #{forward.6} parent=11 // pred_fallthru
        _
      // Predicated region
      $region17: #{forward.6} parent=11 // pred_check
        %p165 = pneg %p79
      $region18: #{forward.6} parent=11 // pred_check_branch
        %167 = sbr.rel (%p165) target = $region20
      $region19: #{forward.6} parent=11 // pred_region
        _
      $region20: #{forward.6} parent=11 // pred_fallthru
        _
      // Predicated region
      $region21: #{forward.6} parent=11 // pred_check
        %p168 = pneg %p100
      $region22: #{forward.6} parent=11 // pred_check_branch
        %170 = sbr.rel (%p168) target = $region24
      $region23: #{forward.6} parent=11 // pred_region
        _
      $region24: #{forward.6} parent=11 // pred_fallthru
        _
      // Predicated region
      $region25: #{forward.6} parent=11 // pred_check
        %p171 = pneg %p121
      $region26: #{forward.6} parent=11 // pred_check_branch
        %173 = sbr.rel (%p171) target = $region28
      $region27: #{forward.6} parent=11 // pred_region
        _
      $region28: #{forward.6} parent=11 // pred_fallthru
        _
    $region12: #{forward.6} parent=5 // pred_fallthru
      _
    %p174 = scmp.lt.s32.totalorder %s11, 2
    // Predicated region
    $region29: #{forward.6} parent=5 // pred_check
      %p175 = pneg %p174
    $region30: #{forward.6} parent=5 // pred_check_branch
      %177 = sbr.rel (%p175) target = $region32
    $region31: #{forward.6} parent=5 // pred_region
      // Predicated region
      $region33: #{forward.6} parent=31 // pred_check
        %p178 = pneg %p31
      $region34: #{forward.6} parent=31 // pred_check_branch
        %180 = sbr.rel (%p178) target = $region36
      $region35: #{forward.6} parent=31 // pred_region
        %p181 = scmp.lt.s32.totalorder %s11, 1
        %s182 = scalar_select %p181, %s11, 1
        %s183 = smul.addr %s182, 44
        %s184 = smul.addr %s183, 4
        %s185 = scalar_lea.vmem %s0, %s184
      $region36: #{forward.6} parent=31 // pred_fallthru
        _
    $region32: #{forward.6} parent=5 // pred_fallthru
      _
    %p186 = scmp.le.s32.totalorder 1, %s11
    %p187 = scmp.lt.s32.totalorder %s11, 3
    %p188 = pnand %p186, %p187
    %p189 = pneg %p188
    // Predicated region
    $region37: #{forward.6} parent=5 // pred_check
      _
    $region38: #{forward.6} parent=5 // pred_check_branch
      %191 = sbr.rel (%p188) target = $region40
    $region39: #{forward.6} parent=5 // pred_region
      %s192 = ssub.s32 %s11, 1
      %p193 = scmp.lt.s32.totalorder %s16, 1
      %s194 = scalar_select %p193, %s16, 1
      %s195 = smul.addr %s194, 44
      %s196 = smul.addr %s195, 4
      %s197 = scalar_lea.vmem %s0, %s196
      %p198 = pneg %p37
      %p199 = pneg %p34
      %p200 = pneg %p58
      %p201 = pneg %p55
      %p202 = pneg %p79
      %p203 = pneg %p76
      %p204 = pneg %p100
      %p205 = pneg %p97
      %p206 = pneg %p121
      %p207 = pneg %p118
      %p208 = pneg %p147
      %p209 = pneg %p144
      %p210 = scmp.lt.s32.totalorder %s16, 1
      %s211 = scalar_select %p210, %s16, 1
      %s212 = smul.addr %s211, 9
      %s213 = smul.addr %s212, 4
      %s214 = scalar_lea.vmem %s5, %s213
      %p215 = scmp.lt.s32.totalorder %s16, 1
      %s216 = scalar_select %p215, %s16, 1
      %s217 = smul.addr %s216, 44
      %s218 = smul.addr %s217, 4
      %s219 = scalar_lea.vmem %s0, %s218
      %p220 = scmp.lt.s32.totalorder %s16, 1
      %s221 = scalar_select %p220, %s16, 1
      %s222 = smul.addr %s221, 9
      %s223 = smul.addr %s222, 4
      %s224 = scalar_lea.vmem %s5, %s223
      %v226 = vld [vmem:[%s219] sm:$0xff]
      %v227 = vld [vmem:[%s219 + $0x8] sm:$0xff]
      %v228 = vld [vmem:[%s219 + $0x10] sm:$0xff]
      %v229 = vld [vmem:[%s219 + $0x18] sm:$0xff]
      %v230 = vld [vmem:[%s219 + $0x20] sm:$0xff]
      %v231 = vld [vmem:[%s219 + $0x28] sm:$0xff]
      %v232 = vld [vmem:[%s219 + $0x30] sm:$0xff]
      %v233 = vld [vmem:[%s219 + $0x38] sm:$0xff]
      %v234 = vld [vmem:[%s219 + $0x40] sm:$0xff]
      %v235 = vld [vmem:[%s219 + $0x48] sm:$0xff]
      %v236 = vld [vmem:[%s219 + $0x50] sm:$0xff]
      %v237 = vld [vmem:[%s219 + $0x58] sm:$0xff]
      %v238 = vld [vmem:[%s219 + $0x60] sm:$0xff]
      %v239 = vld [vmem:[%s219 + $0x68] sm:$0xff]
      %v240 = vld [vmem:[%s219 + $0x70] sm:$0xff]
      %v241 = vld [vmem:[%s219 + $0x78] sm:$0xff]
      %v242 = vld [vmem:[%s219 + $0x80] sm:$0xff]
      %v243 = vld [vmem:[%s219 + $0x88] sm:$0xff]
      %v244 = vld [vmem:[%s219 + $0x90] sm:$0xff]
      %v245 = vld [vmem:[%s219 + $0x98] sm:$0xff]
      %v246 = vld [vmem:[%s219 + $0xa0] sm:$0x11]
      %v247 = vld [vmem:[%s219 + $0xa8] sm:$0x11]
      %v248 = vunpack.c.l.bf16 %v226
      %v249 = vunpack.c.h.bf16 %v226
      %v250 = vunpack.c.l.bf16 %v227
      %v251 = vunpack.c.h.bf16 %v227
      %v252 = vunpack.c.l.bf16 %v228
      %v253 = vunpack.c.h.bf16 %v228
      %v254 = vunpack.c.l.bf16 %v229
      %v255 = vunpack.c.h.bf16 %v229
      %v256 = vunpack.c.l.bf16 %v230
      %v257 = vunpack.c.h.bf16 %v230
      %v258 = vunpack.c.l.bf16 %v231
      %v259 = vunpack.c.h.bf16 %v231
      %v260 = vunpack.c.l.bf16 %v232
      %v261 = vunpack.c.h.bf16 %v232
      %v262 = vunpack.c.l.bf16 %v233
      %v263 = vunpack.c.h.bf16 %v233
      %v264 = vunpack.c.l.bf16 %v234
      %v265 = vunpack.c.h.bf16 %v234
      %v266 = vunpack.c.l.bf16 %v235
      %v267 = vunpack.c.h.bf16 %v235
      %v268 = vunpack.c.l.bf16 %v236
      %v269 = vunpack.c.h.bf16 %v236
      %v270 = vunpack.c.l.bf16 %v237
      %v271 = vunpack.c.h.bf16 %v237
      %v272 = vunpack.c.l.bf16 %v238
      %v273 = vunpack.c.h.bf16 %v238
      %v274 = vunpack.c.l.bf16 %v239
      %v275 = vunpack.c.h.bf16 %v239
      %v276 = vunpack.c.l.bf16 %v240
      %v277 = vunpack.c.h.bf16 %v240
      %v278 = vunpack.c.l.bf16 %v241
      %v279 = vunpack.c.h.bf16 %v241
      %v280 = vunpack.c.l.bf16 %v242
      %v281 = vunpack.c.h.bf16 %v242
      %v282 = vunpack.c.l.bf16 %v243
      %v283 = vunpack.c.h.bf16 %v243
      %v284 = vunpack.c.l.bf16 %v244
      %v285 = vunpack.c.h.bf16 %v244
      %v286 = vunpack.c.l.bf16 %v245
      %v287 = vunpack.c.h.bf16 %v245
      %v288 = vunpack.c.l.bf16 %v246
      %v289 = vunpack.c.h.bf16 %v246
      %v290 = vunpack.c.l.bf16 %v247
      %v291 = vunpack.c.h.bf16 %v247
      %v292 = vpack.c.bf16 %v252, %v248
      %v293 = vpack.c.bf16 %v253, %v249
      %v294 = vpack.c.bf16 %v254, %v250
      %v295 = vpack.c.bf16 %v255, %v251
      %v296 = vpack.c.bf16 %v260, %v256
      %v297 = vpack.c.bf16 %v261, %v257
      %v298 = vpack.c.bf16 %v262, %v258
      %v299 = vpack.c.bf16 %v263, %v259
      %v300 = vpack.c.bf16 %v268, %v264
      %v301 = vpack.c.bf16 %v269, %v265
      %v302 = vpack.c.bf16 %v270, %v266
      %v303 = vpack.c.bf16 %v271, %v267
      %v304 = vpack.c.bf16 %v276, %v272
      %v305 = vpack.c.bf16 %v277, %v273
      %v306 = vpack.c.bf16 %v278, %v274
      %v307 = vpack.c.bf16 %v279, %v275
      %v308 = vpack.c.bf16 %v280, %v280
      %v309 = vpack.c.bf16 %v281, %v281
      %v310 = vpack.c.bf16 %v282, %v282
      %v311 = vpack.c.bf16 %v283, %v283
      %v312 = vpack.c.bf16 %v284, %v280
      %v313 = vpack.c.bf16 %v285, %v281
      %v314 = vpack.c.bf16 %v286, %v282
      %v315 = vpack.c.bf16 %v287, %v283
      %v316 = vpack.c.bf16 %v256, %v252
      %v317 = vpack.c.bf16 %v257, %v253
      %v318 = vpack.c.bf16 %v258, %v254
      %v319 = vpack.c.bf16 %v259, %v255
      %v320 = vpack.c.bf16 %v264, %v260
      %v321 = vpack.c.bf16 %v265, %v261
      %v322 = vpack.c.bf16 %v266, %v262
      %v323 = vpack.c.bf16 %v267, %v263
      %v324 = vpack.c.bf16 %v272, %v268
      %v325 = vpack.c.bf16 %v273, %v269
      %v326 = vpack.c.bf16 %v274, %v270
      %v327 = vpack.c.bf16 %v275, %v271
      %v328 = vpack.c.bf16 %v280, %v276
      %v329 = vpack.c.bf16 %v281, %v277
      %v330 = vpack.c.bf16 %v282, %v278
      %v331 = vpack.c.bf16 %v283, %v279
      %v332 = vpack.c.bf16 %v288, %v284
      %v333 = vpack.c.bf16 %v289, %v285
      %v334 = vpack.c.bf16 %v290, %v286
      %v335 = vpack.c.bf16 %v291, %v287
      %vm336 = vsmask.f32 7424
      %v338 = vshrl.u32 %v292, 16
      %v340 = vshll.u32 %v292, 16
      %v342 = vrot.slane %v340, 1
      %v343 = vor.u32 %v338, %v342
      %v345 = vshll.u32 %v296, 16
      %v347 = vrot.slane %v345, 1
      %v348 = vsel %vm336, %v343, %v347
      %v350 = vshrl.u32 %v293, 16
      %v352 = vshll.u32 %v293, 16
      %v354 = vrot.slane %v352, 1
      %v355 = vor.u32 %v350, %v354
      %v357 = vshll.u32 %v297, 16
      %v359 = vrot.slane %v357, 1
      %v360 = vsel %vm336, %v355, %v359
      %v362 = vshrl.u32 %v294, 16
      %v364 = vshll.u32 %v294, 16
      %v366 = vrot.slane %v364, 1
      %v367 = vor.u32 %v362, %v366
      %v369 = vshll.u32 %v298, 16
      %v371 = vrot.slane %v369, 1
      %v372 = vsel %vm336, %v367, %v371
      %v374 = vshrl.u32 %v295, 16
      %v376 = vshll.u32 %v295, 16
      %v378 = vrot.slane %v376, 1
      %v379 = vor.u32 %v374, %v378
      %v381 = vshll.u32 %v299, 16
      %v383 = vrot.slane %v381, 1
      %v384 = vsel %vm336, %v379, %v383
      %v385 = vshrl.u32 %v296, 16
      %v387 = vor.u32 %v385, %v347
      %v389 = vshll.u32 %v300, 16
      %v391 = vrot.slane %v389, 1
      %v392 = vsel %vm336, %v387, %v391
      %v393 = vshrl.u32 %v297, 16
      %v395 = vor.u32 %v393, %v359
      %v397 = vshll.u32 %v301, 16
      %v399 = vrot.slane %v397, 1
      %v400 = vsel %vm336, %v395, %v399
      %v401 = vshrl.u32 %v298, 16
      %v403 = vor.u32 %v401, %v371
      %v405 = vshll.u32 %v302, 16
      %v407 = vrot.slane %v405, 1
      %v408 = vsel %vm336, %v403, %v407
      %v409 = vshrl.u32 %v299, 16
      %v411 = vor.u32 %v409, %v383
      %v413 = vshll.u32 %v303, 16
      %v415 = vrot.slane %v413, 1
      %v416 = vsel %vm336, %v411, %v415
      %v417 = vshrl.u32 %v300, 16
      %v419 = vor.u32 %v417, %v391
      %v421 = vshll.u32 %v304, 16
      %v423 = vrot.slane %v421, 1
      %v424 = vsel %vm336, %v419, %v423
      %v425 = vshrl.u32 %v301, 16
      %v427 = vor.u32 %v425, %v399
      %v429 = vshll.u32 %v305, 16
      %v431 = vrot.slane %v429, 1
      %v432 = vsel %vm336, %v427, %v431
      %v433 = vshrl.u32 %v302, 16
      %v435 = vor.u32 %v433, %v407
      %v437 = vshll.u32 %v306, 16
      %v439 = vrot.slane %v437, 1
      %v440 = vsel %vm336, %v435, %v439
      %v441 = vshrl.u32 %v303, 16
      %v443 = vor.u32 %v441, %v415
      %v445 = vshll.u32 %v307, 16
      %v447 = vrot.slane %v445, 1
      %v448 = vsel %vm336, %v443, %v447
      %v449 = vshrl.u32 %v304, 16
      %v451 = vor.u32 %v449, %v423
      %v453 = vshll.u32 %v312, 16
      %v455 = vrot.slane %v453, 1
      %v456 = vsel %vm336, %v451, %v455
      %v457 = vshrl.u32 %v305, 16
      %v459 = vor.u32 %v457, %v431
      %v461 = vshll.u32 %v313, 16
      %v463 = vrot.slane %v461, 1
      %v464 = vsel %vm336, %v459, %v463
      %v465 = vshrl.u32 %v306, 16
      %v467 = vor.u32 %v465, %v439
      %v469 = vshll.u32 %v314, 16
      %v471 = vrot.slane %v469, 1
      %v472 = vsel %vm336, %v467, %v471
      %v473 = vshrl.u32 %v307, 16
      %v475 = vor.u32 %v473, %v447
      %v477 = vshll.u32 %v315, 16
      %v479 = vrot.slane %v477, 1
      %v480 = vsel %vm336, %v475, %v479
      %v481 = vshrl.u32 %v312, 16
      %v483 = vor.u32 %v481, %v455
      %v484 = vshrl.u32 %v313, 16
      %v486 = vor.u32 %v484, %v463
      %v487 = vshrl.u32 %v314, 16
      %v489 = vor.u32 %v487, %v471
      %v490 = vshrl.u32 %v315, 16
      %v492 = vor.u32 %v490, %v479
      %v514 = vshrl.u32 %v316, 16
      %v516 = vshll.u32 %v316, 16
      %v518 = vrot.slane %v516, 1
      %v519 = vor.u32 %v514, %v518
      %v521 = vshll.u32 %v320, 16
      %v523 = vrot.slane %v521, 1
      %v524 = vsel %vm336, %v519, %v523
      %v526 = vshrl.u32 %v317, 16
      %v528 = vshll.u32 %v317, 16
      %v530 = vrot.slane %v528, 1
      %v531 = vor.u32 %v526, %v530
      %v533 = vshll.u32 %v321, 16
      %v535 = vrot.slane %v533, 1
      %v536 = vsel %vm336, %v531, %v535
      %v538 = vshrl.u32 %v318, 16
      %v540 = vshll.u32 %v318, 16
      %v542 = vrot.slane %v540, 1
      %v543 = vor.u32 %v538, %v542
      %v545 = vshll.u32 %v322, 16
      %v547 = vrot.slane %v545, 1
      %v548 = vsel %vm336, %v543, %v547
      %v550 = vshrl.u32 %v319, 16
      %v552 = vshll.u32 %v319, 16
      %v554 = vrot.slane %v552, 1
      %v555 = vor.u32 %v550, %v554
      %v557 = vshll.u32 %v323, 16
      %v559 = vrot.slane %v557, 1
      %v560 = vsel %vm336, %v555, %v559
      %v561 = vshrl.u32 %v320, 16
      %v563 = vor.u32 %v561, %v523
      %v565 = vshll.u32 %v324, 16
      %v567 = vrot.slane %v565, 1
      %v568 = vsel %vm336, %v563, %v567
      %v569 = vshrl.u32 %v321, 16
      %v571 = vor.u32 %v569, %v535
      %v573 = vshll.u32 %v325, 16
      %v575 = vrot.slane %v573, 1
      %v576 = vsel %vm336, %v571, %v575
      %v577 = vshrl.u32 %v322, 16
      %v579 = vor.u32 %v577, %v547
      %v581 = vshll.u32 %v326, 16
      %v583 = vrot.slane %v581, 1
      %v584 = vsel %vm336, %v579, %v583
      %v585 = vshrl.u32 %v323, 16
      %v587 = vor.u32 %v585, %v559
      %v589 = vshll.u32 %v327, 16
      %v591 = vrot.slane %v589, 1
      %v592 = vsel %vm336, %v587, %v591
      %v593 = vshrl.u32 %v324, 16
      %v595 = vor.u32 %v593, %v567
      %v597 = vshll.u32 %v328, 16
      %v599 = vrot.slane %v597, 1
      %v600 = vsel %vm336, %v595, %v599
      %v601 = vshrl.u32 %v325, 16
      %v603 = vor.u32 %v601, %v575
      %v605 = vshll.u32 %v329, 16
      %v607 = vrot.slane %v605, 1
      %v608 = vsel %vm336, %v603, %v607
      %v609 = vshrl.u32 %v326, 16
      %v611 = vor.u32 %v609, %v583
      %v613 = vshll.u32 %v330, 16
      %v615 = vrot.slane %v613, 1
      %v616 = vsel %vm336, %v611, %v615
      %v617 = vshrl.u32 %v327, 16
      %v619 = vor.u32 %v617, %v591
      %v621 = vshll.u32 %v331, 16
      %v623 = vrot.slane %v621, 1
      %v624 = vsel %vm336, %v619, %v623
      %v625 = vshrl.u32 %v328, 16
      %v627 = vor.u32 %v625, %v599
      %v629 = vshll.u32 %v332, 16
      %v631 = vrot.slane %v629, 1
      %v632 = vsel %vm336, %v627, %v631
      %v633 = vshrl.u32 %v329, 16
      %v635 = vor.u32 %v633, %v607
      %v637 = vshll.u32 %v333, 16
      %v639 = vrot.slane %v637, 1
      %v640 = vsel %vm336, %v635, %v639
      %v641 = vshrl.u32 %v330, 16
      %v643 = vor.u32 %v641, %v615
      %v645 = vshll.u32 %v334, 16
      %v647 = vrot.slane %v645, 1
      %v648 = vsel %vm336, %v643, %v647
      %v649 = vshrl.u32 %v331, 16
      %v651 = vor.u32 %v649, %v623
      %v653 = vshll.u32 %v335, 16
      %v655 = vrot.slane %v653, 1
      %v656 = vsel %vm336, %v651, %v655
      %v657 = vshrl.u32 %v332, 16
      %v659 = vor.u32 %v657, %v631
      %v660 = vshrl.u32 %v333, 16
      %v662 = vor.u32 %v660, %v639
      %v663 = vshrl.u32 %v334, 16
      %v665 = vor.u32 %v663, %v647
      %v666 = vshrl.u32 %v335, 16
      %v668 = vor.u32 %v666, %v655
      %vm709 = vcmask 1046528
      %v710 = vrot.slane %v316, 1
      %v711 = vrot.slane %v320, 1
      %v712 = vsel %vm709, %v710, %v711
      %v713 = vrot.slane %v317, 1
      %v714 = vrot.slane %v321, 1
      %v715 = vsel %vm709, %v713, %v714
      %v716 = vrot.slane %v318, 1
      %v717 = vrot.slane %v322, 1
      %v718 = vsel %vm709, %v716, %v717
      %v719 = vrot.slane %v319, 1
      %v720 = vrot.slane %v323, 1
      %v721 = vsel %vm709, %v719, %v720
      %v722 = vrot.slane %v324, 1
      %v723 = vsel %vm709, %v711, %v722
      %v724 = vrot.slane %v325, 1
      %v725 = vsel %vm709, %v714, %v724
      %v726 = vrot.slane %v326, 1
      %v727 = vsel %vm709, %v717, %v726
      %v728 = vrot.slane %v327, 1
      %v729 = vsel %vm709, %v720, %v728
      %v730 = vrot.slane %v328, 1
      %v731 = vsel %vm709, %v722, %v730
      %v732 = vrot.slane %v329, 1
      %v733 = vsel %vm709, %v724, %v732
      %v734 = vrot.slane %v330, 1
      %v735 = vsel %vm709, %v726, %v734
      %v736 = vrot.slane %v331, 1
      %v737 = vsel %vm709, %v728, %v736
      %v738 = vrot.slane %v332, 1
      %v739 = vsel %vm709, %v730, %v738
      %v740 = vrot.slane %v333, 1
      %v741 = vsel %vm709, %v732, %v740
      %v742 = vrot.slane %v334, 1
      %v743 = vsel %vm709, %v734, %v742
      %v744 = vrot.slane %v335, 1
      %v745 = vsel %vm709, %v736, %v744
      %v766 = vld [vmem:[%s1] sm:$0xf]
      %v767 = vld [vmem:[%s1 + $0x4] sm:$0xf]
      %v768 = vld [vmem:[%s1 + $0x8] sm:$0xf]
      %v769 = vld [vmem:[%s1 + $0xc] sm:$0xf]
      %v770 = vld [vmem:[%s1 + $0x10] sm:$0xf]
      %v771 = vld [vmem:[%s1 + $0x14] sm:$0xf]
      %v772 = vld [vmem:[%s1 + $0x18] sm:$0xf]
      %v773 = vld [vmem:[%s1 + $0x1c] sm:$0xf]
      %v774 = vld [vmem:[%s1 + $0x20] sm:$0xf]
      %v775 = vld [vmem:[%s1 + $0x24] sm:$0xf]
      %v776 = vld [vmem:[%s1 + $0x28] sm:$0xf]
      %v777 = vld [vmem:[%s1 + $0x2c] sm:$0xf]
      %v778 = vld [vmem:[%s1 + $0x30] sm:$0xf]
      %v779 = vld [vmem:[%s1 + $0x34] sm:$0xf]
      %v780 = vld [vmem:[%s1 + $0x38] sm:$0xf]
      %v781 = vld [vmem:[%s1 + $0x3c] sm:$0xf]
      %v782 = vld [vmem:[%s1 + $0x40] sm:$0xf]
      %v783 = vld [vmem:[%s1 + $0x44] sm:$0xf]
      %v784 = vld [vmem:[%s1 + $0x48] sm:$0xf]
      %v785 = vld [vmem:[%s1 + $0x4c] sm:$0xf]
      %v786 = vld [vmem:[%s1 + $0x50] sm:$0xf]
      %v787 = vld [vmem:[%s1 + $0x54] sm:$0xf]
      %v788 = vld [vmem:[%s1 + $0x58] sm:$0xf]
      %v789 = vld [vmem:[%s1 + $0x5c] sm:$0xf]
      %v790 = vld [vmem:[%s1 + $0x60] sm:$0xf]
      %v791 = vld [vmem:[%s1 + $0x64] sm:$0xf]
      %v792 = vld [vmem:[%s1 + $0x68] sm:$0xf]
      %v793 = vld [vmem:[%s1 + $0x6c] sm:$0xf]
      %v794 = vld [vmem:[%s1 + $0x70] sm:$0xf]
      %v795 = vld [vmem:[%s1 + $0x74] sm:$0xf]
      %v796 = vld [vmem:[%s1 + $0x78] sm:$0xf]
      %v797 = vld [vmem:[%s1 + $0x7c] sm:$0xf]
      %v798 = vld [vmem:[%s1 + $0x80] sm:$0xf]
      %v799 = vld [vmem:[%s1 + $0x84] sm:$0xf]
      %v800 = vld [vmem:[%s1 + $0x88] sm:$0xf]
      %v801 = vld [vmem:[%s1 + $0x8c] sm:$0xf]
      %v802 = vld [vmem:[%s1 + $0x90] sm:$0xf]
      %v803 = vld [vmem:[%s1 + $0x94] sm:$0xf]
      %v804 = vld [vmem:[%s1 + $0x98] sm:$0xf]
      %v805 = vld [vmem:[%s1 + $0x9c] sm:$0xf]
      %v806 = vld [vmem:[%s1 + $0xa0] sm:$0xf]
      %v807 = vld [vmem:[%s1 + $0xa4] sm:$0xf]
      %v808 = vld [vmem:[%s1 + $0xa8] sm:$0xf]
      %v809 = vld [vmem:[%s1 + $0xac] sm:$0xf]
      %v810 = vld [vmem:[%s1 + $0xb0] sm:$0xf]
      %v811 = vld [vmem:[%s1 + $0xb4] sm:$0xf]
      %v812 = vld [vmem:[%s1 + $0xb8] sm:$0xf]
      %v813 = vld [vmem:[%s1 + $0xbc] sm:$0xf]
      %v814 = vld [vmem:[%s1 + $0xc0] sm:$0xf]
      %v815 = vld [vmem:[%s1 + $0xc4] sm:$0xf]
      %v816 = vld [vmem:[%s1 + $0xc8] sm:$0xf]
      %v817 = vld [vmem:[%s1 + $0xcc] sm:$0xf]
      %v818 = vld [vmem:[%s1 + $0xd0] sm:$0xf]
      %v819 = vld [vmem:[%s1 + $0xd4] sm:$0xf]
      %v820 = vld [vmem:[%s1 + $0xd8] sm:$0xf]
      %v821 = vld [vmem:[%s1 + $0xdc] sm:$0xf]
      %v822 = vld [vmem:[%s1 + $0xe0] sm:$0xf]
      %v823 = vld [vmem:[%s1 + $0xe4] sm:$0xf]
      %v824 = vld [vmem:[%s1 + $0xe8] sm:$0xf]
      %v825 = vld [vmem:[%s1 + $0xec] sm:$0xf]
      %v826 = vld [vmem:[%s1 + $0xf0] sm:$0xf]
      %v827 = vld [vmem:[%s1 + $0xf4] sm:$0xf]
      %v828 = vld [vmem:[%s1 + $0xf8] sm:$0xf]
      %v829 = vld [vmem:[%s1 + $0xfc] sm:$0xf]
      %v830 = vld [vmem:[%s1 + $0x100] sm:$0xf]
      %v831 = vld [vmem:[%s1 + $0x104] sm:$0xf]
      %v832 = vld [vmem:[%s1 + $0x108] sm:$0xf]
      %v833 = vld [vmem:[%s1 + $0x10c] sm:$0xf]
      %v834 = vld [vmem:[%s1 + $0x110] sm:$0xf]
      %v835 = vld [vmem:[%s1 + $0x114] sm:$0xf]
      %v836 = vld [vmem:[%s1 + $0x118] sm:$0xf]
      %v837 = vld [vmem:[%s1 + $0x11c] sm:$0xf]
      %v838 = vld [vmem:[%s1 + $0x120] sm:$0xf]
      %v839 = vld [vmem:[%s1 + $0x124] sm:$0xf]
      %v840 = vld [vmem:[%s1 + $0x128] sm:$0xf]
      %v841 = vld [vmem:[%s1 + $0x12c] sm:$0xf]
      %v842 = vld [vmem:[%s1 + $0x130] sm:$0xf]
      %v843 = vld [vmem:[%s1 + $0x134] sm:$0xf]
      %v844 = vld [vmem:[%s1 + $0x138] sm:$0xf]
      %v845 = vld [vmem:[%s1 + $0x13c] sm:$0xf]
      %v846 = vld [vmem:[%s1 + $0x140] sm:$0xf]
      %v847 = vld [vmem:[%s1 + $0x144] sm:$0xf]
      %v848 = vld [vmem:[%s1 + $0x148] sm:$0xf]
      %v849 = vld [vmem:[%s1 + $0x14c] sm:$0xf]
      %v850 = vld [vmem:[%s1 + $0x150] sm:$0xf]
      %v851 = vld [vmem:[%s1 + $0x154] sm:$0xf]
      %v852 = vld [vmem:[%s1 + $0x158] sm:$0xf]
      %v853 = vld [vmem:[%s1 + $0x15c] sm:$0xf]
      %v854 = vld [vmem:[%s1 + $0x160] sm:$0xf]
      %v855 = vld [vmem:[%s1 + $0x164] sm:$0xf]
      %v856 = vld [vmem:[%s1 + $0x168] sm:$0xf]
      %v857 = vld [vmem:[%s1 + $0x16c] sm:$0xf]
      %v858 = vld [vmem:[%s1 + $0x170] sm:$0xf]
      %v859 = vld [vmem:[%s1 + $0x174] sm:$0xf]
      %v860 = vld [vmem:[%s1 + $0x178] sm:$0xf]
      %v861 = vld [vmem:[%s1 + $0x17c] sm:$0xf]
      %v862 = vld [vmem:[%s1 + $0x180] sm:$0xf]
      %v863 = vld [vmem:[%s1 + $0x184] sm:$0xf]
      %v864 = vld [vmem:[%s1 + $0x188] sm:$0xf]
      %v865 = vld [vmem:[%s1 + $0x18c] sm:$0xf]
      %v866 = vld [vmem:[%s1 + $0x190] sm:$0xf]
      %v867 = vld [vmem:[%s1 + $0x194] sm:$0xf]
      %v868 = vld [vmem:[%s1 + $0x198] sm:$0xf]
      %v869 = vld [vmem:[%s1 + $0x19c] sm:$0xf]
      %v870 = vld [vmem:[%s1 + $0x1a0] sm:$0xf]
      %v871 = vld [vmem:[%s1 + $0x1a4] sm:$0xf]
      %v872 = vld [vmem:[%s1 + $0x1a8] sm:$0xf]
      %v873 = vld [vmem:[%s1 + $0x1ac] sm:$0xf]
      %v874 = vld [vmem:[%s1 + $0x1b0] sm:$0xf]
      %v875 = vld [vmem:[%s1 + $0x1b4] sm:$0xf]
      %v876 = vld [vmem:[%s1 + $0x1b8] sm:$0xf]
      %v877 = vld [vmem:[%s1 + $0x1bc] sm:$0xf]
      %v878 = vld [vmem:[%s1 + $0x1c0] sm:$0xf]
      %v879 = vld [vmem:[%s1 + $0x1c4] sm:$0xf]
      %v880 = vld [vmem:[%s1 + $0x1c8] sm:$0xf]
      %v881 = vld [vmem:[%s1 + $0x1cc] sm:$0xf]
      %v882 = vld [vmem:[%s1 + $0x1d0] sm:$0xf]
      %v883 = vld [vmem:[%s1 + $0x1d4] sm:$0xf]
      %v884 = vld [vmem:[%s1 + $0x1d8] sm:$0xf]
      %v885 = vld [vmem:[%s1 + $0x1dc] sm:$0xf]
      %v886 = vld [vmem:[%s1 + $0x1e0] sm:$0xf]
      %v887 = vld [vmem:[%s1 + $0x1e4] sm:$0xf]
      %v888 = vld [vmem:[%s1 + $0x1e8] sm:$0xf]
      %v889 = vld [vmem:[%s1 + $0x1ec] sm:$0xf]
      %v890 = vld [vmem:[%s1 + $0x1f0] sm:$0xf]
      %v891 = vld [vmem:[%s1 + $0x1f4] sm:$0xf]
      %v892 = vld [vmem:[%s1 + $0x1f8] sm:$0xf]
      %v893 = vld [vmem:[%s1 + $0x1fc] sm:$0xf]
      %v894 = vld [vmem:[%s1 + $0x200] sm:$0xf]
      %v895 = vld [vmem:[%s1 + $0x204] sm:$0xf]
      %v896 = vld [vmem:[%s1 + $0x208] sm:$0xf]
      %v897 = vld [vmem:[%s1 + $0x20c] sm:$0xf]
      %v898 = vld [vmem:[%s1 + $0x210] sm:$0xf]
      %v899 = vld [vmem:[%s1 + $0x214] sm:$0xf]
      %v900 = vld [vmem:[%s1 + $0x218] sm:$0xf]
      %v901 = vld [vmem:[%s1 + $0x21c] sm:$0xf]
      %v902 = vld [vmem:[%s1 + $0x220] sm:$0xf]
      %v903 = vld [vmem:[%s1 + $0x224] sm:$0xf]
      %v904 = vld [vmem:[%s1 + $0x228] sm:$0xf]
      %v905 = vld [vmem:[%s1 + $0x22c] sm:$0xf]
      %v906 = vld [vmem:[%s1 + $0x230] sm:$0xf]
      %v907 = vld [vmem:[%s1 + $0x234] sm:$0xf]
      %v908 = vld [vmem:[%s1 + $0x238] sm:$0xf]
      %v909 = vld [vmem:[%s1 + $0x23c] sm:$0xf]
      %v910 = vld [vmem:[%s1 + $0x240] sm:$0xf]
      %v911 = vld [vmem:[%s1 + $0x244] sm:$0xf]
      %v912 = vld [vmem:[%s1 + $0x248] sm:$0xf]
      %v913 = vld [vmem:[%s1 + $0x24c] sm:$0xf]
      %v914 = vld [vmem:[%s1 + $0x250] sm:$0xf]
      %v915 = vld [vmem:[%s1 + $0x254] sm:$0xf]
      %v916 = vld [vmem:[%s1 + $0x258] sm:$0xf]
      %v917 = vld [vmem:[%s1 + $0x25c] sm:$0xf]
      %v918 = vld [vmem:[%s1 + $0x260] sm:$0xf]
      %v919 = vld [vmem:[%s1 + $0x264] sm:$0xf]
      %v920 = vld [vmem:[%s1 + $0x268] sm:$0xf]
      %v921 = vld [vmem:[%s1 + $0x26c] sm:$0xf]
      %v922 = vld [vmem:[%s1 + $0x270] sm:$0xf]
      %v923 = vld [vmem:[%s1 + $0x274] sm:$0xf]
      %v924 = vld [vmem:[%s1 + $0x278] sm:$0xf]
      %v925 = vld [vmem:[%s1 + $0x27c] sm:$0xf]
      %v926 = vld [vmem:[%s1 + $0x280] sm:$0xf]
      %v927 = vld [vmem:[%s1 + $0x284] sm:$0xf]
      %v928 = vld [vmem:[%s1 + $0x288] sm:$0xf]
      %v929 = vld [vmem:[%s1 + $0x28c] sm:$0xf]
      %v930 = vld [vmem:[%s1 + $0x290] sm:$0xf]
      %v931 = vld [vmem:[%s1 + $0x294] sm:$0xf]
      %v932 = vld [vmem:[%s1 + $0x298] sm:$0xf]
      %v933 = vld [vmem:[%s1 + $0x29c] sm:$0xf]
      %v934 = vld [vmem:[%s1 + $0x2a0] sm:$0xf]
      %v935 = vld [vmem:[%s1 + $0x2a4] sm:$0xf]
      %v936 = vld [vmem:[%s1 + $0x2a8] sm:$0xf]
      %v937 = vld [vmem:[%s1 + $0x2ac] sm:$0xf]
      %v938 = vld [vmem:[%s1 + $0x2b0] sm:$0xf]
      %v939 = vld [vmem:[%s1 + $0x2b4] sm:$0xf]
      %v940 = vld [vmem:[%s1 + $0x2b8] sm:$0xf]
      %v941 = vld [vmem:[%s1 + $0x2bc] sm:$0xf]
      %v942 = vld [vmem:[%s1 + $0x2c0] sm:$0xf]
      %v943 = vld [vmem:[%s1 + $0x2c4] sm:$0xf]
      %v944 = vld [vmem:[%s1 + $0x2c8] sm:$0xf]
      %v945 = vld [vmem:[%s1 + $0x2cc] sm:$0xf]
      %v946 = vld [vmem:[%s1 + $0x2d0] sm:$0xf]
      %v947 = vld [vmem:[%s1 + $0x2d4] sm:$0xf]
      %v948 = vld [vmem:[%s1 + $0x2d8] sm:$0xf]
      %v949 = vld [vmem:[%s1 + $0x2dc] sm:$0xf]
      %v950 = vld [vmem:[%s1 + $0x2e0] sm:$0xf]
      %v951 = vld [vmem:[%s1 + $0x2e4] sm:$0xf]
      %v952 = vld [vmem:[%s1 + $0x2e8] sm:$0xf]
      %v953 = vld [vmem:[%s1 + $0x2ec] sm:$0xf]
      %v954 = vld [vmem:[%s1 + $0x2f0] sm:$0xf]
      %v955 = vld [vmem:[%s1 + $0x2f4] sm:$0xf]
      %v956 = vld [vmem:[%s1 + $0x2f8] sm:$0xf]
      %v957 = vld [vmem:[%s1 + $0x2fc] sm:$0xf]
      %v958 = vld [vmem:[%s1 + $0x300] sm:$0xf]
      %v959 = vld [vmem:[%s1 + $0x304] sm:$0xf]
      %v960 = vld [vmem:[%s1 + $0x308] sm:$0xf]
      %v961 = vld [vmem:[%s1 + $0x30c] sm:$0xf]
      %v962 = vld [vmem:[%s1 + $0x310] sm:$0xf]
      %v963 = vld [vmem:[%s1 + $0x314] sm:$0xf]
      %v964 = vld [vmem:[%s1 + $0x318] sm:$0xf]
      %v965 = vld [vmem:[%s1 + $0x31c] sm:$0xf]
      %v966 = vld [vmem:[%s1 + $0x320] sm:$0xf]
      %v967 = vld [vmem:[%s1 + $0x324] sm:$0xf]
      %v968 = vld [vmem:[%s1 + $0x328] sm:$0xf]
      %v969 = vld [vmem:[%s1 + $0x32c] sm:$0xf]
      %v970 = vld [vmem:[%s1 + $0x330] sm:$0xf]
      %v971 = vld [vmem:[%s1 + $0x334] sm:$0xf]
      %v972 = vld [vmem:[%s1 + $0x338] sm:$0xf]
      %v973 = vld [vmem:[%s1 + $0x33c] sm:$0xf]
      %v974 = vld [vmem:[%s1 + $0x340] sm:$0xf]
      %v975 = vld [vmem:[%s1 + $0x344] sm:$0xf]
      %v976 = vld [vmem:[%s1 + $0x348] sm:$0xf]
      %v977 = vld [vmem:[%s1 + $0x34c] sm:$0xf]
      %v978 = vld [vmem:[%s1 + $0x350] sm:$0xf]
      %v979 = vld [vmem:[%s1 + $0x354] sm:$0xf]
      %v980 = vld [vmem:[%s1 + $0x358] sm:$0xf]
      %v981 = vld [vmem:[%s1 + $0x35c] sm:$0xf]
      %v982 = vld [vmem:[%s1 + $0x360] sm:$0xf]
      %v983 = vld [vmem:[%s1 + $0x364] sm:$0xf]
      %v984 = vld [vmem:[%s1 + $0x368] sm:$0xf]
      %v985 = vld [vmem:[%s1 + $0x36c] sm:$0xf]
      %v986 = vld [vmem:[%s1 + $0x370] sm:$0xf]
      %v987 = vld [vmem:[%s1 + $0x374] sm:$0xf]
      %v988 = vld [vmem:[%s1 + $0x378] sm:$0xf]
      %v989 = vld [vmem:[%s1 + $0x37c] sm:$0xf]
      %v990 = vld [vmem:[%s1 + $0x380] sm:$0xf]
      %v991 = vld [vmem:[%s1 + $0x384] sm:$0xf]
      %v992 = vld [vmem:[%s1 + $0x388] sm:$0xf]
      %v993 = vld [vmem:[%s1 + $0x38c] sm:$0xf]
      %v994 = vld [vmem:[%s1 + $0x390] sm:$0xf]
      %v995 = vld [vmem:[%s1 + $0x394] sm:$0xf]
      %v996 = vld [vmem:[%s1 + $0x398] sm:$0xf]
      %v997 = vld [vmem:[%s1 + $0x39c] sm:$0xf]
      %v998 = vld [vmem:[%s1 + $0x3a0] sm:$0xf]
      %v999 = vld [vmem:[%s1 + $0x3a4] sm:$0xf]
      %v1000 = vld [vmem:[%s1 + $0x3a8] sm:$0xf]
      %v1001 = vld [vmem:[%s1 + $0x3ac] sm:$0xf]
      %v1002 = vld [vmem:[%s1 + $0x3b0] sm:$0xf]
      %v1003 = vld [vmem:[%s1 + $0x3b4] sm:$0xf]
      %v1004 = vld [vmem:[%s1 + $0x3b8] sm:$0xf]
      %v1005 = vld [vmem:[%s1 + $0x3bc] sm:$0xf]
      %v1006 = vld [vmem:[%s1 + $0x3c0] sm:$0xf]
      %v1007 = vld [vmem:[%s1 + $0x3c4] sm:$0xf]
      %v1008 = vld [vmem:[%s1 + $0x3c8] sm:$0xf]
      %v1009 = vld [vmem:[%s1 + $0x3cc] sm:$0xf]
      %v1010 = vld [vmem:[%s1 + $0x3d0] sm:$0xf]
      %v1011 = vld [vmem:[%s1 + $0x3d4] sm:$0xf]
      %v1012 = vld [vmem:[%s1 + $0x3d8] sm:$0xf]
      %v1013 = vld [vmem:[%s1 + $0x3dc] sm:$0xf]
      %v1014 = vld [vmem:[%s1 + $0x3e0] sm:$0xf]
      %v1015 = vld [vmem:[%s1 + $0x3e4] sm:$0xf]
      %v1016 = vld [vmem:[%s1 + $0x3e8] sm:$0xf]
      %v1017 = vld [vmem:[%s1 + $0x3ec] sm:$0xf]
      %v1018 = vld [vmem:[%s1 + $0x3f0] sm:$0xf]
      %v1019 = vld [vmem:[%s1 + $0x3f4] sm:$0xf]
      %v1020 = vld [vmem:[%s1 + $0x3f8] sm:$0xf]
      %v1021 = vld [vmem:[%s1 + $0x3fc] sm:$0xf]
      %v1022 = vld [vmem:[%s2] sm:$0x1]
      %v1024 = vlaneseq
      %v1025 = vshrl.u32 %v1024, 7
      %v1026 = vsub.s32 0, %v1025
      %v1027 = vrot.slane %v1022, %v1026
      %v1285 = vunpack.c.l.b16 %v766
      %v1286 = vunpack.c.l.b16 %v767
      %v1287 = vunpack.c.l.b16 %v768
      %v1288 = vunpack.c.l.b16 %v769
      %v1289 = vunpack.c.l.b16 %v770
      %v1290 = vunpack.c.l.b16 %v771
      %v1291 = vunpack.c.l.b16 %v772
      %v1292 = vunpack.c.l.b16 %v773
      %v1293 = vunpack.c.l.b16 %v774
      %v1294 = vunpack.c.l.b16 %v775
      %v1295 = vunpack.c.l.b16 %v776
      %v1296 = vunpack.c.l.b16 %v777
      %v1297 = vunpack.c.l.b16 %v778
      %v1298 = vunpack.c.l.b16 %v779
      %v1299 = vunpack.c.l.b16 %v780
      %v1300 = vunpack.c.l.b16 %v781
      %v1301 = vunpack.c.l.b16 %v782
      %v1302 = vunpack.c.l.b16 %v783
      %v1303 = vunpack.c.l.b16 %v784
      %v1304 = vunpack.c.l.b16 %v785
      %v1305 = vunpack.c.l.b16 %v786
      %v1306 = vunpack.c.l.b16 %v787
      %v1307 = vunpack.c.l.b16 %v788
      %v1308 = vunpack.c.l.b16 %v789
      %v1309 = vunpack.c.l.b16 %v790
      %v1310 = vunpack.c.l.b16 %v791
      %v1311 = vunpack.c.l.b16 %v792
      %v1312 = vunpack.c.l.b16 %v793
      %v1313 = vunpack.c.l.b16 %v794
      %v1314 = vunpack.c.l.b16 %v795
      %v1315 = vunpack.c.l.b16 %v796
      %v1316 = vunpack.c.l.b16 %v797
      %v1317 = vunpack.c.l.b16 %v798
      %v1318 = vunpack.c.l.b16 %v799
      %v1319 = vunpack.c.l.b16 %v800
      %v1320 = vunpack.c.l.b16 %v801
      %v1321 = vunpack.c.l.b16 %v802
      %v1322 = vunpack.c.l.b16 %v803
      %v1323 = vunpack.c.l.b16 %v804
      %v1324 = vunpack.c.l.b16 %v805
      %v1325 = vunpack.c.l.b16 %v806
      %v1326 = vunpack.c.l.b16 %v807
      %v1327 = vunpack.c.l.b16 %v808
      %v1328 = vunpack.c.l.b16 %v809
      %v1329 = vunpack.c.l.b16 %v810
      %v1330 = vunpack.c.l.b16 %v811
      %v1331 = vunpack.c.l.b16 %v812
      %v1332 = vunpack.c.l.b16 %v813
      %v1333 = vunpack.c.l.b16 %v814
      %v1334 = vunpack.c.l.b16 %v815
      %v1335 = vunpack.c.l.b16 %v816
      %v1336 = vunpack.c.l.b16 %v817
      %v1337 = vunpack.c.l.b16 %v818
      %v1338 = vunpack.c.l.b16 %v819
      %v1339 = vunpack.c.l.b16 %v820
      %v1340 = vunpack.c.l.b16 %v821
      %v1341 = vunpack.c.l.b16 %v822
      %v1342 = vunpack.c.l.b16 %v823
      %v1343 = vunpack.c.l.b16 %v824
      %v1344 = vunpack.c.l.b16 %v825
      %v1345 = vunpack.c.l.b16 %v826
      %v1346 = vunpack.c.l.b16 %v827
      %v1347 = vunpack.c.l.b16 %v828
      %v1348 = vunpack.c.l.b16 %v829
      %v1349 = vunpack.c.l.b16 %v830
      %v1350 = vunpack.c.l.b16 %v831
      %v1351 = vunpack.c.l.b16 %v832
      %v1352 = vunpack.c.l.b16 %v833
      %v1353 = vunpack.c.l.b16 %v834
      %v1354 = vunpack.c.l.b16 %v835
      %v1355 = vunpack.c.l.b16 %v836
      %v1356 = vunpack.c.l.b16 %v837
      %v1357 = vunpack.c.l.b16 %v838
      %v1358 = vunpack.c.l.b16 %v839
      %v1359 = vunpack.c.l.b16 %v840
      %v1360 = vunpack.c.l.b16 %v841
      %v1361 = vunpack.c.l.b16 %v842
      %v1362 = vunpack.c.l.b16 %v843
      %v1363 = vunpack.c.l.b16 %v844
      %v1364 = vunpack.c.l.b16 %v845
      %v1365 = vunpack.c.l.b16 %v846
      %v1366 = vunpack.c.l.b16 %v847
      %v1367 = vunpack.c.l.b16 %v848
      %v1368 = vunpack.c.l.b16 %v849
      %v1369 = vunpack.c.l.b16 %v850
      %v1370 = vunpack.c.l.b16 %v851
      %v1371 = vunpack.c.l.b16 %v852
      %v1372 = vunpack.c.l.b16 %v853
      %v1373 = vunpack.c.l.b16 %v854
      %v1374 = vunpack.c.l.b16 %v855
      %v1375 = vunpack.c.l.b16 %v856
      %v1376 = vunpack.c.l.b16 %v857
      %v1377 = vunpack.c.l.b16 %v858
      %v1378 = vunpack.c.l.b16 %v859
      %v1379 = vunpack.c.l.b16 %v860
      %v1380 = vunpack.c.l.b16 %v861
      %v1381 = vunpack.c.l.b16 %v862
      %v1382 = vunpack.c.l.b16 %v863
      %v1383 = vunpack.c.l.b16 %v864
      %v1384 = vunpack.c.l.b16 %v865
      %v1385 = vunpack.c.l.b16 %v866
      %v1386 = vunpack.c.l.b16 %v867
      %v1387 = vunpack.c.l.b16 %v868
      %v1388 = vunpack.c.l.b16 %v869
      %v1389 = vunpack.c.l.b16 %v870
      %v1390 = vunpack.c.l.b16 %v871
      %v1391 = vunpack.c.l.b16 %v872
      %v1392 = vunpack.c.l.b16 %v873
      %v1393 = vunpack.c.l.b16 %v874
      %v1394 = vunpack.c.l.b16 %v875
      %v1395 = vunpack.c.l.b16 %v876
      %v1396 = vunpack.c.l.b16 %v877
      %v1397 = vunpack.c.l.b16 %v878
      %v1398 = vunpack.c.l.b16 %v879
      %v1399 = vunpack.c.l.b16 %v880
      %v1400 = vunpack.c.l.b16 %v881
      %v1401 = vunpack.c.l.b16 %v882
      %v1402 = vunpack.c.l.b16 %v883
      %v1403 = vunpack.c.l.b16 %v884
      %v1404 = vunpack.c.l.b16 %v885
      %v1405 = vunpack.c.l.b16 %v886
      %v1406 = vunpack.c.l.b16 %v887
      %v1407 = vunpack.c.l.b16 %v888
      %v1408 = vunpack.c.l.b16 %v889
      %v1409 = vunpack.c.l.b16 %v890
      %v1410 = vunpack.c.l.b16 %v891
      %v1411 = vunpack.c.l.b16 %v892
      %v1412 = vunpack.c.l.b16 %v893
      %v1413 = vunpack.c.l.b16 %v894
      %v1414 = vunpack.c.l.b16 %v895
      %v1415 = vunpack.c.l.b16 %v896
      %v1416 = vunpack.c.l.b16 %v897
      %v1417 = vunpack.c.l.b16 %v898
      %v1418 = vunpack.c.l.b16 %v899
      %v1419 = vunpack.c.l.b16 %v900
      %v1420 = vunpack.c.l.b16 %v901
      %v1421 = vunpack.c.l.b16 %v902
      %v1422 = vunpack.c.l.b16 %v903
      %v1423 = vunpack.c.l.b16 %v904
      %v1424 = vunpack.c.l.b16 %v905
      %v1425 = vunpack.c.l.b16 %v906
      %v1426 = vunpack.c.l.b16 %v907
      %v1427 = vunpack.c.l.b16 %v908
      %v1428 = vunpack.c.l.b16 %v909
      %v1429 = vunpack.c.l.b16 %v910
      %v1430 = vunpack.c.l.b16 %v911
      %v1431 = vunpack.c.l.b16 %v912
      %v1432 = vunpack.c.l.b16 %v913
      %v1433 = vunpack.c.l.b16 %v914
      %v1434 = vunpack.c.l.b16 %v915
      %v1435 = vunpack.c.l.b16 %v916
      %v1436 = vunpack.c.l.b16 %v917
      %v1437 = vunpack.c.l.b16 %v918
      %v1438 = vunpack.c.l.b16 %v919
      %v1439 = vunpack.c.l.b16 %v920
      %v1440 = vunpack.c.l.b16 %v921
      %v1441 = vunpack.c.l.b16 %v922
      %v1442 = vunpack.c.l.b16 %v923
      %v1443 = vunpack.c.l.b16 %v924
      %v1444 = vunpack.c.l.b16 %v925
      %v1445 = vunpack.c.l.b16 %v926
      %v1446 = vunpack.c.l.b16 %v927
      %v1447 = vunpack.c.l.b16 %v928
      %v1448 = vunpack.c.l.b16 %v929
      %v1449 = vunpack.c.l.b16 %v930
      %v1450 = vunpack.c.l.b16 %v931
      %v1451 = vunpack.c.l.b16 %v932
      %v1452 = vunpack.c.l.b16 %v933
      %v1453 = vunpack.c.l.b16 %v934
      %v1454 = vunpack.c.l.b16 %v935
      %v1455 = vunpack.c.l.b16 %v936
      %v1456 = vunpack.c.l.b16 %v937
      %v1457 = vunpack.c.l.b16 %v938
      %v1458 = vunpack.c.l.b16 %v939
      %v1459 = vunpack.c.l.b16 %v940
      %v1460 = vunpack.c.l.b16 %v941
      %v1461 = vunpack.c.l.b16 %v942
      %v1462 = vunpack.c.l.b16 %v943
      %v1463 = vunpack.c.l.b16 %v944
      %v1464 = vunpack.c.l.b16 %v945
      %v1465 = vunpack.c.l.b16 %v946
      %v1466 = vunpack.c.l.b16 %v947
      %v1467 = vunpack.c.l.b16 %v948
      %v1468 = vunpack.c.l.b16 %v949
      %v1469 = vunpack.c.l.b16 %v950
      %v1470 = vunpack.c.l.b16 %v951
      %v1471 = vunpack.c.l.b16 %v952
      %v1472 = vunpack.c.l.b16 %v953
      %v1473 = vunpack.c.l.b16 %v954
      %v1474 = vunpack.c.l.b16 %v955
      %v1475 = vunpack.c.l.b16 %v956
      %v1476 = vunpack.c.l.b16 %v957
      %v1477 = vunpack.c.l.b16 %v958
      %v1478 = vunpack.c.l.b16 %v959
      %v1479 = vunpack.c.l.b16 %v960
      %v1480 = vunpack.c.l.b16 %v961
      %v1481 = vunpack.c.l.b16 %v962
      %v1482 = vunpack.c.l.b16 %v963
      %v1483 = vunpack.c.l.b16 %v964
      %v1484 = vunpack.c.l.b16 %v965
      %v1485 = vunpack.c.l.b16 %v966
      %v1486 = vunpack.c.l.b16 %v967
      %v1487 = vunpack.c.l.b16 %v968
      %v1488 = vunpack.c.l.b16 %v969
      %v1489 = vunpack.c.l.b16 %v970
      %v1490 = vunpack.c.l.b16 %v971
      %v1491 = vunpack.c.l.b16 %v972
      %v1492 = vunpack.c.l.b16 %v973
      %v1493 = vunpack.c.l.b16 %v974
      %v1494 = vunpack.c.l.b16 %v975
      %v1495 = vunpack.c.l.b16 %v976
      %v1496 = vunpack.c.l.b16 %v977
      %v1497 = vunpack.c.l.b16 %v978
      %v1498 = vunpack.c.l.b16 %v979
      %v1499 = vunpack.c.l.b16 %v980
      %v1500 = vunpack.c.l.b16 %v981
      %v1501 = vunpack.c.l.b16 %v982
      %v1502 = vunpack.c.l.b16 %v983
      %v1503 = vunpack.c.l.b16 %v984
      %v1504 = vunpack.c.l.b16 %v985
      %v1505 = vunpack.c.l.b16 %v986
      %v1506 = vunpack.c.l.b16 %v987
      %v1507 = vunpack.c.l.b16 %v988
      %v1508 = vunpack.c.l.b16 %v989
      %v1509 = vunpack.c.l.b16 %v990
      %v1510 = vunpack.c.l.b16 %v991
      %v1511 = vunpack.c.l.b16 %v992
      %v1512 = vunpack.c.l.b16 %v993
      %v1513 = vunpack.c.l.b16 %v994
      %v1514 = vunpack.c.l.b16 %v995
      %v1515 = vunpack.c.l.b16 %v996
      %v1516 = vunpack.c.l.b16 %v997
      %v1517 = vunpack.c.l.b16 %v998
      %v1518 = vunpack.c.l.b16 %v999
      %v1519 = vunpack.c.l.b16 %v1000
      %v1520 = vunpack.c.l.b16 %v1001
      %v1521 = vunpack.c.l.b16 %v1002
      %v1522 = vunpack.c.l.b16 %v1003
      %v1523 = vunpack.c.l.b16 %v1004
      %v1524 = vunpack.c.l.b16 %v1005
      %v1525 = vunpack.c.l.b16 %v1006
      %v1526 = vunpack.c.l.b16 %v1007
      %v1527 = vunpack.c.l.b16 %v1008
      %v1528 = vunpack.c.l.b16 %v1009
      %v1529 = vunpack.c.l.b16 %v1010
      %v1530 = vunpack.c.l.b16 %v1011
      %v1531 = vunpack.c.l.b16 %v1012
      %v1532 = vunpack.c.l.b16 %v1013
      %v1533 = vunpack.c.l.b16 %v1014
      %v1534 = vunpack.c.l.b16 %v1015
      %v1535 = vunpack.c.l.b16 %v1016
      %v1536 = vunpack.c.l.b16 %v1017
      %v1537 = vunpack.c.l.b16 %v1018
      %v1538 = vunpack.c.l.b16 %v1019
      %v1539 = vunpack.c.l.b16 %v1020
      %v1540 = vunpack.c.l.b16 %v1021
      %v1541 = vpack.c.b16 %v1286, %v1285
      %v1542 = vpack.c.b16 %v1288, %v1287
      %v1543 = vpack.c.b16 %v1290, %v1289
      %v1544 = vpack.c.b16 %v1292, %v1291
      %v1545 = vpack.c.b16 %v1294, %v1293
      %v1546 = vpack.c.b16 %v1296, %v1295
      %v1547 = vpack.c.b16 %v1298, %v1297
      %v1548 = vpack.c.b16 %v1300, %v1299
      %v1549 = vpack.c.b16 %v1302, %v1301
      %v1550 = vpack.c.b16 %v1304, %v1303
      %v1551 = vpack.c.b16 %v1306, %v1305
      %v1552 = vpack.c.b16 %v1308, %v1307
      %v1553 = vpack.c.b16 %v1310, %v1309
      %v1554 = vpack.c.b16 %v1312, %v1311
      %v1555 = vpack.c.b16 %v1314, %v1313
      %v1556 = vpack.c.b16 %v1316, %v1315
      %v1557 = vpack.c.b16 %v1318, %v1317
      %v1558 = vpack.c.b16 %v1320, %v1319
      %v1559 = vpack.c.b16 %v1322, %v1321
      %v1560 = vpack.c.b16 %v1324, %v1323
      %v1561 = vpack.c.b16 %v1326, %v1325
      %v1562 = vpack.c.b16 %v1328, %v1327
      %v1563 = vpack.c.b16 %v1330, %v1329
      %v1564 = vpack.c.b16 %v1332, %v1331
      %v1565 = vpack.c.b16 %v1334, %v1333
      %v1566 = vpack.c.b16 %v1336, %v1335
      %v1567 = vpack.c.b16 %v1338, %v1337
      %v1568 = vpack.c.b16 %v1340, %v1339
      %v1569 = vpack.c.b16 %v1342, %v1341
      %v1570 = vpack.c.b16 %v1344, %v1343
      %v1571 = vpack.c.b16 %v1346, %v1345
      %v1572 = vpack.c.b16 %v1348, %v1347
      %v1573 = vpack.c.b16 %v1350, %v1349
      %v1574 = vpack.c.b16 %v1352, %v1351
      %v1575 = vpack.c.b16 %v1354, %v1353
      %v1576 = vpack.c.b16 %v1356, %v1355
      %v1577 = vpack.c.b16 %v1358, %v1357
      %v1578 = vpack.c.b16 %v1360, %v1359
      %v1579 = vpack.c.b16 %v1362, %v1361
      %v1580 = vpack.c.b16 %v1364, %v1363
      %v1581 = vpack.c.b16 %v1366, %v1365
      %v1582 = vpack.c.b16 %v1368, %v1367
      %v1583 = vpack.c.b16 %v1370, %v1369
      %v1584 = vpack.c.b16 %v1372, %v1371
      %v1585 = vpack.c.b16 %v1374, %v1373
      %v1586 = vpack.c.b16 %v1376, %v1375
      %v1587 = vpack.c.b16 %v1378, %v1377
      %v1588 = vpack.c.b16 %v1380, %v1379
      %v1589 = vpack.c.b16 %v1382, %v1381
      %v1590 = vpack.c.b16 %v1384, %v1383
      %v1591 = vpack.c.b16 %v1386, %v1385
      %v1592 = vpack.c.b16 %v1388, %v1387
      %v1593 = vpack.c.b16 %v1390, %v1389
      %v1594 = vpack.c.b16 %v1392, %v1391
      %v1595 = vpack.c.b16 %v1394, %v1393
      %v1596 = vpack.c.b16 %v1396, %v1395
      %v1597 = vpack.c.b16 %v1398, %v1397
      %v1598 = vpack.c.b16 %v1400, %v1399
      %v1599 = vpack.c.b16 %v1402, %v1401
      %v1600 = vpack.c.b16 %v1404, %v1403
      %v1601 = vpack.c.b16 %v1406, %v1405
      %v1602 = vpack.c.b16 %v1408, %v1407
      %v1603 = vpack.c.b16 %v1410, %v1409
      %v1604 = vpack.c.b16 %v1412, %v1411
      %v1605 = vpack.c.b16 %v1414, %v1413
      %v1606 = vpack.c.b16 %v1416, %v1415
      %v1607 = vpack.c.b16 %v1418, %v1417
      %v1608 = vpack.c.b16 %v1420, %v1419
      %v1609 = vpack.c.b16 %v1422, %v1421
      %v1610 = vpack.c.b16 %v1424, %v1423
      %v1611 = vpack.c.b16 %v1426, %v1425
      %v1612 = vpack.c.b16 %v1428, %v1427
      %v1613 = vpack.c.b16 %v1430, %v1429
      %v1614 = vpack.c.b16 %v1432, %v1431
      %v1615 = vpack.c.b16 %v1434, %v1433
      %v1616 = vpack.c.b16 %v1436, %v1435
      %v1617 = vpack.c.b16 %v1438, %v1437
      %v1618 = vpack.c.b16 %v1440, %v1439
      %v1619 = vpack.c.b16 %v1442, %v1441
      %v1620 = vpack.c.b16 %v1444, %v1443
      %v1621 = vpack.c.b16 %v1446, %v1445
      %v1622 = vpack.c.b16 %v1448, %v1447
      %v1623 = vpack.c.b16 %v1450, %v1449
      %v1624 = vpack.c.b16 %v1452, %v1451
      %v1625 = vpack.c.b16 %v1454, %v1453
      %v1626 = vpack.c.b16 %v1456, %v1455
      %v1627 = vpack.c.b16 %v1458, %v1457
      %v1628 = vpack.c.b16 %v1460, %v1459
      %v1629 = vpack.c.b16 %v1462, %v1461
      %v1630 = vpack.c.b16 %v1464, %v1463
      %v1631 = vpack.c.b16 %v1466, %v1465
      %v1632 = vpack.c.b16 %v1468, %v1467
      %v1633 = vpack.c.b16 %v1470, %v1469
      %v1634 = vpack.c.b16 %v1472, %v1471
      %v1635 = vpack.c.b16 %v1474, %v1473
      %v1636 = vpack.c.b16 %v1476, %v1475
      %v1637 = vpack.c.b16 %v1478, %v1477
      %v1638 = vpack.c.b16 %v1480, %v1479
      %v1639 = vpack.c.b16 %v1482, %v1481
      %v1640 = vpack.c.b16 %v1484, %v1483
      %v1641 = vpack.c.b16 %v1486, %v1485
      %v1642 = vpack.c.b16 %v1488, %v1487
      %v1643 = vpack.c.b16 %v1490, %v1489
      %v1644 = vpack.c.b16 %v1492, %v1491
      %v1645 = vpack.c.b16 %v1494, %v1493
      %v1646 = vpack.c.b16 %v1496, %v1495
      %v1647 = vpack.c.b16 %v1498, %v1497
      %v1648 = vpack.c.b16 %v1500, %v1499
      %v1649 = vpack.c.b16 %v1502, %v1501
      %v1650 = vpack.c.b16 %v1504, %v1503
      %v1651 = vpack.c.b16 %v1506, %v1505
      %v1652 = vpack.c.b16 %v1508, %v1507
      %v1653 = vpack.c.b16 %v1510, %v1509
      %v1654 = vpack.c.b16 %v1512, %v1511
      %v1655 = vpack.c.b16 %v1514, %v1513
      %v1656 = vpack.c.b16 %v1516, %v1515
      %v1657 = vpack.c.b16 %v1518, %v1517
      %v1658 = vpack.c.b16 %v1520, %v1519
      %v1659 = vpack.c.b16 %v1522, %v1521
      %v1660 = vpack.c.b16 %v1524, %v1523
      %v1661 = vpack.c.b16 %v1526, %v1525
      %v1662 = vpack.c.b16 %v1528, %v1527
      %v1663 = vpack.c.b16 %v1530, %v1529
      %v1664 = vpack.c.b16 %v1532, %v1531
      %v1665 = vpack.c.b16 %v1534, %v1533
      %v1666 = vpack.c.b16 %v1536, %v1535
      %v1667 = vpack.c.b16 %v1538, %v1537
      %v1668 = vpack.c.b16 %v1540, %v1539
      %1797 = vmatprep.subr.bf16.mxu0 0
      %1798 = vmatpush1.bf16.msra.mxu0 %v1541
      %1799 = vmatprep.subr.bf16.mxu0 0
      %1800 = vmatpush1.bf16.msra.mxu0 %v1542
      %1801 = vmatprep.subr.bf16.mxu0 0
      %1802 = vmatpush1.bf16.msra.mxu0 %v1543
      %1803 = vmatprep.subr.bf16.mxu0 0
      %1804 = vmatpush1.bf16.msra.mxu0 %v1544
      %1805 = vmatprep.subr.bf16.mxu0 0
      %1806 = vmatpush1.bf16.msra.mxu0 %v1545
      %1807 = vmatprep.subr.bf16.mxu0 0
      %1808 = vmatpush1.bf16.msra.mxu0 %v1546
      %1809 = vmatprep.subr.bf16.mxu0 0
      %1810 = vmatpush1.bf16.msra.mxu0 %v1547
      %1811 = vmatprep.subr.bf16.mxu0 0
      %1812 = vmatpush1.bf16.msra.mxu0 %v1548
      %1813 = vmatprep.subr.bf16.mxu0 0
      %1814 = vmatpush1.bf16.msra.mxu0 %v1549
      %1815 = vmatprep.subr.bf16.mxu0 0
      %1816 = vmatpush1.bf16.msra.mxu0 %v1550
      %1817 = vmatprep.subr.bf16.mxu0 0
      %1818 = vmatpush1.bf16.msra.mxu0 %v1551
      %1819 = vmatprep.subr.bf16.mxu0 0
      %1820 = vmatpush1.bf16.msra.mxu0 %v1552
      %1821 = vmatprep.subr.bf16.mxu0 0
      %1822 = vmatpush1.bf16.msra.mxu0 %v1553
      %1823 = vmatprep.subr.bf16.mxu0 0
      %1824 = vmatpush1.bf16.msra.mxu0 %v1554
      %1825 = vmatprep.subr.bf16.mxu0 0
      %1826 = vmatpush1.bf16.msra.mxu0 %v1555
      %1827 = vmatprep.subr.bf16.mxu0 0
      %1828 = vmatpush1.bf16.msra.mxu0 %v1556
      %1829 = vmatprep.mubr.bf16.mxu0 %v293
      %1830 = vmatmul.mubr.bf16.gmra.mrb[0].mxu0 %v292
      %v1831 = vpop.f32.mrb[0].mxu0
      %v1832 = vadd.f32 %v1027, %v1831
      %v1833 = vpop.f32.mrb[0].mxu0
      %v1834 = vpop.f32.mrb[0].mxu0
      %v1835 = vadd.f32 %v1027, %v1834
      %v1836 = vpop.f32.mrb[0].mxu0
      %1837 = vmatprep.mubr.bf16.mxu0 %v297
      %1838 = vmatmul.mubr.bf16.gmra.mrb[0].mxu0 %v296
      %v1839 = vpop.f32.mrb[0].mxu0
      %v1840 = vadd.f32 %v1027, %v1839
      %v1841 = vpop.f32.mrb[0].mxu0
      %v1842 = vpop.f32.mrb[0].mxu0
      %v1843 = vadd.f32 %v1027, %v1842
      %v1844 = vpop.f32.mrb[0].mxu0
      %1845 = vmatprep.mubr.bf16.mxu0 %v301
      %1846 = vmatmul.mubr.bf16.gmra.mrb[0].mxu0 %v300
      %v1847 = vpop.f32.mrb[0].mxu0
      %v1848 = vadd.f32 %v1027, %v1847
      %v1849 = vpop.f32.mrb[0].mxu0
      %v1850 = vpop.f32.mrb[0].mxu0
      %v1851 = vadd.f32 %v1027, %v1850
      %v1852 = vpop.f32.mrb[0].mxu0
      %1853 = vmatprep.mubr.bf16.mxu0 %v305
      %1854 = vmatmul.mubr.bf16.gmra.mrb[0].mxu0 %v304
      %v1855 = vpop.f32.mrb[0].mxu0
      %v1856 = vadd.f32 %v1027, %v1855
      %v1857 = vpop.f32.mrb[0].mxu0
      %v1858 = vpop.f32.mrb[0].mxu0
      %v1859 = vadd.f32 %v1027, %v1858
      %v1860 = vpop.f32.mrb[0].mxu0
      %1861 = vmatprep.mubr.bf16.mxu0 %v309
      %1862 = vmatmul.mubr.bf16.gmra.mrb[0].mxu0 %v308
      %v1863 = vpop.f32.mrb[0].mxu0
      %v1864 = vadd.f32 %v1027, %v1863
      %v1865 = vpop.f32.mrb[0].mxu0
      %v1866 = vpop.f32.mrb[0].mxu0
      %v1867 = vpop.f32.mrb[0].mxu0
      %1868 = vdwg.mxu0
      %1869 = vmatprep.subr.bf16.mxu0 0
      %1870 = vmatpush1.bf16.msra.mxu0 %v1557
      %1871 = vmatprep.subr.bf16.mxu0 0
      %1872 = vmatpush1.bf16.msra.mxu0 %v1558
      %1873 = vmatprep.subr.bf16.mxu0 0
      %1874 = vmatpush1.bf16.msra.mxu0 %v1559
      %1875 = vmatprep.subr.bf16.mxu0 0
      %1876 = vmatpush1.bf16.msra.mxu0 %v1560
      %1877 = vmatprep.subr.bf16.mxu0 0
      %1878 = vmatpush1.bf16.msra.mxu0 %v1561
      %1879 = vmatprep.subr.bf16.mxu0 0
      %1880 = vmatpush1.bf16.msra.mxu0 %v1562
      %1881 = vmatprep.subr.bf16.mxu0 0
      %1882 = vmatpush1.bf16.msra.mxu0 %v1563
      %1883 = vmatprep.subr.bf16.mxu0 0
      %1884 = vmatpush1.bf16.msra.mxu0 %v1564
      %1885 = vmatprep.subr.bf16.mxu0 0
      %1886 = vmatpush1.bf16.msra.mxu0 %v1565
      %1887 = vmatprep.subr.bf16.mxu0 0
      %1888 = vmatpush1.bf16.msra.mxu0 %v1566
      %1889 = vmatprep.subr.bf16.mxu0 0
      %1890 = vmatpush1.bf16.msra.mxu0 %v1567
      %1891 = vmatprep.subr.bf16.mxu0 0
      %1892 = vmatpush1.bf16.msra.mxu0 %v1568
      %1893 = vmatprep.subr.bf16.mxu0 0
      %1894 = vmatpush1.bf16.msra.mxu0 %v1569
      %1895 = vmatprep.subr.bf16.mxu0 0
      %1896 = vmatpush1.bf16.msra.mxu0 %v1570
      %1897 = vmatprep.subr.bf16.mxu0 0
      %1898 = vmatpush1.bf16.msra.mxu0 %v1571
      %1899 = vmatprep.subr.bf16.mxu0 0
      %1900 = vmatpush1.bf16.msra.mxu0 %v1572
      %1901 = vmatprep.mubr.bf16.mxu0 %v295
      %1902 = vmatmul.mubr.bf16.gmra.mrb[0].mxu0 %v294
      %v1903 = vpop.f32.mrb[0].mxu0
      %v1904 = vadd.f32 %v1832, %v1903
      %v1905 = vpop.f32.mrb[0].mxu0
      %v1906 = vpop.f32.mrb[0].mxu0
      %v1907 = vadd.f32 %v1835, %v1906
      %v1908 = vpop.f32.mrb[0].mxu0
      %1909 = vmatprep.mubr.bf16.mxu0 %v299
      %1910 = vmatmul.mubr.bf16.gmra.mrb[0].mxu0 %v298
      %v1911 = vpop.f32.mrb[0].mxu0
      %v1912 = vadd.f32 %v1840, %v1911
      %v1913 = vpop.f32.mrb[0].mxu0
      %v1914 = vpop.f32.mrb[0].mxu0
      %v1915 = vadd.f32 %v1843, %v1914
      %v1916 = vpop.f32.mrb[0].mxu0
      %1917 = vmatprep.mubr.bf16.mxu0 %v303
      %1918 = vmatmul.mubr.bf16.gmra.mrb[0].mxu0 %v302
      %v1919 = vpop.f32.mrb[0].mxu0
      %v1920 = vadd.f32 %v1848, %v1919
      %v1921 = vpop.f32.mrb[0].mxu0
      %v1922 = vpop.f32.mrb[0].mxu0
      %v1923 = vadd.f32 %v1851, %v1922
      %v1924 = vpop.f32.mrb[0].mxu0
      %1925 = vmatprep.mubr.bf16.mxu0 %v307
      %1926 = vmatmul.mubr.bf16.gmra.mrb[0].mxu0 %v306
      %v1927 = vpop.f32.mrb[0].mxu0
      %v1928 = vadd.f32 %v1856, %v1927
      %v1929 = vpop.f32.mrb[0].mxu0
      %v1930 = vpop.f32.mrb[0].mxu0
      %v1931 = vadd.f32 %v1859, %v1930
      %v1932 = vpop.f32.mrb[0].mxu0
      %1933 = vmatprep.mubr.bf16.mxu0 %v311
      %1934 = vmatmul.mubr.bf16.gmra.mrb[0].mxu0 %v310
      %v1935 = vpop.f32.mrb[0].mxu0
      %v1936 = vadd.f32 %v1864, %v1935
      %v1937 = vpop.f32.mrb[0].mxu0
      %v1938 = vpop.f32.mrb[0].mxu0
      %v1939 = vpop.f32.mrb[0].mxu0
      %1940 = vdwg.mxu0
      %1941 = vmatprep.subr.bf16.mxu0 0
      %1942 = vmatpush1.bf16.msra.mxu0 %v1573
      %1943 = vmatprep.subr.bf16.mxu0 0
      %1944 = vmatpush1.bf16.msra.mxu0 %v1574
      %1945 = vmatprep.subr.bf16.mxu0 0
      %1946 = vmatpush1.bf16.msra.mxu0 %v1575
      %1947 = vmatprep.subr.bf16.mxu0 0
      %1948 = vmatpush1.bf16.msra.mxu0 %v1576
      %1949 = vmatprep.subr.bf16.mxu0 0
      %1950 = vmatpush1.bf16.msra.mxu0 %v1577
      %1951 = vmatprep.subr.bf16.mxu0 0
      %1952 = vmatpush1.bf16.msra.mxu0 %v1578
      %1953 = vmatprep.subr.bf16.mxu0 0
      %1954 = vmatpush1.bf16.msra.mxu0 %v1579
      %1955 = vmatprep.subr.bf16.mxu0 0
      %1956 = vmatpush1.bf16.msra.mxu0 %v1580
      %1957 = vmatprep.subr.bf16.mxu0 0
      %1958 = vmatpush1.bf16.msra.mxu0 %v1581
      %1959 = vmatprep.subr.bf16.mxu0 0
      %1960 = vmatpush1.bf16.msra.mxu0 %v1582
      %1961 = vmatprep.subr.bf16.mxu0 0
      %1962 = vmatpush1.bf16.msra.mxu0 %v1583
      %1963 = vmatprep.subr.bf16.mxu0 0
      %1964 = vmatpush1.bf16.msra.mxu0 %v1584
      %1965 = vmatprep.subr.bf16.mxu0 0
      %1966 = vmatpush1.bf16.msra.mxu0 %v1585
      %1967 = vmatprep.subr.bf16.mxu0 0
      %1968 = vmatpush1.bf16.msra.mxu0 %v1586
      %1969 = vmatprep.subr.bf16.mxu0 0
      %1970 = vmatpush1.bf16.msra.mxu0 %v1587
      %1971 = vmatprep.subr.bf16.mxu0 0
      %1972 = vmatpush1.bf16.msra.mxu0 %v1588
      %1973 = vmatprep.mubr.bf16.mxu0 %v360
      %1974 = vmatmul.mubr.bf16.gmra.mrb[0].mxu0 %v348
      %v1975 = vpop.f32.mrb[0].mxu0
      %v1976 = vadd.f32 %v1904, %v1975
      %v1977 = vpop.f32.mrb[0].mxu0
      %v1978 = vpop.f32.mrb[0].mxu0
      %v1979 = vadd.f32 %v1907, %v1978
      %v1980 = vpop.f32.mrb[0].mxu0
      %1981 = vmatprep.mubr.bf16.mxu0 %v400
      %1982 = vmatmul.mubr.bf16.gmra.mrb[0].mxu0 %v392
      %v1983 = vpop.f32.mrb[0].mxu0
      %v1984 = vadd.f32 %v1912, %v1983
      %v1985 = vpop.f32.mrb[0].mxu0
      %v1986 = vpop.f32.mrb[0].mxu0
      %v1987 = vadd.f32 %v1915, %v1986
      %v1988 = vpop.f32.mrb[0].mxu0
      %1989 = vmatprep.mubr.bf16.mxu0 %v432
      %1990 = vmatmul.mubr.bf16.gmra.mrb[0].mxu0 %v424
      %v1991 = vpop.f32.mrb[0].mxu0
      %v1992 = vadd.f32 %v1920, %v1991
      %v1993 = vpop.f32.mrb[0].mxu0
      %v1994 = vpop.f32.mrb[0].mxu0
      %v1995 = vadd.f32 %v1923, %v1994
      %v1996 = vpop.f32.mrb[0].mxu0
      %1997 = vmatprep.mubr.bf16.mxu0 %v464
      %1998 = vmatmul.mubr.bf16.gmra.mrb[0].mxu0 %v456
      %v1999 = vpop.f32.mrb[0].mxu0
      %v2000 = vadd.f32 %v1928, %v1999
      %v2001 = vpop.f32.mrb[0].mxu0
      %v2002 = vpop.f32.mrb[0].mxu0
      %v2003 = vadd.f32 %v1931, %v2002
      %v2004 = vpop.f32.mrb[0].mxu0
      %2005 = vmatprep.mubr.bf16.mxu0 %v486
      %2006 = vmatmul.mubr.bf16.gmra.mrb[0].mxu0 %v483
      %v2007 = vpop.f32.mrb[0].mxu0
      %v2008 = vadd.f32 %v1936, %v2007
      %v2009 = vpop.f32.mrb[0].mxu0
      %v2010 = vpop.f32.mrb[0].mxu0
      %v2011 = vpop.f32.mrb[0].mxu0
      %2012 = vdwg.mxu0
      %2013 = vmatprep.subr.bf16.mxu0 0
      %2014 = vmatpush1.bf16.msra.mxu0 %v1589
      %2015 = vmatprep.subr.bf16.mxu0 0
      %2016 = vmatpush1.bf16.msra.mxu0 %v1590
      %2017 = vmatprep.subr.bf16.mxu0 0
      %2018 = vmatpush1.bf16.msra.mxu0 %v1591
      %2019 = vmatprep.subr.bf16.mxu0 0
      %2020 = vmatpush1.bf16.msra.mxu0 %v1592
      %2021 = vmatprep.subr.bf16.mxu0 0
      %2022 = vmatpush1.bf16.msra.mxu0 %v1593
      %2023 = vmatprep.subr.bf16.mxu0 0
      %2024 = vmatpush1.bf16.msra.mxu0 %v1594
      %2025 = vmatprep.subr.bf16.mxu0 0
      %2026 = vmatpush1.bf16.msra.mxu0 %v1595
      %2027 = vmatprep.subr.bf16.mxu0 0
      %2028 = vmatpush1.bf16.msra.mxu0 %v1596
      %2029 = vmatprep.subr.bf16.mxu0 0
      %2030 = vmatpush1.bf16.msra.mxu0 %v1597
      %2031 = vmatprep.subr.bf16.mxu0 0
      %2032 = vmatpush1.bf16.msra.mxu0 %v1598
      %2033 = vmatprep.subr.bf16.mxu0 0
      %2034 = vmatpush1.bf16.msra.mxu0 %v1599
      %2035 = vmatprep.subr.bf16.mxu0 0
      %2036 = vmatpush1.bf16.msra.mxu0 %v1600
      %2037 = vmatprep.subr.bf16.mxu0 0
      %2038 = vmatpush1.bf16.msra.mxu0 %v1601
      %2039 = vmatprep.subr.bf16.mxu0 0
      %2040 = vmatpush1.bf16.msra.mxu0 %v1602
      %2041 = vmatprep.subr.bf16.mxu0 0
      %2042 = vmatpush1.bf16.msra.mxu0 %v1603
      %2043 = vmatprep.subr.bf16.mxu0 0
      %2044 = vmatpush1.bf16.msra.mxu0 %v1604
      %2045 = vmatprep.mubr.bf16.mxu0 %v384
      %2046 = vmatmul.mubr.bf16.gmra.mrb[0].mxu0 %v372
      %v2047 = vpop.f32.mrb[0].mxu0
      %v2048 = vadd.f32 %v1976, %v2047
      %v2049 = vpop.f32.mrb[0].mxu0
      %v2050 = vpop.f32.mrb[0].mxu0
      %v2051 = vadd.f32 %v1979, %v2050
      %v2052 = vpop.f32.mrb[0].mxu0
      %2053 = vmatprep.mubr.bf16.mxu0 %v416
      %2054 = vmatmul.mubr.bf16.gmra.mrb[0].mxu0 %v408
      %v2055 = vpop.f32.mrb[0].mxu0
      %v2056 = vadd.f32 %v1984, %v2055
      %v2057 = vpop.f32.mrb[0].mxu0
      %v2058 = vpop.f32.mrb[0].mxu0
      %v2059 = vadd.f32 %v1987, %v2058
      %v2060 = vpop.f32.mrb[0].mxu0
      %2061 = vmatprep.mubr.bf16.mxu0 %v448
      %2062 = vmatmul.mubr.bf16.gmra.mrb[0].mxu0 %v440
      %v2063 = vpop.f32.mrb[0].mxu0
      %v2064 = vadd.f32 %v1992, %v2063
      %v2065 = vpop.f32.mrb[0].mxu0
      %v2066 = vpop.f32.mrb[0].mxu0
      %v2067 = vadd.f32 %v1995, %v2066
      %v2068 = vpop.f32.mrb[0].mxu0
      %2069 = vmatprep.mubr.bf16.mxu0 %v480
      %2070 = vmatmul.mubr.bf16.gmra.mrb[0].mxu0 %v472
      %v2071 = vpop.f32.mrb[0].mxu0
      %v2072 = vadd.f32 %v2000, %v2071
      %v2073 = vpop.f32.mrb[0].mxu0
      %v2074 = vpop.f32.mrb[0].mxu0
      %v2075 = vadd.f32 %v2003, %v2074
      %v2076 = vpop.f32.mrb[0].mxu0
      %2077 = vmatprep.mubr.bf16.mxu0 %v492
      %2078 = vmatmul.mubr.bf16.gmra.mrb[0].mxu0 %v489
      %v2079 = vpop.f32.mrb[0].mxu0
      %v2080 = vadd.f32 %v2008, %v2079
      %v2081 = vpop.f32.mrb[0].mxu0
      %v2082 = vpop.f32.mrb[0].mxu0
      %v2083 = vpop.f32.mrb[0].mxu0
      %2084 = vdwg.mxu0
      %2085 = vmatprep.subr.bf16.mxu0 0
      %2086 = vmatpush1.bf16.msra.mxu0 %v1605
      %2087 = vmatprep.subr.bf16.mxu0 0
      %2088 = vmatpush1.bf16.msra.mxu0 %v1606
      %2089 = vmatprep.subr.bf16.mxu0 0
      %2090 = vmatpush1.bf16.msra.mxu0 %v1607
      %2091 = vmatprep.subr.bf16.mxu0 0
      %2092 = vmatpush1.bf16.msra.mxu0 %v1608
      %2093 = vmatprep.subr.bf16.mxu0 0
      %2094 = vmatpush1.bf16.msra.mxu0 %v1609
      %2095 = vmatprep.subr.bf16.mxu0 0
      %2096 = vmatpush1.bf16.msra.mxu0 %v1610
      %2097 = vmatprep.subr.bf16.mxu0 0
      %2098 = vmatpush1.bf16.msra.mxu0 %v1611
      %2099 = vmatprep.subr.bf16.mxu0 0
      %2100 = vmatpush1.bf16.msra.mxu0 %v1612
      %2101 = vmatprep.subr.bf16.mxu0 0
      %2102 = vmatpush1.bf16.msra.mxu0 %v1613
      %2103 = vmatprep.subr.bf16.mxu0 0
      %2104 = vmatpush1.bf16.msra.mxu0 %v1614
      %2105 = vmatprep.subr.bf16.mxu0 0
      %2106 = vmatpush1.bf16.msra.mxu0 %v1615
      %2107 = vmatprep.subr.bf16.mxu0 0
      %2108 = vmatpush1.bf16.msra.mxu0 %v1616
      %2109 = vmatprep.subr.bf16.mxu0 0
      %2110 = vmatpush1.bf16.msra.mxu0 %v1617
      %2111 = vmatprep.subr.bf16.mxu0 0
      %2112 = vmatpush1.bf16.msra.mxu0 %v1618
      %2113 = vmatprep.subr.bf16.mxu0 0
      %2114 = vmatpush1.bf16.msra.mxu0 %v1619
      %2115 = vmatprep.subr.bf16.mxu0 0
      %2116 = vmatpush1.bf16.msra.mxu0 %v1620
      %2117 = vmatprep.mubr.bf16.mxu0 %v536
      %2118 = vmatmul.mubr.bf16.gmra.mrb[0].mxu0 %v524
      %v2119 = vpop.f32.mrb[0].mxu0
      %v2120 = vadd.f32 %v2048, %v2119
      %v2121 = vpop.f32.mrb[0].mxu0
      %v2122 = vpop.f32.mrb[0].mxu0
      %v2123 = vadd.f32 %v2051, %v2122
      %v2124 = vpop.f32.mrb[0].mxu0
      %2125 = vmatprep.mubr.bf16.mxu0 %v576
      %2126 = vmatmul.mubr.bf16.gmra.mrb[0].mxu0 %v568
      %v2127 = vpop.f32.mrb[0].mxu0
      %v2128 = vadd.f32 %v2056, %v2127
      %v2129 = vpop.f32.mrb[0].mxu0
      %v2130 = vpop.f32.mrb[0].mxu0
      %v2131 = vadd.f32 %v2059, %v2130
      %v2132 = vpop.f32.mrb[0].mxu0
      %2133 = vmatprep.mubr.bf16.mxu0 %v608
      %2134 = vmatmul.mubr.bf16.gmra.mrb[0].mxu0 %v600
      %v2135 = vpop.f32.mrb[0].mxu0
      %v2136 = vadd.f32 %v2064, %v2135
      %v2137 = vpop.f32.mrb[0].mxu0
      %v2138 = vpop.f32.mrb[0].mxu0
      %v2139 = vadd.f32 %v2067, %v2138
      %v2140 = vpop.f32.mrb[0].mxu0
      %2141 = vmatprep.mubr.bf16.mxu0 %v640
      %2142 = vmatmul.mubr.bf16.gmra.mrb[0].mxu0 %v632
      %v2143 = vpop.f32.mrb[0].mxu0
      %v2144 = vadd.f32 %v2072, %v2143
      %v2145 = vpop.f32.mrb[0].mxu0
      %v2146 = vpop.f32.mrb[0].mxu0
      %v2147 = vadd.f32 %v2075, %v2146
      %v2148 = vpop.f32.mrb[0].mxu0
      %2149 = vmatprep.mubr.bf16.mxu0 %v662
      %2150 = vmatmul.mubr.bf16.gmra.mrb[0].mxu0 %v659
      %v2151 = vpop.f32.mrb[0].mxu0
      %v2152 = vadd.f32 %v2080, %v2151
      %v2153 = vpop.f32.mrb[0].mxu0
      %v2154 = vpop.f32.mrb[0].mxu0
      %v2155 = vpop.f32.mrb[0].mxu0
      %2156 = vdwg.mxu0
      %2157 = vmatprep.subr.bf16.mxu0 0
      %2158 = vmatpush1.bf16.msra.mxu0 %v1621
      %2159 = vmatprep.subr.bf16.mxu0 0
      %2160 = vmatpush1.bf16.msra.mxu0 %v1622
      %2161 = vmatprep.subr.bf16.mxu0 0
      %2162 = vmatpush1.bf16.msra.mxu0 %v1623
      %2163 = vmatprep.subr.bf16.mxu0 0
      %2164 = vmatpush1.bf16.msra.mxu0 %v1624
      %2165 = vmatprep.subr.bf16.mxu0 0
      %2166 = vmatpush1.bf16.msra.mxu0 %v1625
      %2167 = vmatprep.subr.bf16.mxu0 0
      %2168 = vmatpush1.bf16.msra.mxu0 %v1626
      %2169 = vmatprep.subr.bf16.mxu0 0
      %2170 = vmatpush1.bf16.msra.mxu0 %v1627
      %2171 = vmatprep.subr.bf16.mxu0 0
      %2172 = vmatpush1.bf16.msra.mxu0 %v1628
      %2173 = vmatprep.subr.bf16.mxu0 0
      %2174 = vmatpush1.bf16.msra.mxu0 %v1629
      %2175 = vmatprep.subr.bf16.mxu0 0
      %2176 = vmatpush1.bf16.msra.mxu0 %v1630
      %2177 = vmatprep.subr.bf16.mxu0 0
      %2178 = vmatpush1.bf16.msra.mxu0 %v1631
      %2179 = vmatprep.subr.bf16.mxu0 0
      %2180 = vmatpush1.bf16.msra.mxu0 %v1632
      %2181 = vmatprep.subr.bf16.mxu0 0
      %2182 = vmatpush1.bf16.msra.mxu0 %v1633
      %2183 = vmatprep.subr.bf16.mxu0 0
      %2184 = vmatpush1.bf16.msra.mxu0 %v1634
      %2185 = vmatprep.subr.bf16.mxu0 0
      %2186 = vmatpush1.bf16.msra.mxu0 %v1635
      %2187 = vmatprep.subr.bf16.mxu0 0
      %2188 = vmatpush1.bf16.msra.mxu0 %v1636
      %2189 = vmatprep.mubr.bf16.mxu0 %v560
      %2190 = vmatmul.mubr.bf16.gmra.mrb[0].mxu0 %v548
      %v2191 = vpop.f32.mrb[0].mxu0
      %v2192 = vadd.f32 %v2120, %v2191
      %v2193 = vpop.f32.mrb[0].mxu0
      %v2194 = vpop.f32.mrb[0].mxu0
      %v2195 = vadd.f32 %v2123, %v2194
      %v2196 = vpop.f32.mrb[0].mxu0
      %2197 = vmatprep.mubr.bf16.mxu0 %v592
      %2198 = vmatmul.mubr.bf16.gmra.mrb[0].mxu0 %v584
      %v2199 = vpop.f32.mrb[0].mxu0
      %v2200 = vadd.f32 %v2128, %v2199
      %v2201 = vpop.f32.mrb[0].mxu0
      %v2202 = vpop.f32.mrb[0].mxu0
      %v2203 = vadd.f32 %v2131, %v2202
      %v2204 = vpop.f32.mrb[0].mxu0
      %2205 = vmatprep.mubr.bf16.mxu0 %v624
      %2206 = vmatmul.mubr.bf16.gmra.mrb[0].mxu0 %v616
      %v2207 = vpop.f32.mrb[0].mxu0
      %v2208 = vadd.f32 %v2136, %v2207
      %v2209 = vpop.f32.mrb[0].mxu0
      %v2210 = vpop.f32.mrb[0].mxu0
      %v2211 = vadd.f32 %v2139, %v2210
      %v2212 = vpop.f32.mrb[0].mxu0
      %2213 = vmatprep.mubr.bf16.mxu0 %v656
      %2214 = vmatmul.mubr.bf16.gmra.mrb[0].mxu0 %v648
      %v2215 = vpop.f32.mrb[0].mxu0
      %v2216 = vadd.f32 %v2144, %v2215
      %v2217 = vpop.f32.mrb[0].mxu0
      %v2218 = vpop.f32.mrb[0].mxu0
      %v2219 = vadd.f32 %v2147, %v2218
      %v2220 = vpop.f32.mrb[0].mxu0
      %2221 = vmatprep.mubr.bf16.mxu0 %v668
      %2222 = vmatmul.mubr.bf16.gmra.mrb[0].mxu0 %v665
      %v2223 = vpop.f32.mrb[0].mxu0
      %v2224 = vadd.f32 %v2152, %v2223
      %v2225 = vpop.f32.mrb[0].mxu0
      %v2226 = vpop.f32.mrb[0].mxu0
      %v2227 = vpop.f32.mrb[0].mxu0
      %2228 = vdwg.mxu0
      %2229 = vmatprep.subr.bf16.mxu0 0
      %2230 = vmatpush1.bf16.msra.mxu0 %v1637
      %2231 = vmatprep.subr.bf16.mxu0 0
      %2232 = vmatpush1.bf16.msra.mxu0 %v1638
      %2233 = vmatprep.subr.bf16.mxu0 0
      %2234 = vmatpush1.bf16.msra.mxu0 %v1639
      %2235 = vmatprep.subr.bf16.mxu0 0
      %2236 = vmatpush1.bf16.msra.mxu0 %v1640
      %2237 = vmatprep.subr.bf16.mxu0 0
      %2238 = vmatpush1.bf16.msra.mxu0 %v1641
      %2239 = vmatprep.subr.bf16.mxu0 0
      %2240 = vmatpush1.bf16.msra.mxu0 %v1642
      %2241 = vmatprep.subr.bf16.mxu0 0
      %2242 = vmatpush1.bf16.msra.mxu0 %v1643
      %2243 = vmatprep.subr.bf16.mxu0 0
      %2244 = vmatpush1.bf16.msra.mxu0 %v1644
      %2245 = vmatprep.subr.bf16.mxu0 0
      %2246 = vmatpush1.bf16.msra.mxu0 %v1645
      %2247 = vmatprep.subr.bf16.mxu0 0
      %2248 = vmatpush1.bf16.msra.mxu0 %v1646
      %2249 = vmatprep.subr.bf16.mxu0 0
      %2250 = vmatpush1.bf16.msra.mxu0 %v1647
      %2251 = vmatprep.subr.bf16.mxu0 0
      %2252 = vmatpush1.bf16.msra.mxu0 %v1648
      %2253 = vmatprep.subr.bf16.mxu0 0
      %2254 = vmatpush1.bf16.msra.mxu0 %v1649
      %2255 = vmatprep.subr.bf16.mxu0 0
      %2256 = vmatpush1.bf16.msra.mxu0 %v1650
      %2257 = vmatprep.subr.bf16.mxu0 0
      %2258 = vmatpush1.bf16.msra.mxu0 %v1651
      %2259 = vmatprep.subr.bf16.mxu0 0
      %2260 = vmatpush1.bf16.msra.mxu0 %v1652
      %2261 = vmatprep.mubr.bf16.mxu0 %v715
      %2262 = vmatmul.mubr.bf16.gmra.mrb[0].mxu0 %v712
      %v2263 = vpop.f32.mrb[0].mxu0
      %v2264 = vadd.f32 %v2192, %v2263
      %v2265 = vpop.f32.mrb[0].mxu0
      %v2266 = vpop.f32.mrb[0].mxu0
      %v2267 = vadd.f32 %v2195, %v2266
      %v2268 = vpop.f32.mrb[0].mxu0
      %2269 = vmatprep.mubr.bf16.mxu0 %v725
      %2270 = vmatmul.mubr.bf16.gmra.mrb[0].mxu0 %v723
      %v2271 = vpop.f32.mrb[0].mxu0
      %v2272 = vadd.f32 %v2200, %v2271
      %v2273 = vpop.f32.mrb[0].mxu0
      %v2274 = vpop.f32.mrb[0].mxu0
      %v2275 = vadd.f32 %v2203, %v2274
      %v2276 = vpop.f32.mrb[0].mxu0
      %2277 = vmatprep.mubr.bf16.mxu0 %v733
      %2278 = vmatmul.mubr.bf16.gmra.mrb[0].mxu0 %v731
      %v2279 = vpop.f32.mrb[0].mxu0
      %v2280 = vadd.f32 %v2208, %v2279
      %v2281 = vpop.f32.mrb[0].mxu0
      %v2282 = vpop.f32.mrb[0].mxu0
      %v2283 = vadd.f32 %v2211, %v2282
      %v2284 = vpop.f32.mrb[0].mxu0
      %2285 = vmatprep.mubr.bf16.mxu0 %v741
      %2286 = vmatmul.mubr.bf16.gmra.mrb[0].mxu0 %v739
      %v2287 = vpop.f32.mrb[0].mxu0
      %v2288 = vadd.f32 %v2216, %v2287
      %v2289 = vpop.f32.mrb[0].mxu0
      %v2290 = vpop.f32.mrb[0].mxu0
      %v2291 = vadd.f32 %v2219, %v2290
      %v2292 = vpop.f32.mrb[0].mxu0
      %2293 = vmatprep.mubr.bf16.mxu0 %v740
      %2294 = vmatmul.mubr.bf16.gmra.mrb[0].mxu0 %v738
      %v2295 = vpop.f32.mrb[0].mxu0
      %v2296 = vadd.f32 %v2224, %v2295
      %v2297 = vpop.f32.mrb[0].mxu0
      %v2298 = vpop.f32.mrb[0].mxu0
      %v2299 = vpop.f32.mrb[0].mxu0
      %2300 = vdwg.mxu0
      %2301 = vmatprep.subr.bf16.mxu0 0
      %2302 = vmatpush1.bf16.msra.mxu0 %v1653
      %2303 = vmatprep.subr.bf16.mxu0 0
      %2304 = vmatpush1.bf16.msra.mxu0 %v1654
      %2305 = vmatprep.subr.bf16.mxu0 0
      %2306 = vmatpush1.bf16.msra.mxu0 %v1655
      %2307 = vmatprep.subr.bf16.mxu0 0
      %2308 = vmatpush1.bf16.msra.mxu0 %v1656
      %2309 = vmatprep.subr.bf16.mxu0 0
      %2310 = vmatpush1.bf16.msra.mxu0 %v1657
      %2311 = vmatprep.subr.bf16.mxu0 0
      %2312 = vmatpush1.bf16.msra.mxu0 %v1658
      %2313 = vmatprep.subr.bf16.mxu0 0
      %2314 = vmatpush1.bf16.msra.mxu0 %v1659
      %2315 = vmatprep.subr.bf16.mxu0 0
      %2316 = vmatpush1.bf16.msra.mxu0 %v1660
      %2317 = vmatprep.subr.bf16.mxu0 0
      %2318 = vmatpush1.bf16.msra.mxu0 %v1661
      %2319 = vmatprep.subr.bf16.mxu0 0
      %2320 = vmatpush1.bf16.msra.mxu0 %v1662
      %2321 = vmatprep.subr.bf16.mxu0 0
      %2322 = vmatpush1.bf16.msra.mxu0 %v1663
      %2323 = vmatprep.subr.bf16.mxu0 0
      %2324 = vmatpush1.bf16.msra.mxu0 %v1664
      %2325 = vmatprep.subr.bf16.mxu0 0
      %2326 = vmatpush1.bf16.msra.mxu0 %v1665
      %2327 = vmatprep.subr.bf16.mxu0 0
      %2328 = vmatpush1.bf16.msra.mxu0 %v1666
      %2329 = vmatprep.subr.bf16.mxu0 0
      %2330 = vmatpush1.bf16.msra.mxu0 %v1667
      %2331 = vmatprep.subr.bf16.mxu0 0
      %2332 = vmatpush1.bf16.msra.mxu0 %v1668
      %2333 = vmatprep.mubr.bf16.mxu0 %v721
      %2334 = vmatmul.mubr.bf16.gmra.mrb[0].mxu0 %v718
      %v2335 = vpop.f32.mrb[0].mxu0
      %v2336 = vadd.f32 %v2264, %v2335
      %v2337 = vpop.f32.mrb[0].mxu0
      %v2338 = vpop.f32.mrb[0].mxu0
      %v2339 = vadd.f32 %v2267, %v2338
      %v2340 = vpop.f32.mrb[0].mxu0
      %2341 = vmatprep.mubr.bf16.mxu0 %v729
      %2342 = vmatmul.mubr.bf16.gmra.mrb[0].mxu0 %v727
      %v2343 = vpop.f32.mrb[0].mxu0
      %v2344 = vadd.f32 %v2272, %v2343
      %v2345 = vpop.f32.mrb[0].mxu0
      %v2346 = vpop.f32.mrb[0].mxu0
      %v2347 = vadd.f32 %v2275, %v2346
      %v2348 = vpop.f32.mrb[0].mxu0
      %2349 = vmatprep.mubr.bf16.mxu0 %v737
      %2350 = vmatmul.mubr.bf16.gmra.mrb[0].mxu0 %v735
      %v2351 = vpop.f32.mrb[0].mxu0
      %v2352 = vadd.f32 %v2280, %v2351
      %v2353 = vpop.f32.mrb[0].mxu0
      %v2354 = vpop.f32.mrb[0].mxu0
      %v2355 = vadd.f32 %v2283, %v2354
      %v2356 = vpop.f32.mrb[0].mxu0
      %2357 = vmatprep.mubr.bf16.mxu0 %v745
      %2358 = vmatmul.mubr.bf16.gmra.mrb[0].mxu0 %v743
      %v2359 = vpop.f32.mrb[0].mxu0
      %v2360 = vadd.f32 %v2288, %v2359
      %v2361 = vpop.f32.mrb[0].mxu0
      %v2362 = vpop.f32.mrb[0].mxu0
      %v2363 = vadd.f32 %v2291, %v2362
      %v2364 = vpop.f32.mrb[0].mxu0
      %2365 = vmatprep.mubr.bf16.mxu0 %v744
      %2366 = vmatmul.mubr.bf16.gmra.mrb[0].mxu0 %v742
      %v2367 = vpop.f32.mrb[0].mxu0
      %v2368 = vadd.f32 %v2296, %v2367
      %v2369 = vpop.f32.mrb[0].mxu0
      %v2370 = vpop.f32.mrb[0].mxu0
      %v2371 = vpop.f32.mrb[0].mxu0
      %2372 = vdwg.mxu0
      %v2373 = vxor.u32 %v2336, 2147483648
      %v2374 = vxor.u32 %v2339, 2147483648
      %v2375 = vxor.u32 %v2344, 2147483648
      %v2376 = vxor.u32 %v2347, 2147483648
      %v2377 = vxor.u32 %v2352, 2147483648
      %v2378 = vxor.u32 %v2355, 2147483648
      %v2379 = vxor.u32 %v2360, 2147483648
      %v2380 = vxor.u32 %v2363, 2147483648
      %v2381 = vxor.u32 %v2368, 2147483648
      %v2382 = vmul.f32 %v2373, 1.442695
      %v2383 = vpow.pop %v2382
      %v2384 = vmul.f32 %v2374, 1.442695
      %v2385 = vpow.pop %v2384
      %v2386 = vmul.f32 %v2375, 1.442695
      %v2387 = vpow.pop %v2386
      %v2388 = vmul.f32 %v2376, 1.442695
      %v2389 = vpow.pop %v2388
      %v2390 = vmul.f32 %v2377, 1.442695
      %v2391 = vpow.pop %v2390
      %v2392 = vmul.f32 %v2378, 1.442695
      %v2393 = vpow.pop %v2392
      %v2394 = vmul.f32 %v2379, 1.442695
      %v2395 = vpow.pop %v2394
      %v2396 = vmul.f32 %v2380, 1.442695
      %v2397 = vpow.pop %v2396
      %v2398 = vmul.f32 %v2381, 1.442695
      %v2399 = vpow.pop %v2398
      %v2400 = vadd.f32 %v2383, 1.0
      %v2401 = vadd.f32 %v2385, 1.0
      %v2402 = vadd.f32 %v2387, 1.0
      %v2403 = vadd.f32 %v2389, 1.0
      %v2404 = vadd.f32 %v2391, 1.0
      %v2405 = vadd.f32 %v2393, 1.0
      %v2406 = vadd.f32 %v2395, 1.0
      %v2407 = vadd.f32 %v2397, 1.0
      %v2408 = vadd.f32 %v2399, 1.0
      %v2409 = vrcp.pop %v2400
      %v2410 = vmul.f32 1.0, %v2409
      %v2411 = vrcp.pop %v2401
      %v2412 = vmul.f32 1.0, %v2411
      %v2413 = vrcp.pop %v2402
      %v2414 = vmul.f32 1.0, %v2413
      %v2415 = vrcp.pop %v2403
      %v2416 = vmul.f32 1.0, %v2415
      %v2417 = vrcp.pop %v2404
      %v2418 = vmul.f32 1.0, %v2417
      %v2419 = vrcp.pop %v2405
      %v2420 = vmul.f32 1.0, %v2419
      %v2421 = vrcp.pop %v2406
      %v2422 = vmul.f32 1.0, %v2421
      %v2423 = vrcp.pop %v2407
      %v2424 = vmul.f32 1.0, %v2423
      %v2425 = vrcp.pop %v2408
      %v2426 = vmul.f32 1.0, %v2425
      %v2427 = vmul.f32 %v2336, %v2410
      %v2428 = vmul.f32 %v2339, %v2412
      %v2429 = vmul.f32 %v2344, %v2414
      %v2430 = vmul.f32 %v2347, %v2416
      %v2431 = vmul.f32 %v2352, %v2418
      %v2432 = vmul.f32 %v2355, %v2420
      %v2433 = vmul.f32 %v2360, %v2422
      %v2434 = vmul.f32 %v2363, %v2424
      %v2435 = vmul.f32 %v2368, %v2426
      %v2436 = vpack.c.bf16 %v2428, %v2427
      %v2437 = vpack.c.bf16 %v2430, %v2429
      %v2438 = vpack.c.bf16 %v2432, %v2431
      %v2439 = vpack.c.bf16 %v2434, %v2433
      %v2440 = vpack.c.bf16 %v2435, %v2435
      %v2441 = vld [vmem:[%s3] sm:$0xf]
      %v2442 = vld [vmem:[%s3 + $0x4] sm:$0xf]
      %v2443 = vld [vmem:[%s3 + $0x8] sm:$0xf]
      %v2444 = vld [vmem:[%s3 + $0xc] sm:$0xf]
      %v2445 = vld [vmem:[%s3 + $0x10] sm:$0xf]
      %v2446 = vld [vmem:[%s3 + $0x14] sm:$0xf]
      %v2447 = vld [vmem:[%s3 + $0x18] sm:$0xf]
      %v2448 = vld [vmem:[%s3 + $0x1c] sm:$0xf]
      %v2449 = vld [vmem:[%s3 + $0x20] sm:$0xf]
      %v2450 = vld [vmem:[%s3 + $0x24] sm:$0xf]
      %v2451 = vld [vmem:[%s3 + $0x28] sm:$0xf]
      %v2452 = vld [vmem:[%s3 + $0x2c] sm:$0xf]
      %v2453 = vld [vmem:[%s3 + $0x30] sm:$0xf]
      %v2454 = vld [vmem:[%s3 + $0x34] sm:$0xf]
      %v2455 = vld [vmem:[%s3 + $0x38] sm:$0xf]
      %v2456 = vld [vmem:[%s3 + $0x3c] sm:$0xf]
      %v2457 = vld [vmem:[%s4] sm:$0x1]
      %v2459 = vlaneseq
      %v2460 = vshrl.u32 %v2459, 7
      %v2461 = vsub.s32 0, %v2460
      %v2462 = vrot.slane %v2457, %v2461
      %v2480 = vunpack.c.l.b16 %v2441
      %v2481 = vunpack.c.l.b16 %v2442
      %v2482 = vunpack.c.l.b16 %v2443
      %v2483 = vunpack.c.l.b16 %v2444
      %v2484 = vunpack.c.l.b16 %v2445
      %v2485 = vunpack.c.l.b16 %v2446
      %v2486 = vunpack.c.l.b16 %v2447
      %v2487 = vunpack.c.l.b16 %v2448
      %v2488 = vunpack.c.l.b16 %v2449
      %v2489 = vunpack.c.l.b16 %v2450
      %v2490 = vunpack.c.l.b16 %v2451
      %v2491 = vunpack.c.l.b16 %v2452
      %v2492 = vunpack.c.l.b16 %v2453
      %v2493 = vunpack.c.l.b16 %v2454
      %v2494 = vunpack.c.l.b16 %v2455
      %v2495 = vunpack.c.l.b16 %v2456
      %v2496 = vpack.c.b16 %v2481, %v2480
      %v2497 = vpack.c.b16 %v2483, %v2482
      %v2498 = vpack.c.b16 %v2485, %v2484
      %v2499 = vpack.c.b16 %v2487, %v2486
      %v2500 = vpack.c.b16 %v2489, %v2488
      %v2501 = vpack.c.b16 %v2491, %v2490
      %v2502 = vpack.c.b16 %v2493, %v2492
      %v2503 = vpack.c.b16 %v2495, %v2494
      %2512 = vmatprep.subr.bf16.mxu0 0
      %2513 = vmatpush1.bf16.msra.mxu0 %v2496
      %2514 = vmatprep.subr.bf16.mxu0 0
      %2515 = vmatpush1.bf16.msra.mxu0 %v2497
      %2516 = vmatprep.subr.bf16.mxu0 0
      %2517 = vmatpush1.bf16.msra.mxu0 %v2498
      %2518 = vmatprep.subr.bf16.mxu0 0
      %2519 = vmatpush1.bf16.msra.mxu0 %v2499
      %2520 = vmatprep.subr.bf16.mxu0 0
      %2521 = vmatpush1.bf16.msra.mxu0 %v2500
      %2522 = vmatprep.subr.bf16.mxu0 0
      %2523 = vmatpush1.bf16.msra.mxu0 %v2501
      %2524 = vmatprep.subr.bf16.mxu0 0
      %2525 = vmatpush1.bf16.msra.mxu0 %v2502
      %2526 = vmatprep.subr.bf16.mxu0 0
      %2527 = vmatpush1.bf16.msra.mxu0 %v2503
      %2528 = vmatprep.subr.bf16.mxu0 0
      %2529 = vmatpush1.bf16.msra.mxu0 0
      %2530 = vmatprep.subr.bf16.mxu0 0
      %2531 = vmatpush1.bf16.msra.mxu0 0
      %2532 = vmatprep.subr.bf16.mxu0 0
      %2533 = vmatpush1.bf16.msra.mxu0 0
      %2534 = vmatprep.subr.bf16.mxu0 0
      %2535 = vmatpush1.bf16.msra.mxu0 0
      %2536 = vmatprep.subr.bf16.mxu0 0
      %2537 = vmatpush1.bf16.msra.mxu0 0
      %2538 = vmatprep.subr.bf16.mxu0 0
      %2539 = vmatpush1.bf16.msra.mxu0 0
      %2540 = vmatprep.subr.bf16.mxu0 0
      %2541 = vmatpush1.bf16.msra.mxu0 0
      %2542 = vmatprep.subr.bf16.mxu0 0
      %2543 = vmatpush1.bf16.msra.mxu0 0
      %2544 = vmatprep.mubr.bf16.mxu0 0
      %2545 = vmatmul.mubr.bf16.gmra.mrb[0].mxu0 %v2436
      %v2546 = vpop.f32.mrb[0].mxu0
      %v2547 = vadd.f32 %v2462, %v2546
      %v2548 = vpop.f32.mrb[0].mxu0
      %v2549 = vpop.f32.mrb[0].mxu0
      %v2550 = vadd.f32 %v2462, %v2549
      %v2551 = vpop.f32.mrb[0].mxu0
      %2552 = vmatprep.mubr.bf16.mxu0 0
      %2553 = vmatmul.mubr.bf16.gmra.mrb[0].mxu0 %v2437
      %v2554 = vpop.f32.mrb[0].mxu0
      %v2555 = vadd.f32 %v2462, %v2554
      %v2556 = vpop.f32.mrb[0].mxu0
      %v2557 = vpop.f32.mrb[0].mxu0
      %v2558 = vadd.f32 %v2462, %v2557
      %v2559 = vpop.f32.mrb[0].mxu0
      %2560 = vmatprep.mubr.bf16.mxu0 0
      %2561 = vmatmul.mubr.bf16.gmra.mrb[0].mxu0 %v2438
      %v2562 = vpop.f32.mrb[0].mxu0
      %v2563 = vadd.f32 %v2462, %v2562
      %v2564 = vpop.f32.mrb[0].mxu0
      %v2565 = vpop.f32.mrb[0].mxu0
      %v2566 = vadd.f32 %v2462, %v2565
      %v2567 = vpop.f32.mrb[0].mxu0
      %2568 = vmatprep.mubr.bf16.mxu0 0
      %2569 = vmatmul.mubr.bf16.gmra.mrb[0].mxu0 %v2439
      %v2570 = vpop.f32.mrb[0].mxu0
      %v2571 = vadd.f32 %v2462, %v2570
      %v2572 = vpop.f32.mrb[0].mxu0
      %v2573 = vpop.f32.mrb[0].mxu0
      %v2574 = vadd.f32 %v2462, %v2573
      %v2575 = vpop.f32.mrb[0].mxu0
      %2576 = vmatprep.mubr.bf16.mxu0 0
      %2577 = vmatmul.mubr.bf16.gmra.mrb[0].mxu0 %v2440
      %v2578 = vpop.f32.mrb[0].mxu0
      %v2579 = vadd.f32 %v2462, %v2578
      %v2580 = vpop.f32.mrb[0].mxu0
      %v2581 = vpop.f32.mrb[0].mxu0
      %v2582 = vpop.f32.mrb[0].mxu0
      %2583 = vdwg.mxu0
      %v2584 = vpack.c.bf16 %v2550, %v2547
      %v2585 = vpack.c.bf16 %v2558, %v2555
      %v2586 = vpack.c.bf16 %v2566, %v2563
      %v2587 = vpack.c.bf16 %v2574, %v2571
      %v2588 = vpack.c.bf16 %v2579, %v2579
      %v2594 = vunpack.c.l.b16 %v2584
      %v2595 = vunpack.c.h.b16 %v2584
      %v2596 = vunpack.c.l.b16 %v2585
      %v2597 = vunpack.c.h.b16 %v2585
      %v2598 = vunpack.c.l.b16 %v2586
      %v2599 = vunpack.c.h.b16 %v2586
      %v2600 = vunpack.c.l.b16 %v2587
      %v2601 = vunpack.c.h.b16 %v2587
      %v2602 = vunpack.c.l.b16 %v2588
      %v2603 = vpack.c.b16 %v2594, %v2594
      %v2604 = vpack.c.b16 %v2595, %v2595
      %v2605 = vpack.c.b16 %v2596, %v2596
      %v2606 = vpack.c.b16 %v2597, %v2597
      %v2607 = vpack.c.b16 %v2598, %v2598
      %v2608 = vpack.c.b16 %v2599, %v2599
      %v2609 = vpack.c.b16 %v2600, %v2600
      %v2610 = vpack.c.b16 %v2601, %v2601
      %v2611 = vpack.c.b16 %v2602, %v2602
      %2621 = vst [vmem:[%s224] sm:$0xf] %v2603
      %2622 = vst [vmem:[%s224 + $0x4] sm:$0xf] %v2604
      %2623 = vst [vmem:[%s224 + $0x8] sm:$0xf] %v2605
      %2624 = vst [vmem:[%s224 + $0xc] sm:$0xf] %v2606
      %2625 = vst [vmem:[%s224 + $0x10] sm:$0xf] %v2607
      %2626 = vst [vmem:[%s224 + $0x14] sm:$0xf] %v2608
      %2627 = vst [vmem:[%s224 + $0x18] sm:$0xf] %v2609
      %2628 = vst [vmem:[%s224 + $0x1c] sm:$0xf] %v2610
      %2629 = vst [vmem:[%s224 + $0x20] sm:$0xf] %v2611
      %p2630 = scmp.lt.s32.totalorder %s16, 1
      %s2631 = scalar_select %p2630, %s16, 1
      %s2632 = smul.addr %s2631, 9
      %s2633 = smul.addr %s2632, 4
      %s2634 = scalar_lea.vmem %s5, %s2633
      // Predicated region
      $region41: #{forward.6} parent=39 // pred_check
        %p2635 = pneg %p144
      $region42: #{forward.6} parent=39 // pred_check_branch
        %2637 = sbr.rel (%p2635) target = $region44
      $region43: #{forward.6} parent=39 // pred_region
        _
      $region44: #{forward.6} parent=39 // pred_fallthru
        _
    $region40: #{forward.6} parent=5 // pred_fallthru
      _
    %p2638 = scmp.le.s32.totalorder 2, %s11
    // Predicated region
    $region45: #{forward.6} parent=5 // pred_check
      %p2639 = pneg %p2638
    $region46: #{forward.6} parent=5 // pred_check_branch
      %2641 = sbr.rel (%p2639) target = $region48
    $region47: #{forward.6} parent=5 // pred_region
      %s2642 = ssub.s32 %s11, 2
      // Predicated region
      $region49: #{forward.6} parent=47 // pred_check
        %p2643 = pneg %p150
      $region50: #{forward.6} parent=47 // pred_check_branch
        %2645 = sbr.rel (%p2643) target = $region52
      $region51: #{forward.6} parent=47 // pred_region
        %p2646 = scmp.lt.s32.totalorder %s17, 1
        %s2647 = scalar_select %p2646, %s17, 1
        %s2648 = smul.addr %s2647, 9
        %s2649 = smul.addr %s2648, 4
        %s2650 = scalar_lea.vmem %s5, %s2649
      $region52: #{forward.6} parent=47 // pred_fallthru
        _
    $region48: #{forward.6} parent=5 // pred_fallthru
      _
  $region6: #{forward.6} parent=0 // loop_footer
    %s15 = sadd.s32 1, %s11
  $region7: #{forward.6} parent=0 // loop_footer_branch
    %10 = sbr.rel target = $region3
  $region8: #{forward.6} parent=0 // loop_exit
    _

// kernel: forward.8
$region0: #{forward.8}
  #allocation0 [shape = 'u32[]', space=smem, size = 0x4, offset = 0x4, fixed_abs, tag = 'smem constant byte address 0x4 - core index']
  #allocation1 [shape = 'u32[144,128]{1,0:T(1,128)}', space=vmem, size = 0x12000, scoped, tag = 'internal scratch']
  %s0 = inlined_call_operand.vmem [shape: bf16[2,8,10,128], index: 0, kind: input, shape index: {}]
  %s1 = inlined_call_operand.vmem [shape: f32[2,1,128], index: 1, kind: output, shape index: {}]
  %s2 = sld [smem:[#allocation0]]
  $region37: #{forward.8} parent=0
    _
  %s4 = ssub.s32 1, %s2
  %s5 = scalar_select 0, %s4, %s2
  loop: start=0, step=1, limit=4
  $region2: #{forward.8} parent=0 // loop_pre_header
    _
  $region3: #{forward.8} parent=0 // loop_header
    %s7 = sphi 0, %s11
    %p8 = scmp.ge.s32.totalorder %s7, 4
    %s17 = sphi 0, %s19
    %s20 = sphi 0, %s17
    %s21 = sphi 0, %s20
    %s37 = sphi 0, %s21
    %s43 = sphi 0, %s45
    %s46 = sphi 0, %s43
    %s47 = sphi 0, %s46
    %s63 = sphi 0, %s47
  $region4: #{forward.8} parent=0 // loop_header_branch
    %10 = sbr.rel (%p8) target = $region8
  $region5: #{forward.8} parent=0 // loop_body
    %s12 = ssub.s32 %s7, 1
    %s13 = ssub.s32 %s7, 2
    %s14 = sadd.s32 %s7, 1
    %s15 = ssub.s32 %s7, %s14
    %p16 = scmp.eq.s32.totalorder %s15, 0
    %s18 = sadd.s32 %s17, 1
    %s19 = scalar_select %p16, %s17, %s18
    %p22 = pneg %p16
    %p23 = scmp.eq.s32.totalorder %s7, 1
    %p24 = por %p22, %p23
    %p25 = scmp.ne.s32.totalorder %s17, %s20
    %p26 = scmp.eq.s32.totalorder %s7, 0
    %p27 = por %p25, %p26
    %p28 = scmp.ne.s32.totalorder %s17, %s20
    %p29 = scmp.eq.s32.totalorder %s12, 1
    %p30 = por %p28, %p29
    %p31 = scmp.ne.s32.totalorder %s20, %s21
    %p32 = scmp.eq.s32.totalorder %s12, 0
    %p33 = por %p31, %p32
    %p34 = scmp.ne.s32.totalorder %s20, %s21
    %p35 = scmp.eq.s32.totalorder %s13, 1
    %p36 = por %p34, %p35
    %p38 = scmp.ne.s32.totalorder %s21, %s37
    %p39 = scmp.eq.s32.totalorder %s13, 0
    %p40 = por %p38, %p39
    %s41 = ssub.s32 %s7, %s14
    %p42 = scmp.eq.s32.totalorder %s41, 0
    %s44 = sadd.s32 %s43, 1
    %s45 = scalar_select %p42, %s43, %s44
    %p48 = pneg %p42
    %p49 = scmp.eq.s32.totalorder %s7, 1
    %p50 = por %p48, %p49
    %p51 = scmp.ne.s32.totalorder %s43, %s46
    %p52 = scmp.eq.s32.totalorder %s7, 0
    %p53 = por %p51, %p52
    %p54 = scmp.ne.s32.totalorder %s43, %s46
    %p55 = scmp.eq.s32.totalorder %s12, 1
    %p56 = por %p54, %p55
    %p57 = scmp.ne.s32.totalorder %s46, %s47
    %p58 = scmp.eq.s32.totalorder %s12, 0
    %p59 = por %p57, %p58
    %p60 = scmp.ne.s32.totalorder %s46, %s47
    %p61 = scmp.eq.s32.totalorder %s13, 1
    %p62 = por %p60, %p61
    %p64 = scmp.ne.s32.totalorder %s47, %s63
    %p65 = scmp.eq.s32.totalorder %s13, 0
    %p66 = por %p64, %p65
    %p67 = scmp.le.s32.totalorder 1, %s7
    %p68 = scmp.lt.s32.totalorder %s7, 3
    %p69 = pnand %p67, %p68
    %p70 = pneg %p69
    // Predicated region
    $region9: #{forward.8} parent=5 // pred_check
      _
    $region10: #{forward.8} parent=5 // pred_check_branch
      %72 = sbr.rel (%p69) target = $region12
    $region11: #{forward.8} parent=5 // pred_region
      %s73 = ssub.s32 %s7, 1
    $region12: #{forward.8} parent=5 // pred_fallthru
      _
    %p74 = scmp.lt.s32.totalorder %s7, 2
    // Predicated region
    $region13: #{forward.8} parent=5 // pred_check
      %p75 = pneg %p74
    $region14: #{forward.8} parent=5 // pred_check_branch
      %77 = sbr.rel (%p75) target = $region16
    $region15: #{forward.8} parent=5 // pred_region
      // Predicated region
      $region17: #{forward.8} parent=15 // pred_check
        %p78 = pneg %p27
      $region18: #{forward.8} parent=15 // pred_check_branch
        %80 = sbr.rel (%p78) target = $region20
      $region19: #{forward.8} parent=15 // pred_region
        %p81 = scmp.lt.s32.totalorder %s7, 1
        %s82 = scalar_select %p81, %s7, 1
        %s83 = smul.addr %s82, 16
        %s84 = smul.addr %s83, 4
        %s85 = scalar_lea.vmem %s0, %s84
      $region20: #{forward.8} parent=15 // pred_fallthru
        _
    $region16: #{forward.8} parent=5 // pred_fallthru
      _
    %p86 = scmp.le.s32.totalorder 1, %s7
    %p87 = scmp.lt.s32.totalorder %s7, 3
    %p88 = pnand %p86, %p87
    %p89 = pneg %p88
    // Predicated region
    $region21: #{forward.8} parent=5 // pred_check
      _
    $region22: #{forward.8} parent=5 // pred_check_branch
      %91 = sbr.rel (%p88) target = $region24
    $region23: #{forward.8} parent=5 // pred_region
      %s92 = ssub.s32 %s7, 1
      %p93 = scmp.lt.s32.totalorder %s12, 1
      %s94 = scalar_select %p93, %s12, 1
      %s95 = smul.addr %s94, 16
      %s96 = smul.addr %s95, 4
      %s97 = scalar_lea.vmem %s0, %s96
      %p98 = pneg %p33
      %p99 = pneg %p30
      %p100 = pneg %p59
      %p101 = pneg %p56
      %p102 = scmp.lt.s32.totalorder %s12, 1
      %s103 = scalar_select %p102, %s12, 1
      %s104 = scalar_lea.vmem %s1, %s103
      %p105 = scmp.lt.s32.totalorder %s12, 1
      %s106 = scalar_select %p105, %s12, 1
      %s107 = smul.addr %s106, 16
      %s108 = smul.addr %s107, 4
      %s109 = scalar_lea.vmem %s0, %s108
      %p110 = scmp.lt.s32.totalorder %s12, 1
      %s111 = scalar_select %p110, %s12, 1
      %s112 = scalar_lea.vmem %s1, %s111
      %v113 = vld [vmem:[%s109] sm:$0xf]
      %v114 = vld [vmem:[%s109 + $0x4] sm:$0x1]
      %v115 = vld [vmem:[%s109 + $0x8] sm:$0xf]
      %v116 = vld [vmem:[%s109 + $0xc] sm:$0x1]
      %v117 = vld [vmem:[%s109 + $0x10] sm:$0xf]
      %v118 = vld [vmem:[%s109 + $0x14] sm:$0x1]
      %v119 = vld [vmem:[%s109 + $0x18] sm:$0xf]
      %v120 = vld [vmem:[%s109 + $0x1c] sm:$0x1]
      %v121 = vld [vmem:[%s109 + $0x20] sm:$0xf]
      %v122 = vld [vmem:[%s109 + $0x24] sm:$0x1]
      %v123 = vld [vmem:[%s109 + $0x28] sm:$0xf]
      %v124 = vld [vmem:[%s109 + $0x2c] sm:$0x1]
      %v125 = vld [vmem:[%s109 + $0x30] sm:$0xf]
      %v126 = vld [vmem:[%s109 + $0x34] sm:$0x1]
      %v127 = vld [vmem:[%s109 + $0x38] sm:$0xf]
      %v128 = vld [vmem:[%s109 + $0x3c] sm:$0x1]
      %v129 = vunpack.c.l.bf16 %v113
      %v130 = vunpack.c.l.bf16 %v114
      %v131 = vunpack.c.l.bf16 %v115
      %v132 = vunpack.c.l.bf16 %v116
      %v133 = vunpack.c.l.bf16 %v117
      %v134 = vunpack.c.l.bf16 %v118
      %v135 = vunpack.c.l.bf16 %v119
      %v136 = vunpack.c.l.bf16 %v120
      %v137 = vunpack.c.l.bf16 %v121
      %v138 = vunpack.c.l.bf16 %v122
      %v139 = vunpack.c.l.bf16 %v123
      %v140 = vunpack.c.l.bf16 %v124
      %v141 = vunpack.c.l.bf16 %v125
      %v142 = vunpack.c.l.bf16 %v126
      %v143 = vunpack.c.l.bf16 %v127
      %v144 = vunpack.c.l.bf16 %v128
      %v145 = vmax.f32 %v129, 1e-06
      %v146 = vmax.f32 %v130, 1e-06
      %v147 = vmax.f32 %v131, 1e-06
      %v148 = vmax.f32 %v132, 1e-06
      %v149 = vmax.f32 %v133, 1e-06
      %v150 = vmax.f32 %v134, 1e-06
      %v151 = vmax.f32 %v135, 1e-06
      %v152 = vmax.f32 %v136, 1e-06
      %v153 = vmax.f32 %v137, 1e-06
      %v154 = vmax.f32 %v138, 1e-06
      %v155 = vmax.f32 %v139, 1e-06
      %v156 = vmax.f32 %v140, 1e-06
      %v157 = vmax.f32 %v141, 1e-06
      %v158 = vmax.f32 %v142, 1e-06
      %v159 = vmax.f32 %v143, 1e-06
      %v160 = vmax.f32 %v144, 1e-06
      %v161 = vmul.f32 %v145, %v145
      %v162 = vmul.f32 %v146, %v146
      %v163 = vmul.f32 %v147, %v147
      %v164 = vmul.f32 %v148, %v148
      %v165 = vmul.f32 %v149, %v149
      %v166 = vmul.f32 %v150, %v150
      %v167 = vmul.f32 %v151, %v151
      %v168 = vmul.f32 %v152, %v152
      %v169 = vmul.f32 %v153, %v153
      %v170 = vmul.f32 %v154, %v154
      %v171 = vmul.f32 %v155, %v155
      %v172 = vmul.f32 %v156, %v156
      %v173 = vmul.f32 %v157, %v157
      %v174 = vmul.f32 %v158, %v158
      %v175 = vmul.f32 %v159, %v159
      %v176 = vmul.f32 %v160, %v160
      %v177 = vmul.f32 %v161, %v145
      %v178 = vmul.f32 %v162, %v146
      %v179 = vmul.f32 %v163, %v147
      %v180 = vmul.f32 %v164, %v148
      %v181 = vmul.f32 %v165, %v149
      %v182 = vmul.f32 %v166, %v150
      %v183 = vmul.f32 %v167, %v151
      %v184 = vmul.f32 %v168, %v152
      %v185 = vmul.f32 %v169, %v153
      %v186 = vmul.f32 %v170, %v154
      %v187 = vmul.f32 %v171, %v155
      %v188 = vmul.f32 %v172, %v156
      %v189 = vmul.f32 %v173, %v157
      %v190 = vmul.f32 %v174, %v158
      %v191 = vmul.f32 %v175, %v159
      %v192 = vmul.f32 %v176, %v160
      %v193 = vlaneseq
      %v194 = vshrl.u32 %v193, 7
      %v195 = vadd.s32 %v194, 8
      %vm196 = vcmp.lt.s32.totalorder %v194, 8
      %vm197 = vcmp.lt.s32.totalorder %v195, 8
      %v198 = vsel %vm196, 1, 0
      %v199 = vsel %vm197, 1, 0
      %vm200 = vcmp.eq.s32.totalorder %v198, 1
      %vm201 = vcmp.eq.s32.totalorder %v199, 1
      %v202 = vsel %vm200, %v177, 0.0
      %v203 = vsel %vm201, %v178, 0.0
      %v204 = vsel %vm200, %v179, 0.0
      %v205 = vsel %vm201, %v180, 0.0
      %v206 = vsel %vm200, %v181, 0.0
      %v207 = vsel %vm201, %v182, 0.0
      %v208 = vsel %vm200, %v183, 0.0
      %v209 = vsel %vm201, %v184, 0.0
      %v210 = vsel %vm200, %v185, 0.0
      %v211 = vsel %vm201, %v186, 0.0
      %v212 = vsel %vm200, %v187, 0.0
      %v213 = vsel %vm201, %v188, 0.0
      %v214 = vsel %vm200, %v189, 0.0
      %v215 = vsel %vm201, %v190, 0.0
      %v216 = vsel %vm200, %v191, 0.0
      %v217 = vsel %vm201, %v192, 0.0
      %v218 = vadd.f32 %v202, %v204
      %v219 = vadd.f32 %v218, %v206
      %v220 = vadd.f32 %v219, %v208
      %v221 = vadd.f32 %v220, %v210
      %v222 = vadd.f32 %v221, %v212
      %v223 = vadd.f32 %v222, %v214
      %v224 = vadd.f32 %v223, %v216
      %vm225 = vcmask 1041408
      %v226 = vsel %vm225, %v203, 0.0
      %v227 = vsel %vm225, %v205, 0.0
      %v228 = vadd.f32 %v226, %v227
      %v229 = vsel %vm225, %v207, 0.0
      %v230 = vadd.f32 %v228, %v229
      %v231 = vsel %vm225, %v209, 0.0
      %v232 = vadd.f32 %v230, %v231
      %v233 = vsel %vm225, %v211, 0.0
      %v234 = vadd.f32 %v232, %v233
      %v235 = vsel %vm225, %v213, 0.0
      %v236 = vadd.f32 %v234, %v235
      %v237 = vsel %vm225, %v215, 0.0
      %v238 = vadd.f32 %v236, %v237
      %v239 = vsel %vm225, %v217, 0.0
      %v240 = vadd.f32 %v238, %v239
      %v241 = vsel %vm225, %v240, 0.0
      %v242 = vadd.f32 %v224, %v241
      %v243 = vrot.slane %v242, 4
      %v244 = vadd.f32 %v242, %v243
      %v245 = vrot.slane %v244, 2
      %v246 = vadd.f32 %v244, %v245
      %v247 = vrot.slane %v246, 1
      %v248 = vadd.f32 %v246, %v247
      %v249 = vmul.f32 %v248, 0.015625
      %v250 = vlog2.pop %v249
      %v251 = vmul.f32 %v250, 0.6931472
      %v252 = vmul.f32 %v251, 0.33333334
      %v253 = vmul.f32 %v252, 1.442695
      %v254 = vpow.pop %v253
      %255 = vst [vmem:[%s112] sm:$0x1] %v254
      %p256 = scmp.lt.s32.totalorder %s12, 1
      %s257 = scalar_select %p256, %s12, 1
      %s258 = scalar_lea.vmem %s1, %s257
      // Predicated region
      $region25: #{forward.8} parent=23 // pred_check
        %p259 = pneg %p56
      $region26: #{forward.8} parent=23 // pred_check_branch
        %261 = sbr.rel (%p259) target = $region28
      $region27: #{forward.8} parent=23 // pred_region
        _
      $region28: #{forward.8} parent=23 // pred_fallthru
        _
    $region24: #{forward.8} parent=5 // pred_fallthru
      _
    %p262 = scmp.le.s32.totalorder 2, %s7
    // Predicated region
    $region29: #{forward.8} parent=5 // pred_check
      %p263 = pneg %p262
    $region30: #{forward.8} parent=5 // pred_check_branch
      %265 = sbr.rel (%p263) target = $region32
    $region31: #{forward.8} parent=5 // pred_region
      %s266 = ssub.s32 %s7, 2
      // Predicated region
      $region33: #{forward.8} parent=31 // pred_check
        %p267 = pneg %p62
      $region34: #{forward.8} parent=31 // pred_check_branch
        %269 = sbr.rel (%p267) target = $region36
      $region35: #{forward.8} parent=31 // pred_region
        %p270 = scmp.lt.s32.totalorder %s13, 1
        %s271 = scalar_select %p270, %s13, 1
        %s272 = scalar_lea.vmem %s1, %s271
      $region36: #{forward.8} parent=31 // pred_fallthru
        _
    $region32: #{forward.8} parent=5 // pred_fallthru
      _
  $region6: #{forward.8} parent=0 // loop_footer
    %s11 = sadd.s32 1, %s7
  $region7: #{forward.8} parent=0 // loop_footer_branch
    %6 = sbr.rel target = $region3
  $region8: #{forward.8} parent=0 // loop_exit
    _

// kernel: forward.9
$region0: #{forward.9}
  #allocation0 [shape = 'u32[]', space=smem, size = 0x4, offset = 0x4, fixed_abs, tag = 'smem constant byte address 0x4 - core index']
  #allocation1 [shape = 'u32[144,128]{1,0:T(1,128)}', space=vmem, size = 0x12000, scoped, tag = 'internal scratch']
  %s0 = inlined_call_operand.vmem [shape: f32[2,128], index: 0, kind: input, shape index: {}]
  %s1 = inlined_call_operand.vmem [shape: bf16[128,256], index: 1, kind: input, shape index: {}]
  %s2 = inlined_call_operand.hbm [shape: f32[2,256], index: 2, kind: output, shape index: {}]
  %s3 = sld [smem:[#allocation0]]
  $region18: #{forward.9} parent=0
    _
  %s5 = ssub.s32 1, %s3
  %s6 = scalar_select 0, %s5, %s3
  $region1: #{forward.9} parent=0
    #allocation2 [shape = 'u8[2048]{0}', space=vmem, size = 0x800, scoped, tag = 'output window, operand 0, single buffered']
    #allocation3 [shape = 's32[1]{0}', space=sflag, size = 0x4, scoped, tag = 'scoped memory for forward.9']
    %7 = vsyncpa [#allocation3], 0
    // Predicated region
    $region2: #{forward.9} parent=1 // pred_check
      _
    $region3: #{forward.9} parent=1 // pred_check_branch
      %9 = sbr.rel (0) target = $region5
    $region4: #{forward.9} parent=1 // pred_region
      _
    $region5: #{forward.9} parent=1 // pred_fallthru
      _
    // Predicated region
    $region6: #{forward.9} parent=1 // pred_check
      _
    $region7: #{forward.9} parent=1 // pred_check_branch
      %11 = sbr.rel (0) target = $region9
    $region8: #{forward.9} parent=1 // pred_region
      _
    $region9: #{forward.9} parent=1 // pred_fallthru
      _
    %v13 = vld [vmem:[%s0] sm:$0x3]
    %v14 = vpack.c.bf16 %v13, %v13
    %v15 = vld [vmem:[%s1] sm:$0xff]
    %v16 = vld [vmem:[%s1 + $0x8] sm:$0xff]
    %v17 = vld [vmem:[%s1 + $0x10] sm:$0xff]
    %v18 = vld [vmem:[%s1 + $0x18] sm:$0xff]
    %v19 = vld [vmem:[%s1 + $0x20] sm:$0xff]
    %v20 = vld [vmem:[%s1 + $0x28] sm:$0xff]
    %v21 = vld [vmem:[%s1 + $0x30] sm:$0xff]
    %v22 = vld [vmem:[%s1 + $0x38] sm:$0xff]
    %v23 = vld [vmem:[%s1 + $0x40] sm:$0xff]
    %v24 = vld [vmem:[%s1 + $0x48] sm:$0xff]
    %v25 = vld [vmem:[%s1 + $0x50] sm:$0xff]
    %v26 = vld [vmem:[%s1 + $0x58] sm:$0xff]
    %v27 = vld [vmem:[%s1 + $0x60] sm:$0xff]
    %v28 = vld [vmem:[%s1 + $0x68] sm:$0xff]
    %v29 = vld [vmem:[%s1 + $0x70] sm:$0xff]
    %v30 = vld [vmem:[%s1 + $0x78] sm:$0xff]
    %v47 = vunpack.c.l.b16 %v15
    %v48 = vunpack.c.h.b16 %v15
    %v49 = vunpack.c.l.b16 %v16
    %v50 = vunpack.c.h.b16 %v16
    %v51 = vunpack.c.l.b16 %v17
    %v52 = vunpack.c.h.b16 %v17
    %v53 = vunpack.c.l.b16 %v18
    %v54 = vunpack.c.h.b16 %v18
    %v55 = vunpack.c.l.b16 %v19
    %v56 = vunpack.c.h.b16 %v19
    %v57 = vunpack.c.l.b16 %v20
    %v58 = vunpack.c.h.b16 %v20
    %v59 = vunpack.c.l.b16 %v21
    %v60 = vunpack.c.h.b16 %v21
    %v61 = vunpack.c.l.b16 %v22
    %v62 = vunpack.c.h.b16 %v22
    %v63 = vunpack.c.l.b16 %v23
    %v64 = vunpack.c.h.b16 %v23
    %v65 = vunpack.c.l.b16 %v24
    %v66 = vunpack.c.h.b16 %v24
    %v67 = vunpack.c.l.b16 %v25
    %v68 = vunpack.c.h.b16 %v25
    %v69 = vunpack.c.l.b16 %v26
    %v70 = vunpack.c.h.b16 %v26
    %v71 = vunpack.c.l.b16 %v27
    %v72 = vunpack.c.h.b16 %v27
    %v73 = vunpack.c.l.b16 %v28
    %v74 = vunpack.c.h.b16 %v28
    %v75 = vunpack.c.l.b16 %v29
    %v76 = vunpack.c.h.b16 %v29
    %v77 = vunpack.c.l.b16 %v30
    %v78 = vunpack.c.h.b16 %v30
    %v79 = vpack.c.b16 %v49, %v47
    %v80 = vpack.c.b16 %v50, %v48
    %v81 = vpack.c.b16 %v53, %v51
    %v82 = vpack.c.b16 %v54, %v52
    %v83 = vpack.c.b16 %v57, %v55
    %v84 = vpack.c.b16 %v58, %v56
    %v85 = vpack.c.b16 %v61, %v59
    %v86 = vpack.c.b16 %v62, %v60
    %v87 = vpack.c.b16 %v65, %v63
    %v88 = vpack.c.b16 %v66, %v64
    %v89 = vpack.c.b16 %v69, %v67
    %v90 = vpack.c.b16 %v70, %v68
    %v91 = vpack.c.b16 %v73, %v71
    %v92 = vpack.c.b16 %v74, %v72
    %v93 = vpack.c.b16 %v77, %v75
    %v94 = vpack.c.b16 %v78, %v76
    %111 = vmatprep.subr.bf16.mxu0 %v80
    %112 = vmatpush1.bf16.msra.mxu0 %v79
    %113 = vmatprep.subr.bf16.mxu0 %v82
    %114 = vmatpush1.bf16.msra.mxu0 %v81
    %115 = vmatprep.subr.bf16.mxu0 %v84
    %116 = vmatpush1.bf16.msra.mxu0 %v83
    %117 = vmatprep.subr.bf16.mxu0 %v86
    %118 = vmatpush1.bf16.msra.mxu0 %v85
    %119 = vmatprep.subr.bf16.mxu0 %v88
    %120 = vmatpush1.bf16.msra.mxu0 %v87
    %121 = vmatprep.subr.bf16.mxu0 %v90
    %122 = vmatpush1.bf16.msra.mxu0 %v89
    %123 = vmatprep.subr.bf16.mxu0 %v92
    %124 = vmatpush1.bf16.msra.mxu0 %v91
    %125 = vmatprep.subr.bf16.mxu0 %v94
    %126 = vmatpush1.bf16.msra.mxu0 %v93
    %127 = vmatprep.subr.bf16.mxu0 0
    %128 = vmatpush1.bf16.msra.mxu0 0
    %129 = vmatprep.subr.bf16.mxu0 0
    %130 = vmatpush1.bf16.msra.mxu0 0
    %131 = vmatprep.subr.bf16.mxu0 0
    %132 = vmatpush1.bf16.msra.mxu0 0
    %133 = vmatprep.subr.bf16.mxu0 0
    %134 = vmatpush1.bf16.msra.mxu0 0
    %135 = vmatprep.subr.bf16.mxu0 0
    %136 = vmatpush1.bf16.msra.mxu0 0
    %137 = vmatprep.subr.bf16.mxu0 0
    %138 = vmatpush1.bf16.msra.mxu0 0
    %139 = vmatprep.subr.bf16.mxu0 0
    %140 = vmatpush1.bf16.msra.mxu0 0
    %141 = vmatprep.subr.bf16.mxu0 0
    %142 = vmatpush1.bf16.msra.mxu0 0
    %143 = vmatprep.mubr.bf16.mxu0 0
    %144 = vmatmul.mubr.bf16.gmra.mrb[0].mxu0 %v14
    %v145 = vpop.f32.mrb[0].mxu0
    %v146 = vadd.f32 0.0, %v145
    %v147 = vpop.f32.mrb[0].mxu0
    %v148 = vadd.f32 0.0, %v147
    %v149 = vpop.f32.mrb[0].mxu0
    %v150 = vpop.f32.mrb[0].mxu0
    %151 = vdwg.mxu0
    %v154 = vcombine.low %v146, %v148
    %v156 = vunpack.c.l.s4 1983009808
    %v157 = vunpack.c.0.s8 %v156
    %v158 = vlaneseq
    %v159 = vshrl.u32 %v158, 7
    %v160 = vsub.s32 %v157, %v159
    %v161 = vrot.slane %v154, %v160
    %163 = vst [vmem:[#allocation2] sm:$0xf] %v161
    // Predicated region
    $region10: #{forward.9} parent=1 // pred_check
      _
    $region11: #{forward.9} parent=1 // pred_check_branch
      %165 = sbr.rel (0) target = $region13
    $region12: #{forward.9} parent=1 // pred_region
      %s167 = ssub.s32 64, 64
      %168 = vsyncadd [#allocation3], %s167
      %s170 = sshll.u32 [#allocation2], 4
      %s171 = int_to_ptr.vmem [resolvable:$true] %s170
      %173 = dma.vmem_to_hbm [thread:$0]  %s171, 64, %s2, [#allocation3]
    $region13: #{forward.9} parent=1 // pred_fallthru
      _
    // Predicated region
    $region14: #{forward.9} parent=1 // pred_check
      _
    $region15: #{forward.9} parent=1 // pred_check_branch
      %175 = sbr.rel (0) target = $region17
    $region16: #{forward.9} parent=1 // pred_region
      %176 = dma.done [#allocation3], 64
    $region17: #{forward.9} parent=1 // pred_fallthru
      _
    %177 = vsyncpa [#allocation3], 1

// kernel: forward.7
$region0: #{forward.7}
  #allocation0 [shape = 'u32[]', space=smem, size = 0x4, offset = 0x4, fixed_abs, tag = 'smem constant byte address 0x4 - core index']
  #allocation1 [shape = 'u32[144,128]{1,0:T(1,128)}', space=vmem, size = 0x12000, scoped, tag = 'internal scratch']
  %s0 = inlined_call_operand.vmem [shape: bf16[2,102,128], index: 0, kind: input, shape index: {}]
  %s1 = inlined_call_operand.vmem [shape: bf16[1152,128], index: 1, kind: input, shape index: {}]
  %s2 = inlined_call_operand.vmem [shape: f32[1,128], index: 2, kind: input, shape index: {}, may-alias: {2,4}]
  %s3 = inlined_call_operand.vmem [shape: bf16[128,128], index: 3, kind: input, shape index: {}]
  %s4 = inlined_call_operand.vmem [shape: f32[1,128], index: 4, kind: input, shape index: {}, may-alias: {2,4}]
  %s5 = inlined_call_operand.vmem [shape: bf16[2,80,128], index: 5, kind: output, shape index: {}]
  %s6 = sld [smem:[#allocation0]]
  $region53: #{forward.7} parent=0
    _
  %s8 = ssub.s32 1, %s6
  %s9 = scalar_select 0, %s8, %s6
  loop: start=0, step=1, limit=4
  $region2: #{forward.7} parent=0 // loop_pre_header
    _
  $region3: #{forward.7} parent=0 // loop_header
    %s11 = sphi 0, %s15
    %p12 = scmp.ge.s32.totalorder %s11, 4
    %s21 = sphi 0, %s23
    %s24 = sphi 0, %s21
    %s25 = sphi 0, %s24
    %s41 = sphi 0, %s25
    %s45 = sphi 0, %s45
    %s47 = sphi 0, %s45
    %s48 = sphi 0, %s47
    %s62 = sphi 0, %s48
    %s66 = sphi 0, %s66
    %s68 = sphi 0, %s66
    %s69 = sphi 0, %s68
    %s83 = sphi 0, %s69
    %s87 = sphi 0, %s87
    %s89 = sphi 0, %s87
    %s90 = sphi 0, %s89
    %s104 = sphi 0, %s90
    %s108 = sphi 0, %s108
    %s110 = sphi 0, %s108
    %s111 = sphi 0, %s110
    %s125 = sphi 0, %s111
    %s131 = sphi 0, %s133
    %s134 = sphi 0, %s131
    %s135 = sphi 0, %s134
    %s151 = sphi 0, %s135
  $region4: #{forward.7} parent=0 // loop_header_branch
    %14 = sbr.rel (%p12) target = $region8
  $region5: #{forward.7} parent=0 // loop_body
    %s16 = ssub.s32 %s11, 1
    %s17 = ssub.s32 %s11, 2
    %s18 = sadd.s32 %s11, 1
    %s19 = ssub.s32 %s11, %s18
    %p20 = scmp.eq.s32.totalorder %s19, 0
    %s22 = sadd.s32 %s21, 1
    %s23 = scalar_select %p20, %s21, %s22
    %p26 = pneg %p20
    %p27 = scmp.eq.s32.totalorder %s11, 1
    %p28 = por %p26, %p27
    %p29 = scmp.ne.s32.totalorder %s21, %s24
    %p30 = scmp.eq.s32.totalorder %s11, 0
    %p31 = por %p29, %p30
    %p32 = scmp.ne.s32.totalorder %s21, %s24
    %p33 = scmp.eq.s32.totalorder %s16, 1
    %p34 = por %p32, %p33
    %p35 = scmp.ne.s32.totalorder %s24, %s25
    %p36 = scmp.eq.s32.totalorder %s16, 0
    %p37 = por %p35, %p36
    %p38 = scmp.ne.s32.totalorder %s24, %s25
    %p39 = scmp.eq.s32.totalorder %s17, 1
    %p40 = por %p38, %p39
    %p42 = scmp.ne.s32.totalorder %s25, %s41
    %p43 = scmp.eq.s32.totalorder %s17, 0
    %p44 = por %p42, %p43
    %s46 = sadd.s32 %s45, 1
    %p49 = scmp.eq.s32.totalorder %s11, 1
    %p50 = scmp.ne.s32.totalorder %s45, %s47
    %p51 = scmp.eq.s32.totalorder %s11, 0
    %p52 = por %p50, %p51
    %p53 = scmp.ne.s32.totalorder %s45, %s47
    %p54 = scmp.eq.s32.totalorder %s16, 1
    %p55 = por %p53, %p54
    %p56 = scmp.ne.s32.totalorder %s47, %s48
    %p57 = scmp.eq.s32.totalorder %s16, 0
    %p58 = por %p56, %p57
    %p59 = scmp.ne.s32.totalorder %s47, %s48
    %p60 = scmp.eq.s32.totalorder %s17, 1
    %p61 = por %p59, %p60
    %p63 = scmp.ne.s32.totalorder %s48, %s62
    %p64 = scmp.eq.s32.totalorder %s17, 0
    %p65 = por %p63, %p64
    %s67 = sadd.s32 %s66, 1
    %p70 = scmp.eq.s32.totalorder %s11, 1
    %p71 = scmp.ne.s32.totalorder %s66, %s68
    %p72 = scmp.eq.s32.totalorder %s11, 0
    %p73 = por %p71, %p72
    %p74 = scmp.ne.s32.totalorder %s66, %s68
    %p75 = scmp.eq.s32.totalorder %s16, 1
    %p76 = por %p74, %p75
    %p77 = scmp.ne.s32.totalorder %s68, %s69
    %p78 = scmp.eq.s32.totalorder %s16, 0
    %p79 = por %p77, %p78
    %p80 = scmp.ne.s32.totalorder %s68, %s69
    %p81 = scmp.eq.s32.totalorder %s17, 1
    %p82 = por %p80, %p81
    %p84 = scmp.ne.s32.totalorder %s69, %s83
    %p85 = scmp.eq.s32.totalorder %s17, 0
    %p86 = por %p84, %p85
    %s88 = sadd.s32 %s87, 1
    %p91 = scmp.eq.s32.totalorder %s11, 1
    %p92 = scmp.ne.s32.totalorder %s87, %s89
    %p93 = scmp.eq.s32.totalorder %s11, 0
    %p94 = por %p92, %p93
    %p95 = scmp.ne.s32.totalorder %s87, %s89
    %p96 = scmp.eq.s32.totalorder %s16, 1
    %p97 = por %p95, %p96
    %p98 = scmp.ne.s32.totalorder %s89, %s90
    %p99 = scmp.eq.s32.totalorder %s16, 0
    %p100 = por %p98, %p99
    %p101 = scmp.ne.s32.totalorder %s89, %s90
    %p102 = scmp.eq.s32.totalorder %s17, 1
    %p103 = por %p101, %p102
    %p105 = scmp.ne.s32.totalorder %s90, %s104
    %p106 = scmp.eq.s32.totalorder %s17, 0
    %p107 = por %p105, %p106
    %s109 = sadd.s32 %s108, 1
    %p112 = scmp.eq.s32.totalorder %s11, 1
    %p113 = scmp.ne.s32.totalorder %s108, %s110
    %p114 = scmp.eq.s32.totalorder %s11, 0
    %p115 = por %p113, %p114
    %p116 = scmp.ne.s32.totalorder %s108, %s110
    %p117 = scmp.eq.s32.totalorder %s16, 1
    %p118 = por %p116, %p117
    %p119 = scmp.ne.s32.totalorder %s110, %s111
    %p120 = scmp.eq.s32.totalorder %s16, 0
    %p121 = por %p119, %p120
    %p122 = scmp.ne.s32.totalorder %s110, %s111
    %p123 = scmp.eq.s32.totalorder %s17, 1
    %p124 = por %p122, %p123
    %p126 = scmp.ne.s32.totalorder %s111, %s125
    %p127 = scmp.eq.s32.totalorder %s17, 0
    %p128 = por %p126, %p127
    %s129 = ssub.s32 %s11, %s18
    %p130 = scmp.eq.s32.totalorder %s129, 0
    %s132 = sadd.s32 %s131, 1
    %s133 = scalar_select %p130, %s131, %s132
    %p136 = pneg %p130
    %p137 = scmp.eq.s32.totalorder %s11, 1
    %p138 = por %p136, %p137
    %p139 = scmp.ne.s32.totalorder %s131, %s134
    %p140 = scmp.eq.s32.totalorder %s11, 0
    %p141 = por %p139, %p140
    %p142 = scmp.ne.s32.totalorder %s131, %s134
    %p143 = scmp.eq.s32.totalorder %s16, 1
    %p144 = por %p142, %p143
    %p145 = scmp.ne.s32.totalorder %s134, %s135
    %p146 = scmp.eq.s32.totalorder %s16, 0
    %p147 = por %p145, %p146
    %p148 = scmp.ne.s32.totalorder %s134, %s135
    %p149 = scmp.eq.s32.totalorder %s17, 1
    %p150 = por %p148, %p149
    %p152 = scmp.ne.s32.totalorder %s135, %s151
    %p153 = scmp.eq.s32.totalorder %s17, 0
    %p154 = por %p152, %p153
    %p155 = scmp.le.s32.totalorder 1, %s11
    %p156 = scmp.lt.s32.totalorder %s11, 3
    %p157 = pnand %p155, %p156
    %p158 = pneg %p157
    // Predicated region
    $region9: #{forward.7} parent=5 // pred_check
      _
    $region10: #{forward.7} parent=5 // pred_check_branch
      %160 = sbr.rel (%p157) target = $region12
    $region11: #{forward.7} parent=5 // pred_region
      %s161 = ssub.s32 %s11, 1
      // Predicated region
      $region13: #{forward.7} parent=11 // pred_check
        %p162 = pneg %p58
      $region14: #{forward.7} parent=11 // pred_check_branch
        %164 = sbr.rel (%p162) target = $region16
      $region15: #{forward.7} parent=11 // pred_region
        _
      $region16: #{forward.7} parent=11 // pred_fallthru
        _
      // Predicated region
      $region17: #{forward.7} parent=11 // pred_check
        %p165 = pneg %p79
      $region18: #{forward.7} parent=11 // pred_check_branch
        %167 = sbr.rel (%p165) target = $region20
      $region19: #{forward.7} parent=11 // pred_region
        _
      $region20: #{forward.7} parent=11 // pred_fallthru
        _
      // Predicated region
      $region21: #{forward.7} parent=11 // pred_check
        %p168 = pneg %p100
      $region22: #{forward.7} parent=11 // pred_check_branch
        %170 = sbr.rel (%p168) target = $region24
      $region23: #{forward.7} parent=11 // pred_region
        _
      $region24: #{forward.7} parent=11 // pred_fallthru
        _
      // Predicated region
      $region25: #{forward.7} parent=11 // pred_check
        %p171 = pneg %p121
      $region26: #{forward.7} parent=11 // pred_check_branch
        %173 = sbr.rel (%p171) target = $region28
      $region27: #{forward.7} parent=11 // pred_region
        _
      $region28: #{forward.7} parent=11 // pred_fallthru
        _
    $region12: #{forward.7} parent=5 // pred_fallthru
      _
    %p174 = scmp.lt.s32.totalorder %s11, 2
    // Predicated region
    $region29: #{forward.7} parent=5 // pred_check
      %p175 = pneg %p174
    $region30: #{forward.7} parent=5 // pred_check_branch
      %177 = sbr.rel (%p175) target = $region32
    $region31: #{forward.7} parent=5 // pred_region
      // Predicated region
      $region33: #{forward.7} parent=31 // pred_check
        %p178 = pneg %p31
      $region34: #{forward.7} parent=31 // pred_check_branch
        %180 = sbr.rel (%p178) target = $region36
      $region35: #{forward.7} parent=31 // pred_region
        %p181 = scmp.lt.s32.totalorder %s11, 1
        %s182 = scalar_select %p181, %s11, 1
        %s183 = smul.addr %s182, 13
        %s184 = smul.addr %s183, 4
        %s185 = scalar_lea.vmem %s0, %s184
      $region36: #{forward.7} parent=31 // pred_fallthru
        _
    $region32: #{forward.7} parent=5 // pred_fallthru
      _
    %p186 = scmp.le.s32.totalorder 1, %s11
    %p187 = scmp.lt.s32.totalorder %s11, 3
    %p188 = pnand %p186, %p187
    %p189 = pneg %p188
    // Predicated region
    $region37: #{forward.7} parent=5 // pred_check
      _
    $region38: #{forward.7} parent=5 // pred_check_branch
      %191 = sbr.rel (%p188) target = $region40
    $region39: #{forward.7} parent=5 // pred_region
      %s192 = ssub.s32 %s11, 1
      %p193 = scmp.lt.s32.totalorder %s16, 1
      %s194 = scalar_select %p193, %s16, 1
      %s195 = smul.addr %s194, 13
      %s196 = smul.addr %s195, 4
      %s197 = scalar_lea.vmem %s0, %s196
      %p198 = pneg %p37
      %p199 = pneg %p34
      %p200 = pneg %p58
      %p201 = pneg %p55
      %p202 = pneg %p79
      %p203 = pneg %p76
      %p204 = pneg %p100
      %p205 = pneg %p97
      %p206 = pneg %p121
      %p207 = pneg %p118
      %p208 = pneg %p147
      %p209 = pneg %p144
      %p210 = scmp.lt.s32.totalorder %s16, 1
      %s211 = scalar_select %p210, %s16, 1
      %s212 = smul.addr %s211, 10
      %s213 = smul.addr %s212, 4
      %s214 = scalar_lea.vmem %s5, %s213
      %p215 = scmp.lt.s32.totalorder %s16, 1
      %s216 = scalar_select %p215, %s16, 1
      %s217 = smul.addr %s216, 13
      %s218 = smul.addr %s217, 4
      %s219 = scalar_lea.vmem %s0, %s218
      %p220 = scmp.lt.s32.totalorder %s16, 1
      %s221 = scalar_select %p220, %s16, 1
      %s222 = smul.addr %s221, 10
      %s223 = smul.addr %s222, 4
      %s224 = scalar_lea.vmem %s5, %s223
      %v226 = vld [vmem:[%s219] sm:$0xf]
      %v227 = vld [vmem:[%s219 + $0x4] sm:$0xf]
      %v228 = vld [vmem:[%s219 + $0x8] sm:$0xf]
      %v229 = vld [vmem:[%s219 + $0xc] sm:$0xf]
      %v230 = vld [vmem:[%s219 + $0x10] sm:$0xf]
      %v231 = vld [vmem:[%s219 + $0x14] sm:$0xf]
      %v232 = vld [vmem:[%s219 + $0x18] sm:$0xf]
      %v233 = vld [vmem:[%s219 + $0x1c] sm:$0xf]
      %v234 = vld [vmem:[%s219 + $0x20] sm:$0xf]
      %v235 = vld [vmem:[%s219 + $0x24] sm:$0xf]
      %v236 = vld [vmem:[%s219 + $0x28] sm:$0xf]
      %v237 = vld [vmem:[%s219 + $0x2c] sm:$0xf]
      %v238 = vld [vmem:[%s219 + $0x30] sm:$0x7]
      %v239 = vunpack.c.l.bf16 %v226
      %v240 = vunpack.c.l.bf16 %v227
      %v241 = vunpack.c.l.bf16 %v228
      %v242 = vunpack.c.l.bf16 %v229
      %v243 = vunpack.c.l.bf16 %v230
      %v244 = vunpack.c.l.bf16 %v231
      %v245 = vunpack.c.l.bf16 %v232
      %v246 = vunpack.c.l.bf16 %v233
      %v247 = vunpack.c.l.bf16 %v234
      %v248 = vunpack.c.l.bf16 %v235
      %v249 = vunpack.c.l.bf16 %v236
      %v250 = vunpack.c.l.bf16 %v237
      %v251 = vunpack.c.l.bf16 %v238
      %v252 = vpack.c.bf16 %v240, %v239
      %v253 = vpack.c.bf16 %v242, %v241
      %v254 = vpack.c.bf16 %v244, %v243
      %v255 = vpack.c.bf16 %v246, %v245
      %v256 = vpack.c.bf16 %v248, %v247
      %v257 = vpack.c.bf16 %v249, %v249
      %v258 = vpack.c.bf16 %v241, %v240
      %v259 = vpack.c.bf16 %v243, %v242
      %v260 = vpack.c.bf16 %v245, %v244
      %v261 = vpack.c.bf16 %v247, %v246
      %v262 = vpack.c.bf16 %v249, %v248
      %v263 = vpack.c.bf16 %v250, %v250
      %v264 = vpack.c.bf16 %v250, %v249
      %v265 = vpack.c.bf16 %v251, %v251
      %vm266 = vsmask.f32 7424
      %v268 = vshrl.u32 %v252, 16
      %v270 = vshll.u32 %v252, 16
      %v272 = vrot.slane %v270, 1
      %v273 = vor.u32 %v268, %v272
      %v275 = vshll.u32 %v253, 16
      %v277 = vrot.slane %v275, 1
      %v278 = vsel %vm266, %v273, %v277
      %v279 = vshrl.u32 %v253, 16
      %v281 = vor.u32 %v279, %v277
      %v283 = vshll.u32 %v254, 16
      %v285 = vrot.slane %v283, 1
      %v286 = vsel %vm266, %v281, %v285
      %v287 = vshrl.u32 %v254, 16
      %v289 = vor.u32 %v287, %v285
      %v291 = vshll.u32 %v255, 16
      %v293 = vrot.slane %v291, 1
      %v294 = vsel %vm266, %v289, %v293
      %v295 = vshrl.u32 %v255, 16
      %v297 = vor.u32 %v295, %v293
      %v299 = vshll.u32 %v256, 16
      %v301 = vrot.slane %v299, 1
      %v302 = vsel %vm266, %v297, %v301
      %v303 = vshrl.u32 %v256, 16
      %v305 = vor.u32 %v303, %v301
      %v307 = vshll.u32 %v257, 16
      %v309 = vrot.slane %v307, 1
      %v310 = vsel %vm266, %v305, %v309
      %vm322 = vcmask 1046528
      %v323 = vrot.slane %v252, 1
      %v324 = vrot.slane %v253, 1
      %v325 = vsel %vm322, %v323, %v324
      %v326 = vrot.slane %v254, 1
      %v327 = vsel %vm322, %v324, %v326
      %v328 = vrot.slane %v255, 1
      %v329 = vsel %vm322, %v326, %v328
      %v330 = vrot.slane %v256, 1
      %v331 = vsel %vm322, %v328, %v330
      %v332 = vrot.slane %v257, 1
      %v333 = vsel %vm322, %v330, %v332
      %v345 = vrot.slane %v258, 1
      %v346 = vrot.slane %v259, 1
      %v347 = vsel %vm322, %v345, %v346
      %v348 = vrot.slane %v260, 1
      %v349 = vsel %vm322, %v346, %v348
      %v350 = vrot.slane %v261, 1
      %v351 = vsel %vm322, %v348, %v350
      %v352 = vrot.slane %v262, 1
      %v353 = vsel %vm322, %v350, %v352
      %v354 = vrot.slane %v263, 1
      %v355 = vsel %vm322, %v352, %v354
      %vm361 = vsmask.f32 6400
      %v363 = vshrl.u32 %v258, 16
      %v365 = vrot.slane %v363, 1
      %v366 = vshll.u32 %v258, 16
      %v368 = vrot.slane %v366, 2
      %v369 = vor.u32 %v365, %v368
      %v371 = vshrl.u32 %v259, 16
      %v373 = vrot.slane %v371, 1
      %v374 = vshll.u32 %v259, 16
      %v376 = vrot.slane %v374, 2
      %v377 = vor.u32 %v373, %v376
      %v378 = vsel %vm361, %v369, %v377
      %v380 = vshrl.u32 %v260, 16
      %v382 = vrot.slane %v380, 1
      %v383 = vshll.u32 %v260, 16
      %v385 = vrot.slane %v383, 2
      %v386 = vor.u32 %v382, %v385
      %v387 = vsel %vm361, %v377, %v386
      %v389 = vshrl.u32 %v261, 16
      %v391 = vrot.slane %v389, 1
      %v392 = vshll.u32 %v261, 16
      %v394 = vrot.slane %v392, 2
      %v395 = vor.u32 %v391, %v394
      %v396 = vsel %vm361, %v386, %v395
      %v398 = vshrl.u32 %v262, 16
      %v400 = vrot.slane %v398, 1
      %v401 = vshll.u32 %v262, 16
      %v403 = vrot.slane %v401, 2
      %v404 = vor.u32 %v400, %v403
      %v405 = vsel %vm361, %v395, %v404
      %v407 = vshrl.u32 %v263, 16
      %v409 = vrot.slane %v407, 1
      %v410 = vshll.u32 %v263, 16
      %v412 = vrot.slane %v410, 2
      %v413 = vor.u32 %v409, %v412
      %v414 = vsel %vm361, %v404, %v413
      %vm420 = vcmask 1045504
      %v421 = vrot.slane %v258, 2
      %v422 = vrot.slane %v259, 2
      %v423 = vsel %vm420, %v421, %v422
      %v424 = vrot.slane %v260, 2
      %v425 = vsel %vm420, %v422, %v424
      %v426 = vrot.slane %v261, 2
      %v427 = vsel %vm420, %v424, %v426
      %v428 = vrot.slane %v262, 2
      %v429 = vsel %vm420, %v426, %v428
      %v430 = vrot.slane %v263, 2
      %v431 = vsel %vm420, %v428, %v430
      %v439 = vrot.slane %v253, 2
      %v440 = vrot.slane %v254, 2
      %v441 = vsel %vm420, %v439, %v440
      %v442 = vrot.slane %v255, 2
      %v443 = vsel %vm420, %v440, %v442
      %v444 = vrot.slane %v256, 2
      %v445 = vsel %vm420, %v442, %v444
      %v446 = vrot.slane %v264, 2
      %v447 = vsel %vm420, %v444, %v446
      %v448 = vrot.slane %v265, 2
      %v449 = vsel %vm420, %v446, %v448
      %vm455 = vsmask.f32 5376
      %v456 = vrot.slane %v279, 2
      %v457 = vrot.slane %v275, 3
      %v458 = vor.u32 %v456, %v457
      %v459 = vrot.slane %v287, 2
      %v460 = vrot.slane %v283, 3
      %v461 = vor.u32 %v459, %v460
      %v462 = vsel %vm455, %v458, %v461
      %v463 = vrot.slane %v295, 2
      %v464 = vrot.slane %v291, 3
      %v465 = vor.u32 %v463, %v464
      %v466 = vsel %vm455, %v461, %v465
      %v467 = vrot.slane %v303, 2
      %v468 = vrot.slane %v299, 3
      %v469 = vor.u32 %v467, %v468
      %v470 = vsel %vm455, %v465, %v469
      %v472 = vshrl.u32 %v264, 16
      %v474 = vrot.slane %v472, 2
      %v475 = vshll.u32 %v264, 16
      %v477 = vrot.slane %v475, 3
      %v478 = vor.u32 %v474, %v477
      %v479 = vsel %vm455, %v469, %v478
      %v481 = vshrl.u32 %v265, 16
      %v483 = vrot.slane %v481, 2
      %v484 = vshll.u32 %v265, 16
      %v486 = vrot.slane %v484, 3
      %v487 = vor.u32 %v483, %v486
      %v488 = vsel %vm455, %v478, %v487
      %vm494 = vcmask 1044480
      %v495 = vrot.slane %v253, 3
      %v496 = vrot.slane %v254, 3
      %v497 = vsel %vm494, %v495, %v496
      %v498 = vrot.slane %v255, 3
      %v499 = vsel %vm494, %v496, %v498
      %v500 = vrot.slane %v256, 3
      %v501 = vsel %vm494, %v498, %v500
      %v502 = vrot.slane %v264, 3
      %v503 = vsel %vm494, %v500, %v502
      %v504 = vrot.slane %v265, 3
      %v505 = vsel %vm494, %v502, %v504
      %v511 = vld [vmem:[%s1] sm:$0xf]
      %v512 = vld [vmem:[%s1 + $0x4] sm:$0xf]
      %v513 = vld [vmem:[%s1 + $0x8] sm:$0xf]
      %v514 = vld [vmem:[%s1 + $0xc] sm:$0xf]
      %v515 = vld [vmem:[%s1 + $0x10] sm:$0xf]
      %v516 = vld [vmem:[%s1 + $0x14] sm:$0xf]
      %v517 = vld [vmem:[%s1 + $0x18] sm:$0xf]
      %v518 = vld [vmem:[%s1 + $0x1c] sm:$0xf]
      %v519 = vld [vmem:[%s1 + $0x20] sm:$0xf]
      %v520 = vld [vmem:[%s1 + $0x24] sm:$0xf]
      %v521 = vld [vmem:[%s1 + $0x28] sm:$0xf]
      %v522 = vld [vmem:[%s1 + $0x2c] sm:$0xf]
      %v523 = vld [vmem:[%s1 + $0x30] sm:$0xf]
      %v524 = vld [vmem:[%s1 + $0x34] sm:$0xf]
      %v525 = vld [vmem:[%s1 + $0x38] sm:$0xf]
      %v526 = vld [vmem:[%s1 + $0x3c] sm:$0xf]
      %v527 = vld [vmem:[%s1 + $0x40] sm:$0xf]
      %v528 = vld [vmem:[%s1 + $0x44] sm:$0xf]
      %v529 = vld [vmem:[%s1 + $0x48] sm:$0xf]
      %v530 = vld [vmem:[%s1 + $0x4c] sm:$0xf]
      %v531 = vld [vmem:[%s1 + $0x50] sm:$0xf]
      %v532 = vld [vmem:[%s1 + $0x54] sm:$0xf]
      %v533 = vld [vmem:[%s1 + $0x58] sm:$0xf]
      %v534 = vld [vmem:[%s1 + $0x5c] sm:$0xf]
      %v535 = vld [vmem:[%s1 + $0x60] sm:$0xf]
      %v536 = vld [vmem:[%s1 + $0x64] sm:$0xf]
      %v537 = vld [vmem:[%s1 + $0x68] sm:$0xf]
      %v538 = vld [vmem:[%s1 + $0x6c] sm:$0xf]
      %v539 = vld [vmem:[%s1 + $0x70] sm:$0xf]
      %v540 = vld [vmem:[%s1 + $0x74] sm:$0xf]
      %v541 = vld [vmem:[%s1 + $0x78] sm:$0xf]
      %v542 = vld [vmem:[%s1 + $0x7c] sm:$0xf]
      %v543 = vld [vmem:[%s1 + $0x80] sm:$0xf]
      %v544 = vld [vmem:[%s1 + $0x84] sm:$0xf]
      %v545 = vld [vmem:[%s1 + $0x88] sm:$0xf]
      %v546 = vld [vmem:[%s1 + $0x8c] sm:$0xf]
      %v547 = vld [vmem:[%s1 + $0x90] sm:$0xf]
      %v548 = vld [vmem:[%s1 + $0x94] sm:$0xf]
      %v549 = vld [vmem:[%s1 + $0x98] sm:$0xf]
      %v550 = vld [vmem:[%s1 + $0x9c] sm:$0xf]
      %v551 = vld [vmem:[%s1 + $0xa0] sm:$0xf]
      %v552 = vld [vmem:[%s1 + $0xa4] sm:$0xf]
      %v553 = vld [vmem:[%s1 + $0xa8] sm:$0xf]
      %v554 = vld [vmem:[%s1 + $0xac] sm:$0xf]
      %v555 = vld [vmem:[%s1 + $0xb0] sm:$0xf]
      %v556 = vld [vmem:[%s1 + $0xb4] sm:$0xf]
      %v557 = vld [vmem:[%s1 + $0xb8] sm:$0xf]
      %v558 = vld [vmem:[%s1 + $0xbc] sm:$0xf]
      %v559 = vld [vmem:[%s1 + $0xc0] sm:$0xf]
      %v560 = vld [vmem:[%s1 + $0xc4] sm:$0xf]
      %v561 = vld [vmem:[%s1 + $0xc8] sm:$0xf]
      %v562 = vld [vmem:[%s1 + $0xcc] sm:$0xf]
      %v563 = vld [vmem:[%s1 + $0xd0] sm:$0xf]
      %v564 = vld [vmem:[%s1 + $0xd4] sm:$0xf]
      %v565 = vld [vmem:[%s1 + $0xd8] sm:$0xf]
      %v566 = vld [vmem:[%s1 + $0xdc] sm:$0xf]
      %v567 = vld [vmem:[%s1 + $0xe0] sm:$0xf]
      %v568 = vld [vmem:[%s1 + $0xe4] sm:$0xf]
      %v569 = vld [vmem:[%s1 + $0xe8] sm:$0xf]
      %v570 = vld [vmem:[%s1 + $0xec] sm:$0xf]
      %v571 = vld [vmem:[%s1 + $0xf0] sm:$0xf]
      %v572 = vld [vmem:[%s1 + $0xf4] sm:$0xf]
      %v573 = vld [vmem:[%s1 + $0xf8] sm:$0xf]
      %v574 = vld [vmem:[%s1 + $0xfc] sm:$0xf]
      %v575 = vld [vmem:[%s1 + $0x100] sm:$0xf]
      %v576 = vld [vmem:[%s1 + $0x104] sm:$0xf]
      %v577 = vld [vmem:[%s1 + $0x108] sm:$0xf]
      %v578 = vld [vmem:[%s1 + $0x10c] sm:$0xf]
      %v579 = vld [vmem:[%s1 + $0x110] sm:$0xf]
      %v580 = vld [vmem:[%s1 + $0x114] sm:$0xf]
      %v581 = vld [vmem:[%s1 + $0x118] sm:$0xf]
      %v582 = vld [vmem:[%s1 + $0x11c] sm:$0xf]
      %v583 = vld [vmem:[%s1 + $0x120] sm:$0xf]
      %v584 = vld [vmem:[%s1 + $0x124] sm:$0xf]
      %v585 = vld [vmem:[%s1 + $0x128] sm:$0xf]
      %v586 = vld [vmem:[%s1 + $0x12c] sm:$0xf]
      %v587 = vld [vmem:[%s1 + $0x130] sm:$0xf]
      %v588 = vld [vmem:[%s1 + $0x134] sm:$0xf]
      %v589 = vld [vmem:[%s1 + $0x138] sm:$0xf]
      %v590 = vld [vmem:[%s1 + $0x13c] sm:$0xf]
      %v591 = vld [vmem:[%s1 + $0x140] sm:$0xf]
      %v592 = vld [vmem:[%s1 + $0x144] sm:$0xf]
      %v593 = vld [vmem:[%s1 + $0x148] sm:$0xf]
      %v594 = vld [vmem:[%s1 + $0x14c] sm:$0xf]
      %v595 = vld [vmem:[%s1 + $0x150] sm:$0xf]
      %v596 = vld [vmem:[%s1 + $0x154] sm:$0xf]
      %v597 = vld [vmem:[%s1 + $0x158] sm:$0xf]
      %v598 = vld [vmem:[%s1 + $0x15c] sm:$0xf]
      %v599 = vld [vmem:[%s1 + $0x160] sm:$0xf]
      %v600 = vld [vmem:[%s1 + $0x164] sm:$0xf]
      %v601 = vld [vmem:[%s1 + $0x168] sm:$0xf]
      %v602 = vld [vmem:[%s1 + $0x16c] sm:$0xf]
      %v603 = vld [vmem:[%s1 + $0x170] sm:$0xf]
      %v604 = vld [vmem:[%s1 + $0x174] sm:$0xf]
      %v605 = vld [vmem:[%s1 + $0x178] sm:$0xf]
      %v606 = vld [vmem:[%s1 + $0x17c] sm:$0xf]
      %v607 = vld [vmem:[%s1 + $0x180] sm:$0xf]
      %v608 = vld [vmem:[%s1 + $0x184] sm:$0xf]
      %v609 = vld [vmem:[%s1 + $0x188] sm:$0xf]
      %v610 = vld [vmem:[%s1 + $0x18c] sm:$0xf]
      %v611 = vld [vmem:[%s1 + $0x190] sm:$0xf]
      %v612 = vld [vmem:[%s1 + $0x194] sm:$0xf]
      %v613 = vld [vmem:[%s1 + $0x198] sm:$0xf]
      %v614 = vld [vmem:[%s1 + $0x19c] sm:$0xf]
      %v615 = vld [vmem:[%s1 + $0x1a0] sm:$0xf]
      %v616 = vld [vmem:[%s1 + $0x1a4] sm:$0xf]
      %v617 = vld [vmem:[%s1 + $0x1a8] sm:$0xf]
      %v618 = vld [vmem:[%s1 + $0x1ac] sm:$0xf]
      %v619 = vld [vmem:[%s1 + $0x1b0] sm:$0xf]
      %v620 = vld [vmem:[%s1 + $0x1b4] sm:$0xf]
      %v621 = vld [vmem:[%s1 + $0x1b8] sm:$0xf]
      %v622 = vld [vmem:[%s1 + $0x1bc] sm:$0xf]
      %v623 = vld [vmem:[%s1 + $0x1c0] sm:$0xf]
      %v624 = vld [vmem:[%s1 + $0x1c4] sm:$0xf]
      %v625 = vld [vmem:[%s1 + $0x1c8] sm:$0xf]
      %v626 = vld [vmem:[%s1 + $0x1cc] sm:$0xf]
      %v627 = vld [vmem:[%s1 + $0x1d0] sm:$0xf]
      %v628 = vld [vmem:[%s1 + $0x1d4] sm:$0xf]
      %v629 = vld [vmem:[%s1 + $0x1d8] sm:$0xf]
      %v630 = vld [vmem:[%s1 + $0x1dc] sm:$0xf]
      %v631 = vld [vmem:[%s1 + $0x1e0] sm:$0xf]
      %v632 = vld [vmem:[%s1 + $0x1e4] sm:$0xf]
      %v633 = vld [vmem:[%s1 + $0x1e8] sm:$0xf]
      %v634 = vld [vmem:[%s1 + $0x1ec] sm:$0xf]
      %v635 = vld [vmem:[%s1 + $0x1f0] sm:$0xf]
      %v636 = vld [vmem:[%s1 + $0x1f4] sm:$0xf]
      %v637 = vld [vmem:[%s1 + $0x1f8] sm:$0xf]
      %v638 = vld [vmem:[%s1 + $0x1fc] sm:$0xf]
      %v639 = vld [vmem:[%s1 + $0x200] sm:$0xf]
      %v640 = vld [vmem:[%s1 + $0x204] sm:$0xf]
      %v641 = vld [vmem:[%s1 + $0x208] sm:$0xf]
      %v642 = vld [vmem:[%s1 + $0x20c] sm:$0xf]
      %v643 = vld [vmem:[%s1 + $0x210] sm:$0xf]
      %v644 = vld [vmem:[%s1 + $0x214] sm:$0xf]
      %v645 = vld [vmem:[%s1 + $0x218] sm:$0xf]
      %v646 = vld [vmem:[%s1 + $0x21c] sm:$0xf]
      %v647 = vld [vmem:[%s1 + $0x220] sm:$0xf]
      %v648 = vld [vmem:[%s1 + $0x224] sm:$0xf]
      %v649 = vld [vmem:[%s1 + $0x228] sm:$0xf]
      %v650 = vld [vmem:[%s1 + $0x22c] sm:$0xf]
      %v651 = vld [vmem:[%s1 + $0x230] sm:$0xf]
      %v652 = vld [vmem:[%s1 + $0x234] sm:$0xf]
      %v653 = vld [vmem:[%s1 + $0x238] sm:$0xf]
      %v654 = vld [vmem:[%s1 + $0x23c] sm:$0xf]
      %v655 = vld [vmem:[%s2] sm:$0x1]
      %v657 = vlaneseq
      %v658 = vshrl.u32 %v657, 7
      %v659 = vsub.s32 0, %v658
      %v660 = vrot.slane %v655, %v659
      %v806 = vunpack.c.l.b16 %v511
      %v807 = vunpack.c.l.b16 %v512
      %v808 = vunpack.c.l.b16 %v513
      %v809 = vunpack.c.l.b16 %v514
      %v810 = vunpack.c.l.b16 %v515
      %v811 = vunpack.c.l.b16 %v516
      %v812 = vunpack.c.l.b16 %v517
      %v813 = vunpack.c.l.b16 %v518
      %v814 = vunpack.c.l.b16 %v519
      %v815 = vunpack.c.l.b16 %v520
      %v816 = vunpack.c.l.b16 %v521
      %v817 = vunpack.c.l.b16 %v522
      %v818 = vunpack.c.l.b16 %v523
      %v819 = vunpack.c.l.b16 %v524
      %v820 = vunpack.c.l.b16 %v525
      %v821 = vunpack.c.l.b16 %v526
      %v822 = vunpack.c.l.b16 %v527
      %v823 = vunpack.c.l.b16 %v528
      %v824 = vunpack.c.l.b16 %v529
      %v825 = vunpack.c.l.b16 %v530
      %v826 = vunpack.c.l.b16 %v531
      %v827 = vunpack.c.l.b16 %v532
      %v828 = vunpack.c.l.b16 %v533
      %v829 = vunpack.c.l.b16 %v534
      %v830 = vunpack.c.l.b16 %v535
      %v831 = vunpack.c.l.b16 %v536
      %v832 = vunpack.c.l.b16 %v537
      %v833 = vunpack.c.l.b16 %v538
      %v834 = vunpack.c.l.b16 %v539
      %v835 = vunpack.c.l.b16 %v540
      %v836 = vunpack.c.l.b16 %v541
      %v837 = vunpack.c.l.b16 %v542
      %v838 = vunpack.c.l.b16 %v543
      %v839 = vunpack.c.l.b16 %v544
      %v840 = vunpack.c.l.b16 %v545
      %v841 = vunpack.c.l.b16 %v546
      %v842 = vunpack.c.l.b16 %v547
      %v843 = vunpack.c.l.b16 %v548
      %v844 = vunpack.c.l.b16 %v549
      %v845 = vunpack.c.l.b16 %v550
      %v846 = vunpack.c.l.b16 %v551
      %v847 = vunpack.c.l.b16 %v552
      %v848 = vunpack.c.l.b16 %v553
      %v849 = vunpack.c.l.b16 %v554
      %v850 = vunpack.c.l.b16 %v555
      %v851 = vunpack.c.l.b16 %v556
      %v852 = vunpack.c.l.b16 %v557
      %v853 = vunpack.c.l.b16 %v558
      %v854 = vunpack.c.l.b16 %v559
      %v855 = vunpack.c.l.b16 %v560
      %v856 = vunpack.c.l.b16 %v561
      %v857 = vunpack.c.l.b16 %v562
      %v858 = vunpack.c.l.b16 %v563
      %v859 = vunpack.c.l.b16 %v564
      %v860 = vunpack.c.l.b16 %v565
      %v861 = vunpack.c.l.b16 %v566
      %v862 = vunpack.c.l.b16 %v567
      %v863 = vunpack.c.l.b16 %v568
      %v864 = vunpack.c.l.b16 %v569
      %v865 = vunpack.c.l.b16 %v570
      %v866 = vunpack.c.l.b16 %v571
      %v867 = vunpack.c.l.b16 %v572
      %v868 = vunpack.c.l.b16 %v573
      %v869 = vunpack.c.l.b16 %v574
      %v870 = vunpack.c.l.b16 %v575
      %v871 = vunpack.c.l.b16 %v576
      %v872 = vunpack.c.l.b16 %v577
      %v873 = vunpack.c.l.b16 %v578
      %v874 = vunpack.c.l.b16 %v579
      %v875 = vunpack.c.l.b16 %v580
      %v876 = vunpack.c.l.b16 %v581
      %v877 = vunpack.c.l.b16 %v582
      %v878 = vunpack.c.l.b16 %v583
      %v879 = vunpack.c.l.b16 %v584
      %v880 = vunpack.c.l.b16 %v585
      %v881 = vunpack.c.l.b16 %v586
      %v882 = vunpack.c.l.b16 %v587
      %v883 = vunpack.c.l.b16 %v588
      %v884 = vunpack.c.l.b16 %v589
      %v885 = vunpack.c.l.b16 %v590
      %v886 = vunpack.c.l.b16 %v591
      %v887 = vunpack.c.l.b16 %v592
      %v888 = vunpack.c.l.b16 %v593
      %v889 = vunpack.c.l.b16 %v594
      %v890 = vunpack.c.l.b16 %v595
      %v891 = vunpack.c.l.b16 %v596
      %v892 = vunpack.c.l.b16 %v597
      %v893 = vunpack.c.l.b16 %v598
      %v894 = vunpack.c.l.b16 %v599
      %v895 = vunpack.c.l.b16 %v600
      %v896 = vunpack.c.l.b16 %v601
      %v897 = vunpack.c.l.b16 %v602
      %v898 = vunpack.c.l.b16 %v603
      %v899 = vunpack.c.l.b16 %v604
      %v900 = vunpack.c.l.b16 %v605
      %v901 = vunpack.c.l.b16 %v606
      %v902 = vunpack.c.l.b16 %v607
      %v903 = vunpack.c.l.b16 %v608
      %v904 = vunpack.c.l.b16 %v609
      %v905 = vunpack.c.l.b16 %v610
      %v906 = vunpack.c.l.b16 %v611
      %v907 = vunpack.c.l.b16 %v612
      %v908 = vunpack.c.l.b16 %v613
      %v909 = vunpack.c.l.b16 %v614
      %v910 = vunpack.c.l.b16 %v615
      %v911 = vunpack.c.l.b16 %v616
      %v912 = vunpack.c.l.b16 %v617
      %v913 = vunpack.c.l.b16 %v618
      %v914 = vunpack.c.l.b16 %v619
      %v915 = vunpack.c.l.b16 %v620
      %v916 = vunpack.c.l.b16 %v621
      %v917 = vunpack.c.l.b16 %v622
      %v918 = vunpack.c.l.b16 %v623
      %v919 = vunpack.c.l.b16 %v624
      %v920 = vunpack.c.l.b16 %v625
      %v921 = vunpack.c.l.b16 %v626
      %v922 = vunpack.c.l.b16 %v627
      %v923 = vunpack.c.l.b16 %v628
      %v924 = vunpack.c.l.b16 %v629
      %v925 = vunpack.c.l.b16 %v630
      %v926 = vunpack.c.l.b16 %v631
      %v927 = vunpack.c.l.b16 %v632
      %v928 = vunpack.c.l.b16 %v633
      %v929 = vunpack.c.l.b16 %v634
      %v930 = vunpack.c.l.b16 %v635
      %v931 = vunpack.c.l.b16 %v636
      %v932 = vunpack.c.l.b16 %v637
      %v933 = vunpack.c.l.b16 %v638
      %v934 = vunpack.c.l.b16 %v639
      %v935 = vunpack.c.l.b16 %v640
      %v936 = vunpack.c.l.b16 %v641
      %v937 = vunpack.c.l.b16 %v642
      %v938 = vunpack.c.l.b16 %v643
      %v939 = vunpack.c.l.b16 %v644
      %v940 = vunpack.c.l.b16 %v645
      %v941 = vunpack.c.l.b16 %v646
      %v942 = vunpack.c.l.b16 %v647
      %v943 = vunpack.c.l.b16 %v648
      %v944 = vunpack.c.l.b16 %v649
      %v945 = vunpack.c.l.b16 %v650
      %v946 = vunpack.c.l.b16 %v651
      %v947 = vunpack.c.l.b16 %v652
      %v948 = vunpack.c.l.b16 %v653
      %v949 = vunpack.c.l.b16 %v654
      %v950 = vpack.c.b16 %v807, %v806
      %v951 = vpack.c.b16 %v809, %v808
      %v952 = vpack.c.b16 %v811, %v810
      %v953 = vpack.c.b16 %v813, %v812
      %v954 = vpack.c.b16 %v815, %v814
      %v955 = vpack.c.b16 %v817, %v816
      %v956 = vpack.c.b16 %v819, %v818
      %v957 = vpack.c.b16 %v821, %v820
      %v958 = vpack.c.b16 %v823, %v822
      %v959 = vpack.c.b16 %v825, %v824
      %v960 = vpack.c.b16 %v827, %v826
      %v961 = vpack.c.b16 %v829, %v828
      %v962 = vpack.c.b16 %v831, %v830
      %v963 = vpack.c.b16 %v833, %v832
      %v964 = vpack.c.b16 %v835, %v834
      %v965 = vpack.c.b16 %v837, %v836
      %v966 = vpack.c.b16 %v839, %v838
      %v967 = vpack.c.b16 %v841, %v840
      %v968 = vpack.c.b16 %v843, %v842
      %v969 = vpack.c.b16 %v845, %v844
      %v970 = vpack.c.b16 %v847, %v846
      %v971 = vpack.c.b16 %v849, %v848
      %v972 = vpack.c.b16 %v851, %v850
      %v973 = vpack.c.b16 %v853, %v852
      %v974 = vpack.c.b16 %v855, %v854
      %v975 = vpack.c.b16 %v857, %v856
      %v976 = vpack.c.b16 %v859, %v858
      %v977 = vpack.c.b16 %v861, %v860
      %v978 = vpack.c.b16 %v863, %v862
      %v979 = vpack.c.b16 %v865, %v864
      %v980 = vpack.c.b16 %v867, %v866
      %v981 = vpack.c.b16 %v869, %v868
      %v982 = vpack.c.b16 %v871, %v870
      %v983 = vpack.c.b16 %v873, %v872
      %v984 = vpack.c.b16 %v875, %v874
      %v985 = vpack.c.b16 %v877, %v876
      %v986 = vpack.c.b16 %v879, %v878
      %v987 = vpack.c.b16 %v881, %v880
      %v988 = vpack.c.b16 %v883, %v882
      %v989 = vpack.c.b16 %v885, %v884
      %v990 = vpack.c.b16 %v887, %v886
      %v991 = vpack.c.b16 %v889, %v888
      %v992 = vpack.c.b16 %v891, %v890
      %v993 = vpack.c.b16 %v893, %v892
      %v994 = vpack.c.b16 %v895, %v894
      %v995 = vpack.c.b16 %v897, %v896
      %v996 = vpack.c.b16 %v899, %v898
      %v997 = vpack.c.b16 %v901, %v900
      %v998 = vpack.c.b16 %v903, %v902
      %v999 = vpack.c.b16 %v905, %v904
      %v1000 = vpack.c.b16 %v907, %v906
      %v1001 = vpack.c.b16 %v909, %v908
      %v1002 = vpack.c.b16 %v911, %v910
      %v1003 = vpack.c.b16 %v913, %v912
      %v1004 = vpack.c.b16 %v915, %v914
      %v1005 = vpack.c.b16 %v917, %v916
      %v1006 = vpack.c.b16 %v919, %v918
      %v1007 = vpack.c.b16 %v921, %v920
      %v1008 = vpack.c.b16 %v923, %v922
      %v1009 = vpack.c.b16 %v925, %v924
      %v1010 = vpack.c.b16 %v927, %v926
      %v1011 = vpack.c.b16 %v929, %v928
      %v1012 = vpack.c.b16 %v931, %v930
      %v1013 = vpack.c.b16 %v933, %v932
      %v1014 = vpack.c.b16 %v935, %v934
      %v1015 = vpack.c.b16 %v937, %v936
      %v1016 = vpack.c.b16 %v939, %v938
      %v1017 = vpack.c.b16 %v941, %v940
      %v1018 = vpack.c.b16 %v943, %v942
      %v1019 = vpack.c.b16 %v945, %v944
      %v1020 = vpack.c.b16 %v947, %v946
      %v1021 = vpack.c.b16 %v949, %v948
      %1094 = vmatprep.subr.bf16.mxu0 0
      %1095 = vmatpush1.bf16.msra.mxu0 %v950
      %1096 = vmatprep.subr.bf16.mxu0 0
      %1097 = vmatpush1.bf16.msra.mxu0 %v951
      %1098 = vmatprep.subr.bf16.mxu0 0
      %1099 = vmatpush1.bf16.msra.mxu0 %v952
      %1100 = vmatprep.subr.bf16.mxu0 0
      %1101 = vmatpush1.bf16.msra.mxu0 %v953
      %1102 = vmatprep.subr.bf16.mxu0 0
      %1103 = vmatpush1.bf16.msra.mxu0 %v954
      %1104 = vmatprep.subr.bf16.mxu0 0
      %1105 = vmatpush1.bf16.msra.mxu0 %v955
      %1106 = vmatprep.subr.bf16.mxu0 0
      %1107 = vmatpush1.bf16.msra.mxu0 %v956
      %1108 = vmatprep.subr.bf16.mxu0 0
      %1109 = vmatpush1.bf16.msra.mxu0 %v957
      %1110 = vmatprep.subr.bf16.mxu0 0
      %1111 = vmatpush1.bf16.msra.mxu0 %v958
      %1112 = vmatprep.subr.bf16.mxu0 0
      %1113 = vmatpush1.bf16.msra.mxu0 %v959
      %1114 = vmatprep.subr.bf16.mxu0 0
      %1115 = vmatpush1.bf16.msra.mxu0 %v960
      %1116 = vmatprep.subr.bf16.mxu0 0
      %1117 = vmatpush1.bf16.msra.mxu0 %v961
      %1118 = vmatprep.subr.bf16.mxu0 0
      %1119 = vmatpush1.bf16.msra.mxu0 %v962
      %1120 = vmatprep.subr.bf16.mxu0 0
      %1121 = vmatpush1.bf16.msra.mxu0 %v963
      %1122 = vmatprep.subr.bf16.mxu0 0
      %1123 = vmatpush1.bf16.msra.mxu0 %v964
      %1124 = vmatprep.subr.bf16.mxu0 0
      %1125 = vmatpush1.bf16.msra.mxu0 %v965
      %1126 = vmatprep.mubr.bf16.mxu0 %v278
      %1127 = vmatmul.mubr.bf16.gmra.mrb[0].mxu0 %v252
      %v1128 = vpop.f32.mrb[0].mxu0
      %v1129 = vadd.f32 %v660, %v1128
      %v1130 = vpop.f32.mrb[0].mxu0
      %v1131 = vpop.f32.mrb[0].mxu0
      %v1132 = vadd.f32 %v660, %v1131
      %v1133 = vpop.f32.mrb[0].mxu0
      %1134 = vmatprep.mubr.bf16.mxu0 %v286
      %1135 = vmatmul.mubr.bf16.gmra.mrb[0].mxu0 %v253
      %v1136 = vpop.f32.mrb[0].mxu0
      %v1137 = vadd.f32 %v660, %v1136
      %v1138 = vpop.f32.mrb[0].mxu0
      %v1139 = vpop.f32.mrb[0].mxu0
      %v1140 = vadd.f32 %v660, %v1139
      %v1141 = vpop.f32.mrb[0].mxu0
      %1142 = vmatprep.mubr.bf16.mxu0 %v294
      %1143 = vmatmul.mubr.bf16.gmra.mrb[0].mxu0 %v254
      %v1144 = vpop.f32.mrb[0].mxu0
      %v1145 = vadd.f32 %v660, %v1144
      %v1146 = vpop.f32.mrb[0].mxu0
      %v1147 = vpop.f32.mrb[0].mxu0
      %v1148 = vadd.f32 %v660, %v1147
      %v1149 = vpop.f32.mrb[0].mxu0
      %1150 = vmatprep.mubr.bf16.mxu0 %v302
      %1151 = vmatmul.mubr.bf16.gmra.mrb[0].mxu0 %v255
      %v1152 = vpop.f32.mrb[0].mxu0
      %v1153 = vadd.f32 %v660, %v1152
      %v1154 = vpop.f32.mrb[0].mxu0
      %v1155 = vpop.f32.mrb[0].mxu0
      %v1156 = vadd.f32 %v660, %v1155
      %v1157 = vpop.f32.mrb[0].mxu0
      %1158 = vmatprep.mubr.bf16.mxu0 %v310
      %1159 = vmatmul.mubr.bf16.gmra.mrb[0].mxu0 %v256
      %v1160 = vpop.f32.mrb[0].mxu0
      %v1161 = vadd.f32 %v660, %v1160
      %v1162 = vpop.f32.mrb[0].mxu0
      %v1163 = vpop.f32.mrb[0].mxu0
      %v1164 = vadd.f32 %v660, %v1163
      %v1165 = vpop.f32.mrb[0].mxu0
      %1166 = vdwg.mxu0
      %1167 = vmatprep.subr.bf16.mxu0 0
      %1168 = vmatpush1.bf16.msra.mxu0 %v966
      %1169 = vmatprep.subr.bf16.mxu0 0
      %1170 = vmatpush1.bf16.msra.mxu0 %v967
      %1171 = vmatprep.subr.bf16.mxu0 0
      %1172 = vmatpush1.bf16.msra.mxu0 %v968
      %1173 = vmatprep.subr.bf16.mxu0 0
      %1174 = vmatpush1.bf16.msra.mxu0 %v969
      %1175 = vmatprep.subr.bf16.mxu0 0
      %1176 = vmatpush1.bf16.msra.mxu0 %v970
      %1177 = vmatprep.subr.bf16.mxu0 0
      %1178 = vmatpush1.bf16.msra.mxu0 %v971
      %1179 = vmatprep.subr.bf16.mxu0 0
      %1180 = vmatpush1.bf16.msra.mxu0 %v972
      %1181 = vmatprep.subr.bf16.mxu0 0
      %1182 = vmatpush1.bf16.msra.mxu0 %v973
      %1183 = vmatprep.subr.bf16.mxu0 0
      %1184 = vmatpush1.bf16.msra.mxu0 %v974
      %1185 = vmatprep.subr.bf16.mxu0 0
      %1186 = vmatpush1.bf16.msra.mxu0 %v975
      %1187 = vmatprep.subr.bf16.mxu0 0
      %1188 = vmatpush1.bf16.msra.mxu0 %v976
      %1189 = vmatprep.subr.bf16.mxu0 0
      %1190 = vmatpush1.bf16.msra.mxu0 %v977
      %1191 = vmatprep.subr.bf16.mxu0 0
      %1192 = vmatpush1.bf16.msra.mxu0 %v978
      %1193 = vmatprep.subr.bf16.mxu0 0
      %1194 = vmatpush1.bf16.msra.mxu0 %v979
      %1195 = vmatprep.subr.bf16.mxu0 0
      %1196 = vmatpush1.bf16.msra.mxu0 %v980
      %1197 = vmatprep.subr.bf16.mxu0 0
      %1198 = vmatpush1.bf16.msra.mxu0 %v981
      %1199 = vmatprep.mubr.bf16.mxu0 %v347
      %1200 = vmatmul.mubr.bf16.gmra.mrb[0].mxu0 %v325
      %v1201 = vpop.f32.mrb[0].mxu0
      %v1202 = vadd.f32 %v1129, %v1201
      %v1203 = vpop.f32.mrb[0].mxu0
      %v1204 = vpop.f32.mrb[0].mxu0
      %v1205 = vadd.f32 %v1132, %v1204
      %v1206 = vpop.f32.mrb[0].mxu0
      %1207 = vmatprep.mubr.bf16.mxu0 %v349
      %1208 = vmatmul.mubr.bf16.gmra.mrb[0].mxu0 %v327
      %v1209 = vpop.f32.mrb[0].mxu0
      %v1210 = vadd.f32 %v1137, %v1209
      %v1211 = vpop.f32.mrb[0].mxu0
      %v1212 = vpop.f32.mrb[0].mxu0
      %v1213 = vadd.f32 %v1140, %v1212
      %v1214 = vpop.f32.mrb[0].mxu0
      %1215 = vmatprep.mubr.bf16.mxu0 %v351
      %1216 = vmatmul.mubr.bf16.gmra.mrb[0].mxu0 %v329
      %v1217 = vpop.f32.mrb[0].mxu0
      %v1218 = vadd.f32 %v1145, %v1217
      %v1219 = vpop.f32.mrb[0].mxu0
      %v1220 = vpop.f32.mrb[0].mxu0
      %v1221 = vadd.f32 %v1148, %v1220
      %v1222 = vpop.f32.mrb[0].mxu0
      %1223 = vmatprep.mubr.bf16.mxu0 %v353
      %1224 = vmatmul.mubr.bf16.gmra.mrb[0].mxu0 %v331
      %v1225 = vpop.f32.mrb[0].mxu0
      %v1226 = vadd.f32 %v1153, %v1225
      %v1227 = vpop.f32.mrb[0].mxu0
      %v1228 = vpop.f32.mrb[0].mxu0
      %v1229 = vadd.f32 %v1156, %v1228
      %v1230 = vpop.f32.mrb[0].mxu0
      %1231 = vmatprep.mubr.bf16.mxu0 %v355
      %1232 = vmatmul.mubr.bf16.gmra.mrb[0].mxu0 %v333
      %v1233 = vpop.f32.mrb[0].mxu0
      %v1234 = vadd.f32 %v1161, %v1233
      %v1235 = vpop.f32.mrb[0].mxu0
      %v1236 = vpop.f32.mrb[0].mxu0
      %v1237 = vadd.f32 %v1164, %v1236
      %v1238 = vpop.f32.mrb[0].mxu0
      %1239 = vdwg.mxu0
      %1240 = vmatprep.subr.bf16.mxu0 0
      %1241 = vmatpush1.bf16.msra.mxu0 %v982
      %1242 = vmatprep.subr.bf16.mxu0 0
      %1243 = vmatpush1.bf16.msra.mxu0 %v983
      %1244 = vmatprep.subr.bf16.mxu0 0
      %1245 = vmatpush1.bf16.msra.mxu0 %v984
      %1246 = vmatprep.subr.bf16.mxu0 0
      %1247 = vmatpush1.bf16.msra.mxu0 %v985
      %1248 = vmatprep.subr.bf16.mxu0 0
      %1249 = vmatpush1.bf16.msra.mxu0 %v986
      %1250 = vmatprep.subr.bf16.mxu0 0
      %1251 = vmatpush1.bf16.msra.mxu0 %v987
      %1252 = vmatprep.subr.bf16.mxu0 0
      %1253 = vmatpush1.bf16.msra.mxu0 %v988
      %1254 = vmatprep.subr.bf16.mxu0 0
      %1255 = vmatpush1.bf16.msra.mxu0 %v989
      %1256 = vmatprep.subr.bf16.mxu0 0
      %1257 = vmatpush1.bf16.msra.mxu0 %v990
      %1258 = vmatprep.subr.bf16.mxu0 0
      %1259 = vmatpush1.bf16.msra.mxu0 %v991
      %1260 = vmatprep.subr.bf16.mxu0 0
      %1261 = vmatpush1.bf16.msra.mxu0 %v992
      %1262 = vmatprep.subr.bf16.mxu0 0
      %1263 = vmatpush1.bf16.msra.mxu0 %v993
      %1264 = vmatprep.subr.bf16.mxu0 0
      %1265 = vmatpush1.bf16.msra.mxu0 %v994
      %1266 = vmatprep.subr.bf16.mxu0 0
      %1267 = vmatpush1.bf16.msra.mxu0 %v995
      %1268 = vmatprep.subr.bf16.mxu0 0
      %1269 = vmatpush1.bf16.msra.mxu0 %v996
      %1270 = vmatprep.subr.bf16.mxu0 0
      %1271 = vmatpush1.bf16.msra.mxu0 %v997
      %1272 = vmatprep.mubr.bf16.mxu0 %v423
      %1273 = vmatmul.mubr.bf16.gmra.mrb[0].mxu0 %v378
      %v1274 = vpop.f32.mrb[0].mxu0
      %v1275 = vadd.f32 %v1202, %v1274
      %v1276 = vpop.f32.mrb[0].mxu0
      %v1277 = vpop.f32.mrb[0].mxu0
      %v1278 = vadd.f32 %v1205, %v1277
      %v1279 = vpop.f32.mrb[0].mxu0
      %1280 = vmatprep.mubr.bf16.mxu0 %v425
      %1281 = vmatmul.mubr.bf16.gmra.mrb[0].mxu0 %v387
      %v1282 = vpop.f32.mrb[0].mxu0
      %v1283 = vadd.f32 %v1210, %v1282
      %v1284 = vpop.f32.mrb[0].mxu0
      %v1285 = vpop.f32.mrb[0].mxu0
      %v1286 = vadd.f32 %v1213, %v1285
      %v1287 = vpop.f32.mrb[0].mxu0
      %1288 = vmatprep.mubr.bf16.mxu0 %v427
      %1289 = vmatmul.mubr.bf16.gmra.mrb[0].mxu0 %v396
      %v1290 = vpop.f32.mrb[0].mxu0
      %v1291 = vadd.f32 %v1218, %v1290
      %v1292 = vpop.f32.mrb[0].mxu0
      %v1293 = vpop.f32.mrb[0].mxu0
      %v1294 = vadd.f32 %v1221, %v1293
      %v1295 = vpop.f32.mrb[0].mxu0
      %1296 = vmatprep.mubr.bf16.mxu0 %v429
      %1297 = vmatmul.mubr.bf16.gmra.mrb[0].mxu0 %v405
      %v1298 = vpop.f32.mrb[0].mxu0
      %v1299 = vadd.f32 %v1226, %v1298
      %v1300 = vpop.f32.mrb[0].mxu0
      %v1301 = vpop.f32.mrb[0].mxu0
      %v1302 = vadd.f32 %v1229, %v1301
      %v1303 = vpop.f32.mrb[0].mxu0
      %1304 = vmatprep.mubr.bf16.mxu0 %v431
      %1305 = vmatmul.mubr.bf16.gmra.mrb[0].mxu0 %v414
      %v1306 = vpop.f32.mrb[0].mxu0
      %v1307 = vadd.f32 %v1234, %v1306
      %v1308 = vpop.f32.mrb[0].mxu0
      %v1309 = vpop.f32.mrb[0].mxu0
      %v1310 = vadd.f32 %v1237, %v1309
      %v1311 = vpop.f32.mrb[0].mxu0
      %1312 = vdwg.mxu0
      %1313 = vmatprep.subr.bf16.mxu0 0
      %1314 = vmatpush1.bf16.msra.mxu0 %v998
      %1315 = vmatprep.subr.bf16.mxu0 0
      %1316 = vmatpush1.bf16.msra.mxu0 %v999
      %1317 = vmatprep.subr.bf16.mxu0 0
      %1318 = vmatpush1.bf16.msra.mxu0 %v1000
      %1319 = vmatprep.subr.bf16.mxu0 0
      %1320 = vmatpush1.bf16.msra.mxu0 %v1001
      %1321 = vmatprep.subr.bf16.mxu0 0
      %1322 = vmatpush1.bf16.msra.mxu0 %v1002
      %1323 = vmatprep.subr.bf16.mxu0 0
      %1324 = vmatpush1.bf16.msra.mxu0 %v1003
      %1325 = vmatprep.subr.bf16.mxu0 0
      %1326 = vmatpush1.bf16.msra.mxu0 %v1004
      %1327 = vmatprep.subr.bf16.mxu0 0
      %1328 = vmatpush1.bf16.msra.mxu0 %v1005
      %1329 = vmatprep.subr.bf16.mxu0 0
      %1330 = vmatpush1.bf16.msra.mxu0 %v1006
      %1331 = vmatprep.subr.bf16.mxu0 0
      %1332 = vmatpush1.bf16.msra.mxu0 %v1007
      %1333 = vmatprep.subr.bf16.mxu0 0
      %1334 = vmatpush1.bf16.msra.mxu0 %v1008
      %1335 = vmatprep.subr.bf16.mxu0 0
      %1336 = vmatpush1.bf16.msra.mxu0 %v1009
      %1337 = vmatprep.subr.bf16.mxu0 0
      %1338 = vmatpush1.bf16.msra.mxu0 %v1010
      %1339 = vmatprep.subr.bf16.mxu0 0
      %1340 = vmatpush1.bf16.msra.mxu0 %v1011
      %1341 = vmatprep.subr.bf16.mxu0 0
      %1342 = vmatpush1.bf16.msra.mxu0 %v1012
      %1343 = vmatprep.subr.bf16.mxu0 0
      %1344 = vmatpush1.bf16.msra.mxu0 %v1013
      %1345 = vmatprep.mubr.bf16.mxu0 %v462
      %1346 = vmatmul.mubr.bf16.gmra.mrb[0].mxu0 %v441
      %v1347 = vpop.f32.mrb[0].mxu0
      %v1348 = vadd.f32 %v1275, %v1347
      %v1349 = vpop.f32.mrb[0].mxu0
      %v1350 = vpop.f32.mrb[0].mxu0
      %v1351 = vadd.f32 %v1278, %v1350
      %v1352 = vpop.f32.mrb[0].mxu0
      %1353 = vmatprep.mubr.bf16.mxu0 %v466
      %1354 = vmatmul.mubr.bf16.gmra.mrb[0].mxu0 %v443
      %v1355 = vpop.f32.mrb[0].mxu0
      %v1356 = vadd.f32 %v1283, %v1355
      %v1357 = vpop.f32.mrb[0].mxu0
      %v1358 = vpop.f32.mrb[0].mxu0
      %v1359 = vadd.f32 %v1286, %v1358
      %v1360 = vpop.f32.mrb[0].mxu0
      %1361 = vmatprep.mubr.bf16.mxu0 %v470
      %1362 = vmatmul.mubr.bf16.gmra.mrb[0].mxu0 %v445
      %v1363 = vpop.f32.mrb[0].mxu0
      %v1364 = vadd.f32 %v1291, %v1363
      %v1365 = vpop.f32.mrb[0].mxu0
      %v1366 = vpop.f32.mrb[0].mxu0
      %v1367 = vadd.f32 %v1294, %v1366
      %v1368 = vpop.f32.mrb[0].mxu0
      %1369 = vmatprep.mubr.bf16.mxu0 %v479
      %1370 = vmatmul.mubr.bf16.gmra.mrb[0].mxu0 %v447
      %v1371 = vpop.f32.mrb[0].mxu0
      %v1372 = vadd.f32 %v1299, %v1371
      %v1373 = vpop.f32.mrb[0].mxu0
      %v1374 = vpop.f32.mrb[0].mxu0
      %v1375 = vadd.f32 %v1302, %v1374
      %v1376 = vpop.f32.mrb[0].mxu0
      %1377 = vmatprep.mubr.bf16.mxu0 %v488
      %1378 = vmatmul.mubr.bf16.gmra.mrb[0].mxu0 %v449
      %v1379 = vpop.f32.mrb[0].mxu0
      %v1380 = vadd.f32 %v1307, %v1379
      %v1381 = vpop.f32.mrb[0].mxu0
      %v1382 = vpop.f32.mrb[0].mxu0
      %v1383 = vadd.f32 %v1310, %v1382
      %v1384 = vpop.f32.mrb[0].mxu0
      %1385 = vdwg.mxu0
      %1386 = vmatprep.subr.bf16.mxu0 0
      %1387 = vmatpush1.bf16.msra.mxu0 %v1014
      %1388 = vmatprep.subr.bf16.mxu0 0
      %1389 = vmatpush1.bf16.msra.mxu0 %v1015
      %1390 = vmatprep.subr.bf16.mxu0 0
      %1391 = vmatpush1.bf16.msra.mxu0 %v1016
      %1392 = vmatprep.subr.bf16.mxu0 0
      %1393 = vmatpush1.bf16.msra.mxu0 %v1017
      %1394 = vmatprep.subr.bf16.mxu0 0
      %1395 = vmatpush1.bf16.msra.mxu0 %v1018
      %1396 = vmatprep.subr.bf16.mxu0 0
      %1397 = vmatpush1.bf16.msra.mxu0 %v1019
      %1398 = vmatprep.subr.bf16.mxu0 0
      %1399 = vmatpush1.bf16.msra.mxu0 %v1020
      %1400 = vmatprep.subr.bf16.mxu0 0
      %1401 = vmatpush1.bf16.msra.mxu0 %v1021
      %1402 = vmatprep.subr.bf16.mxu0 0
      %1403 = vmatpush1.bf16.msra.mxu0 0
      %1404 = vmatprep.subr.bf16.mxu0 0
      %1405 = vmatpush1.bf16.msra.mxu0 0
      %1406 = vmatprep.subr.bf16.mxu0 0
      %1407 = vmatpush1.bf16.msra.mxu0 0
      %1408 = vmatprep.subr.bf16.mxu0 0
      %1409 = vmatpush1.bf16.msra.mxu0 0
      %1410 = vmatprep.subr.bf16.mxu0 0
      %1411 = vmatpush1.bf16.msra.mxu0 0
      %1412 = vmatprep.subr.bf16.mxu0 0
      %1413 = vmatpush1.bf16.msra.mxu0 0
      %1414 = vmatprep.subr.bf16.mxu0 0
      %1415 = vmatpush1.bf16.msra.mxu0 0
      %1416 = vmatprep.subr.bf16.mxu0 0
      %1417 = vmatpush1.bf16.msra.mxu0 0
      %1418 = vmatprep.mubr.bf16.mxu0 0
      %1419 = vmatmul.mubr.bf16.gmra.mrb[0].mxu0 %v497
      %v1420 = vpop.f32.mrb[0].mxu0
      %v1421 = vadd.f32 %v1348, %v1420
      %v1422 = vpop.f32.mrb[0].mxu0
      %v1423 = vpop.f32.mrb[0].mxu0
      %v1424 = vadd.f32 %v1351, %v1423
      %v1425 = vpop.f32.mrb[0].mxu0
      %1426 = vmatprep.mubr.bf16.mxu0 0
      %1427 = vmatmul.mubr.bf16.gmra.mrb[0].mxu0 %v499
      %v1428 = vpop.f32.mrb[0].mxu0
      %v1429 = vadd.f32 %v1356, %v1428
      %v1430 = vpop.f32.mrb[0].mxu0
      %v1431 = vpop.f32.mrb[0].mxu0
      %v1432 = vadd.f32 %v1359, %v1431
      %v1433 = vpop.f32.mrb[0].mxu0
      %1434 = vmatprep.mubr.bf16.mxu0 0
      %1435 = vmatmul.mubr.bf16.gmra.mrb[0].mxu0 %v501
      %v1436 = vpop.f32.mrb[0].mxu0
      %v1437 = vadd.f32 %v1364, %v1436
      %v1438 = vpop.f32.mrb[0].mxu0
      %v1439 = vpop.f32.mrb[0].mxu0
      %v1440 = vadd.f32 %v1367, %v1439
      %v1441 = vpop.f32.mrb[0].mxu0
      %1442 = vmatprep.mubr.bf16.mxu0 0
      %1443 = vmatmul.mubr.bf16.gmra.mrb[0].mxu0 %v503
      %v1444 = vpop.f32.mrb[0].mxu0
      %v1445 = vadd.f32 %v1372, %v1444
      %v1446 = vpop.f32.mrb[0].mxu0
      %v1447 = vpop.f32.mrb[0].mxu0
      %v1448 = vadd.f32 %v1375, %v1447
      %v1449 = vpop.f32.mrb[0].mxu0
      %1450 = vmatprep.mubr.bf16.mxu0 0
      %1451 = vmatmul.mubr.bf16.gmra.mrb[0].mxu0 %v505
      %v1452 = vpop.f32.mrb[0].mxu0
      %v1453 = vadd.f32 %v1380, %v1452
      %v1454 = vpop.f32.mrb[0].mxu0
      %v1455 = vpop.f32.mrb[0].mxu0
      %v1456 = vadd.f32 %v1383, %v1455
      %v1457 = vpop.f32.mrb[0].mxu0
      %1458 = vdwg.mxu0
      %v1459 = vxor.u32 %v1421, 2147483648
      %v1460 = vxor.u32 %v1424, 2147483648
      %v1461 = vxor.u32 %v1429, 2147483648
      %v1462 = vxor.u32 %v1432, 2147483648
      %v1463 = vxor.u32 %v1437, 2147483648
      %v1464 = vxor.u32 %v1440, 2147483648
      %v1465 = vxor.u32 %v1445, 2147483648
      %v1466 = vxor.u32 %v1448, 2147483648
      %v1467 = vxor.u32 %v1453, 2147483648
      %v1468 = vxor.u32 %v1456, 2147483648
      %v1469 = vmul.f32 %v1459, 1.442695
      %v1470 = vpow.pop %v1469
      %v1471 = vmul.f32 %v1460, 1.442695
      %v1472 = vpow.pop %v1471
      %v1473 = vmul.f32 %v1461, 1.442695
      %v1474 = vpow.pop %v1473
      %v1475 = vmul.f32 %v1462, 1.442695
      %v1476 = vpow.pop %v1475
      %v1477 = vmul.f32 %v1463, 1.442695
      %v1478 = vpow.pop %v1477
      %v1479 = vmul.f32 %v1464, 1.442695
      %v1480 = vpow.pop %v1479
      %v1481 = vmul.f32 %v1465, 1.442695
      %v1482 = vpow.pop %v1481
      %v1483 = vmul.f32 %v1466, 1.442695
      %v1484 = vpow.pop %v1483
      %v1485 = vmul.f32 %v1467, 1.442695
      %v1486 = vpow.pop %v1485
      %v1487 = vmul.f32 %v1468, 1.442695
      %v1488 = vpow.pop %v1487
      %v1489 = vadd.f32 %v1470, 1.0
      %v1490 = vadd.f32 %v1472, 1.0
      %v1491 = vadd.f32 %v1474, 1.0
      %v1492 = vadd.f32 %v1476, 1.0
      %v1493 = vadd.f32 %v1478, 1.0
      %v1494 = vadd.f32 %v1480, 1.0
      %v1495 = vadd.f32 %v1482, 1.0
      %v1496 = vadd.f32 %v1484, 1.0
      %v1497 = vadd.f32 %v1486, 1.0
      %v1498 = vadd.f32 %v1488, 1.0
      %v1499 = vrcp.pop %v1489
      %v1500 = vmul.f32 1.0, %v1499
      %v1501 = vrcp.pop %v1490
      %v1502 = vmul.f32 1.0, %v1501
      %v1503 = vrcp.pop %v1491
      %v1504 = vmul.f32 1.0, %v1503
      %v1505 = vrcp.pop %v1492
      %v1506 = vmul.f32 1.0, %v1505
      %v1507 = vrcp.pop %v1493
      %v1508 = vmul.f32 1.0, %v1507
      %v1509 = vrcp.pop %v1494
      %v1510 = vmul.f32 1.0, %v1509
      %v1511 = vrcp.pop %v1495
      %v1512 = vmul.f32 1.0, %v1511
      %v1513 = vrcp.pop %v1496
      %v1514 = vmul.f32 1.0, %v1513
      %v1515 = vrcp.pop %v1497
      %v1516 = vmul.f32 1.0, %v1515
      %v1517 = vrcp.pop %v1498
      %v1518 = vmul.f32 1.0, %v1517
      %v1519 = vmul.f32 %v1421, %v1500
      %v1520 = vmul.f32 %v1424, %v1502
      %v1521 = vmul.f32 %v1429, %v1504
      %v1522 = vmul.f32 %v1432, %v1506
      %v1523 = vmul.f32 %v1437, %v1508
      %v1524 = vmul.f32 %v1440, %v1510
      %v1525 = vmul.f32 %v1445, %v1512
      %v1526 = vmul.f32 %v1448, %v1514
      %v1527 = vmul.f32 %v1453, %v1516
      %v1528 = vmul.f32 %v1456, %v1518
      %v1529 = vpack.c.bf16 %v1520, %v1519
      %v1530 = vpack.c.bf16 %v1522, %v1521
      %v1531 = vpack.c.bf16 %v1524, %v1523
      %v1532 = vpack.c.bf16 %v1526, %v1525
      %v1533 = vpack.c.bf16 %v1528, %v1527
      %v1534 = vld [vmem:[%s3] sm:$0xf]
      %v1535 = vld [vmem:[%s3 + $0x4] sm:$0xf]
      %v1536 = vld [vmem:[%s3 + $0x8] sm:$0xf]
      %v1537 = vld [vmem:[%s3 + $0xc] sm:$0xf]
      %v1538 = vld [vmem:[%s3 + $0x10] sm:$0xf]
      %v1539 = vld [vmem:[%s3 + $0x14] sm:$0xf]
      %v1540 = vld [vmem:[%s3 + $0x18] sm:$0xf]
      %v1541 = vld [vmem:[%s3 + $0x1c] sm:$0xf]
      %v1542 = vld [vmem:[%s3 + $0x20] sm:$0xf]
      %v1543 = vld [vmem:[%s3 + $0x24] sm:$0xf]
      %v1544 = vld [vmem:[%s3 + $0x28] sm:$0xf]
      %v1545 = vld [vmem:[%s3 + $0x2c] sm:$0xf]
      %v1546 = vld [vmem:[%s3 + $0x30] sm:$0xf]
      %v1547 = vld [vmem:[%s3 + $0x34] sm:$0xf]
      %v1548 = vld [vmem:[%s3 + $0x38] sm:$0xf]
      %v1549 = vld [vmem:[%s3 + $0x3c] sm:$0xf]
      %v1550 = vld [vmem:[%s4] sm:$0x1]
      %v1552 = vlaneseq
      %v1553 = vshrl.u32 %v1552, 7
      %v1554 = vsub.s32 0, %v1553
      %v1555 = vrot.slane %v1550, %v1554
      %v1573 = vunpack.c.l.b16 %v1534
      %v1574 = vunpack.c.l.b16 %v1535
      %v1575 = vunpack.c.l.b16 %v1536
      %v1576 = vunpack.c.l.b16 %v1537
      %v1577 = vunpack.c.l.b16 %v1538
      %v1578 = vunpack.c.l.b16 %v1539
      %v1579 = vunpack.c.l.b16 %v1540
      %v1580 = vunpack.c.l.b16 %v1541
      %v1581 = vunpack.c.l.b16 %v1542
      %v1582 = vunpack.c.l.b16 %v1543
      %v1583 = vunpack.c.l.b16 %v1544
      %v1584 = vunpack.c.l.b16 %v1545
      %v1585 = vunpack.c.l.b16 %v1546
      %v1586 = vunpack.c.l.b16 %v1547
      %v1587 = vunpack.c.l.b16 %v1548
      %v1588 = vunpack.c.l.b16 %v1549
      %v1589 = vpack.c.b16 %v1574, %v1573
      %v1590 = vpack.c.b16 %v1576, %v1575
      %v1591 = vpack.c.b16 %v1578, %v1577
      %v1592 = vpack.c.b16 %v1580, %v1579
      %v1593 = vpack.c.b16 %v1582, %v1581
      %v1594 = vpack.c.b16 %v1584, %v1583
      %v1595 = vpack.c.b16 %v1586, %v1585
      %v1596 = vpack.c.b16 %v1588, %v1587
      %1605 = vmatprep.subr.bf16.mxu0 0
      %1606 = vmatpush1.bf16.msra.mxu0 %v1589
      %1607 = vmatprep.subr.bf16.mxu0 0
      %1608 = vmatpush1.bf16.msra.mxu0 %v1590
      %1609 = vmatprep.subr.bf16.mxu0 0
      %1610 = vmatpush1.bf16.msra.mxu0 %v1591
      %1611 = vmatprep.subr.bf16.mxu0 0
      %1612 = vmatpush1.bf16.msra.mxu0 %v1592
      %1613 = vmatprep.subr.bf16.mxu0 0
      %1614 = vmatpush1.bf16.msra.mxu0 %v1593
      %1615 = vmatprep.subr.bf16.mxu0 0
      %1616 = vmatpush1.bf16.msra.mxu0 %v1594
      %1617 = vmatprep.subr.bf16.mxu0 0
      %1618 = vmatpush1.bf16.msra.mxu0 %v1595
      %1619 = vmatprep.subr.bf16.mxu0 0
      %1620 = vmatpush1.bf16.msra.mxu0 %v1596
      %1621 = vmatprep.subr.bf16.mxu0 0
      %1622 = vmatpush1.bf16.msra.mxu0 0
      %1623 = vmatprep.subr.bf16.mxu0 0
      %1624 = vmatpush1.bf16.msra.mxu0 0
      %1625 = vmatprep.subr.bf16.mxu0 0
      %1626 = vmatpush1.bf16.msra.mxu0 0
      %1627 = vmatprep.subr.bf16.mxu0 0
      %1628 = vmatpush1.bf16.msra.mxu0 0
      %1629 = vmatprep.subr.bf16.mxu0 0
      %1630 = vmatpush1.bf16.msra.mxu0 0
      %1631 = vmatprep.subr.bf16.mxu0 0
      %1632 = vmatpush1.bf16.msra.mxu0 0
      %1633 = vmatprep.subr.bf16.mxu0 0
      %1634 = vmatpush1.bf16.msra.mxu0 0
      %1635 = vmatprep.subr.bf16.mxu0 0
      %1636 = vmatpush1.bf16.msra.mxu0 0
      %1637 = vmatprep.mubr.bf16.mxu0 0
      %1638 = vmatmul.mubr.bf16.gmra.mrb[0].mxu0 %v1529
      %v1639 = vpop.f32.mrb[0].mxu0
      %v1640 = vadd.f32 %v1555, %v1639
      %v1641 = vpop.f32.mrb[0].mxu0
      %v1642 = vpop.f32.mrb[0].mxu0
      %v1643 = vadd.f32 %v1555, %v1642
      %v1644 = vpop.f32.mrb[0].mxu0
      %1645 = vmatprep.mubr.bf16.mxu0 0
      %1646 = vmatmul.mubr.bf16.gmra.mrb[0].mxu0 %v1530
      %v1647 = vpop.f32.mrb[0].mxu0
      %v1648 = vadd.f32 %v1555, %v1647
      %v1649 = vpop.f32.mrb[0].mxu0
      %v1650 = vpop.f32.mrb[0].mxu0
      %v1651 = vadd.f32 %v1555, %v1650
      %v1652 = vpop.f32.mrb[0].mxu0
      %1653 = vmatprep.mubr.bf16.mxu0 0
      %1654 = vmatmul.mubr.bf16.gmra.mrb[0].mxu0 %v1531
      %v1655 = vpop.f32.mrb[0].mxu0
      %v1656 = vadd.f32 %v1555, %v1655
      %v1657 = vpop.f32.mrb[0].mxu0
      %v1658 = vpop.f32.mrb[0].mxu0
      %v1659 = vadd.f32 %v1555, %v1658
      %v1660 = vpop.f32.mrb[0].mxu0
      %1661 = vmatprep.mubr.bf16.mxu0 0
      %1662 = vmatmul.mubr.bf16.gmra.mrb[0].mxu0 %v1532
      %v1663 = vpop.f32.mrb[0].mxu0
      %v1664 = vadd.f32 %v1555, %v1663
      %v1665 = vpop.f32.mrb[0].mxu0
      %v1666 = vpop.f32.mrb[0].mxu0
      %v1667 = vadd.f32 %v1555, %v1666
      %v1668 = vpop.f32.mrb[0].mxu0
      %1669 = vmatprep.mubr.bf16.mxu0 0
      %1670 = vmatmul.mubr.bf16.gmra.mrb[0].mxu0 %v1533
      %v1671 = vpop.f32.mrb[0].mxu0
      %v1672 = vadd.f32 %v1555, %v1671
      %v1673 = vpop.f32.mrb[0].mxu0
      %v1674 = vpop.f32.mrb[0].mxu0
      %v1675 = vadd.f32 %v1555, %v1674
      %v1676 = vpop.f32.mrb[0].mxu0
      %1677 = vdwg.mxu0
      %v1678 = vpack.c.bf16 %v1643, %v1640
      %v1679 = vpack.c.bf16 %v1651, %v1648
      %v1680 = vpack.c.bf16 %v1659, %v1656
      %v1681 = vpack.c.bf16 %v1667, %v1664
      %v1682 = vpack.c.bf16 %v1675, %v1672
      %v1688 = vunpack.c.l.b16 %v1678
      %v1689 = vunpack.c.h.b16 %v1678
      %v1690 = vunpack.c.l.b16 %v1679
      %v1691 = vunpack.c.h.b16 %v1679
      %v1692 = vunpack.c.l.b16 %v1680
      %v1693 = vunpack.c.h.b16 %v1680
      %v1694 = vunpack.c.l.b16 %v1681
      %v1695 = vunpack.c.h.b16 %v1681
      %v1696 = vunpack.c.l.b16 %v1682
      %v1697 = vunpack.c.h.b16 %v1682
      %v1698 = vpack.c.b16 %v1688, %v1688
      %v1699 = vpack.c.b16 %v1689, %v1689
      %v1700 = vpack.c.b16 %v1690, %v1690
      %v1701 = vpack.c.b16 %v1691, %v1691
      %v1702 = vpack.c.b16 %v1692, %v1692
      %v1703 = vpack.c.b16 %v1693, %v1693
      %v1704 = vpack.c.b16 %v1694, %v1694
      %v1705 = vpack.c.b16 %v1695, %v1695
      %v1706 = vpack.c.b16 %v1696, %v1696
      %v1707 = vpack.c.b16 %v1697, %v1697
      %1718 = vst [vmem:[%s224] sm:$0xf] %v1698
      %1719 = vst [vmem:[%s224 + $0x4] sm:$0xf] %v1699
      %1720 = vst [vmem:[%s224 + $0x8] sm:$0xf] %v1700
      %1721 = vst [vmem:[%s224 + $0xc] sm:$0xf] %v1701
      %1722 = vst [vmem:[%s224 + $0x10] sm:$0xf] %v1702
      %1723 = vst [vmem:[%s224 + $0x14] sm:$0xf] %v1703
      %1724 = vst [vmem:[%s224 + $0x18] sm:$0xf] %v1704
      %1725 = vst [vmem:[%s224 + $0x1c] sm:$0xf] %v1705
      %1726 = vst [vmem:[%s224 + $0x20] sm:$0xf] %v1706
      %1727 = vst [vmem:[%s224 + $0x24] sm:$0xf] %v1707
      %p1728 = scmp.lt.s32.totalorder %s16, 1
      %s1729 = scalar_select %p1728, %s16, 1
      %s1730 = smul.addr %s1729, 10
      %s1731 = smul.addr %s1730, 4
      %s1732 = scalar_lea.vmem %s5, %s1731
      // Predicated region
      $region41: #{forward.7} parent=39 // pred_check
        %p1733 = pneg %p144
      $region42: #{forward.7} parent=39 // pred_check_branch
        %1735 = sbr.rel (%p1733) target = $region44
      $region43: #{forward.7} parent=39 // pred_region
        _
      $region44: #{forward.7} parent=39 // pred_fallthru
        _
    $region40: #{forward.7} parent=5 // pred_fallthru
      _
    %p1736 = scmp.le.s32.totalorder 2, %s11
    // Predicated region
    $region45: #{forward.7} parent=5 // pred_check
      %p1737 = pneg %p1736
    $region46: #{forward.7} parent=5 // pred_check_branch
      %1739 = sbr.rel (%p1737) target = $region48
    $region47: #{forward.7} parent=5 // pred_region
      %s1740 = ssub.s32 %s11, 2
      // Predicated region
      $region49: #{forward.7} parent=47 // pred_check
        %p1741 = pneg %p150
      $region50: #{forward.7} parent=47 // pred_check_branch
        %1743 = sbr.rel (%p1741) target = $region52
      $region51: #{forward.7} parent=47 // pred_region
        %p1744 = scmp.lt.s32.totalorder %s17, 1
        %s1745 = scalar_select %p1744, %s17, 1
        %s1746 = smul.addr %s1745, 10
        %s1747 = smul.addr %s1746, 4
        %s1748 = scalar_lea.vmem %s5, %s1747
      $region52: #{forward.7} parent=47 // pred_fallthru
        _
    $region48: #{forward.7} parent=5 // pred_fallthru
      _
  $region6: #{forward.7} parent=0 // loop_footer
    %s15 = sadd.s32 1, %s11
  $region7: #{forward.7} parent=0 // loop_footer_branch
    %10 = sbr.rel target = $region3
  $region8: #{forward.7} parent=0 // loop_exit
    _

</llo_original>
